<compile_context>
chip_gen: v7x
topology: tpu7x:2x2x1
jax: 0.10.0
libtpu: 0.0.40
codegen_flags: <defaults>
</compile_context>

<pallas_src>
import math
import jax
import jax.numpy as jnp
from jax.experimental import pallas as pl
from jax.experimental.pallas import tpu as pltpu

# ----------------------------- model config (small, BERT-shaped) -----------------------------
VOCAB = 100
MAX_POS = 16
TYPE_VOCAB = 2
HIDDEN = 32
NUM_HEADS = 4
HEAD_DIM = HIDDEN // NUM_HEADS
FFN = 64
NUM_LAYERS = 2
N_CLASSES = 4
LN_EPS = 1e-12


# ----------------------------- in-kernel helpers (operate on values) -----------------------------
def _layernorm(x, g, b):
    mu = jnp.mean(x, axis=-1, keepdims=True)
    var = jnp.mean(jnp.square(x - mu), axis=-1, keepdims=True)
    return (x - mu) * jax.lax.rsqrt(var + LN_EPS) * g + b


def _gelu(y):  # exact erf-based GELU (BERT)
    return 0.5 * y * (1.0 + jax.lax.erf(y * 0.7071067811865476))


# ----------------------------- fused forward kernel -----------------------------
def make_fused_forward(B, S):
    BS = B * S
    scale = 1.0 / math.sqrt(HEAD_DIM)

    def kernel(x_ref, mask_ref, emb_g_ref, emb_b_ref,
               wqkv_ref, bqkv_ref, wo_ref, bo_ref, ln1g_ref, ln1b_ref,
               wi_ref, bi_ref, wf_ref, bf_ref, ln2g_ref, ln2b_ref,
               wp_ref, bp_ref, wc_ref, bc_ref, out_ref):
        # --- embedding LayerNorm ---
        x = _layernorm(x_ref[...], emb_g_ref[...], emb_b_ref[...])          # [BS, H]

        # Additive attention bias: 0 for real tokens, -1e9 for padding keys.
        bias = (mask_ref[...] - 1.0) * 1e9                                    # [B, S]

        # --- encoder layers (statically unrolled; everything stays in VMEM/vregs) ---
        for li in range(NUM_LAYERS):
            wqkv = wqkv_ref[li]                                               # [H, 3H]
            bqkv = bqkv_ref[li]                                               # [1, 3H]
            wo = wo_ref[li]                                                   # [H, H]

            # fused QKV projection
            qkv = jnp.dot(x, wqkv, preferred_element_type=jnp.float32) + bqkv  # [BS, 3H]

            attn_rows = []
            for b in range(B):                                                # static unroll
                qkv_b = qkv[b * S:(b + 1) * S, :]                             # [S, 3H]
                bias_b = bias[b:b + 1, :]                                     # [1, S]
                attn_b = jnp.zeros((S, HIDDEN), jnp.float32)
                for h in range(NUM_HEADS):                                    # static unroll
                    q_b = qkv_b[:, h * HEAD_DIM:(h + 1) * HEAD_DIM]           # [S, Dh]
                    k_b = qkv_b[:, HIDDEN + h * HEAD_DIM:HIDDEN + (h + 1) * HEAD_DIM]
                    v_b = qkv_b[:, 2 * HIDDEN + h * HEAD_DIM:2 * HIDDEN + (h + 1) * HEAD_DIM]
                    # scores = q @ k^T (contract head_dim; no explicit transpose)
                    s = jax.lax.dot_general(
                        q_b, k_b, (((1,), (1,)), ((), ())),
                        preferred_element_type=jnp.float32) * scale           # [S, S]
                    s = s + bias_b                                            # mask padded keys
                    s = s - jnp.max(s, axis=-1, keepdims=True)
                    p = jnp.exp(s)
                    p = p * pl.reciprocal(jnp.sum(p, axis=-1, keepdims=True), approx=True)
                    ctx = jnp.dot(p, v_b, preferred_element_type=jnp.float32)  # [S, Dh]
                    # fold output projection per head -> never materialize [B*H, S, Dh]
                    attn_b = attn_b + jnp.dot(
                        ctx, wo[h * HEAD_DIM:(h + 1) * HEAD_DIM, :],
                        preferred_element_type=jnp.float32)                    # [S, H]
                attn_rows.append(attn_b)
            attn_out = jnp.concatenate(attn_rows, axis=0) + bo_ref[li]         # [BS, H]

            # residual + LN1 (fused)
            x = _layernorm(x + attn_out, ln1g_ref[li], ln1b_ref[li])

            # FFN (GELU) + residual + LN2 (fused)
            h1 = _gelu(jnp.dot(x, wi_ref[li], preferred_element_type=jnp.float32) + bi_ref[li])
            h2 = jnp.dot(h1, wf_ref[li], preferred_element_type=jnp.float32) + bf_ref[li]
            x = _layernorm(x + h2, ln2g_ref[li], ln2b_ref[li])

        # --- CLS-token rows (index b*S) via a selection matmul (MXU-friendly, no strided slices) ---
        col = jax.lax.broadcasted_iota(jnp.int32, (B, BS), 1)
        row = jax.lax.broadcasted_iota(jnp.int32, (B, BS), 0)
        sel = jnp.where(col == row * S, 1.0, 0.0).astype(jnp.float32)          # [B, BS]
        cls = jnp.dot(sel, x, preferred_element_type=jnp.float32)              # [B, H]

        # --- BERT pooler: tanh(cls @ Wp + bp) ---
        pooled = jnp.tanh(
            jnp.dot(cls, wp_ref[...], preferred_element_type=jnp.float32) + bp_ref[...])

        # nn.Dropout(p=0.3): identity at inference.
        # TODO(synk): training-mode dropout would need pltpu.prng_seed / prng_random_bits masking.

        # --- classifier head: Linear(hidden, n_classes) ---
        logits = jnp.dot(pooled, wc_ref[...], preferred_element_type=jnp.float32) + bc_ref[...]
        out_ref[...] = logits.astype(out_ref.dtype)

    n_inputs = 20
    return pl.pallas_call(
        kernel,
        out_shape=jax.ShapeDtypeStruct((B, N_CLASSES), jnp.float32),
        in_specs=[pl.BlockSpec(memory_space=pltpu.MemorySpace.VMEM)] * n_inputs,
        out_specs=pl.BlockSpec(memory_space=pltpu.MemorySpace.VMEM),
    )


# ----------------------------- deterministic parameter init -----------------------------
def _dense(key, fan_in, fan_out):
    w = jax.random.normal(key, (fan_in, fan_out), jnp.float32) * 0.02
    b = jnp.zeros((1, fan_out), jnp.float32)
    return w, b


def init_params(key):
    keys = jax.random.split(key, 8 + NUM_LAYERS)
    p = {}
    p["word_emb"] = jax.random.normal(keys[0], (VOCAB, HIDDEN), jnp.float32) * 0.02
    p["pos_emb"] = jax.random.normal(keys[1], (MAX_POS, HIDDEN), jnp.float32) * 0.02
    p["type_emb"] = jax.random.normal(keys[2], (TYPE_VOCAB, HIDDEN), jnp.float32) * 0.02
    p["emb_ln_g"] = jnp.ones((1, HIDDEN), jnp.float32)
    p["emb_ln_b"] = jnp.zeros((1, HIDDEN), jnp.float32)

    layers = []
    for li in range(NUM_LAYERS):
        lk = jax.random.split(keys[3 + li], 6)
        L = {}
        L["Wq"], L["bq"] = _dense(lk[0], HIDDEN, HIDDEN)
        L["Wk"], L["bk"] = _dense(lk[1], HIDDEN, HIDDEN)
        L["Wv"], L["bv"] = _dense(lk[2], HIDDEN, HIDDEN)
        L["Wo"], L["bo"] = _dense(lk[3], HIDDEN, HIDDEN)
        L["ln1_g"] = jnp.ones((1, HIDDEN), jnp.float32)
        L["ln1_b"] = jnp.zeros((1, HIDDEN), jnp.float32)
        L["Wi"], L["bi"] = _dense(lk[4], HIDDEN, FFN)
        L["Wf"], L["bf"] = _dense(lk[5], FFN, HIDDEN)
        L["ln2_g"] = jnp.ones((1, HIDDEN), jnp.float32)
        L["ln2_b"] = jnp.zeros((1, HIDDEN), jnp.float32)
        layers.append(L)
    p["layers"] = layers

    p["Wp"], p["bp"] = _dense(keys[3 + NUM_LAYERS], HIDDEN, HIDDEN)          # BERT pooler
    p["Wc"], p["bc"] = _dense(keys[4 + NUM_LAYERS], HIDDEN, N_CLASSES)       # self.out Linear
    return p


def pack_params(p):
    """Stack per-layer weights along a leading layer axis and fuse Q/K/V."""
    L = p["layers"]
    return dict(
        word_emb=p["word_emb"], pos_emb=p["pos_emb"], type_emb=p["type_emb"],
        emb_ln_g=p["emb_ln_g"], emb_ln_b=p["emb_ln_b"],
        wqkv=jnp.stack([jnp.concatenate([l["Wq"], l["Wk"], l["Wv"]], axis=1) for l in L]),
        bqkv=jnp.stack([jnp.concatenate([l["bq"], l["bk"], l["bv"]], axis=1) for l in L]),
        wo=jnp.stack([l["Wo"] for l in L]),   bo=jnp.stack([l["bo"] for l in L]),
        ln1g=jnp.stack([l["ln1_g"] for l in L]), ln1b=jnp.stack([l["ln1_b"] for l in L]),
        wi=jnp.stack([l["Wi"] for l in L]),   bi=jnp.stack([l["bi"] for l in L]),
        wf=jnp.stack([l["Wf"] for l in L]),   bf=jnp.stack([l["bf"] for l in L]),
        ln2g=jnp.stack([l["ln2_g"] for l in L]), ln2b=jnp.stack([l["ln2_b"] for l in L]),
        wp=p["Wp"], bp=p["bp"], wc=p["Wc"], bc=p["bc"],
    )


# ----------------------------- forward pass (NewsClassifier.forward) -----------------------------
def news_classifier_forward(packed, input_ids, attention_mask):
    B, S = input_ids.shape

    # BERT embeddings (gather = plain-JAX glue); everything after runs in ONE fused kernel.
    x = (
        packed["word_emb"][input_ids]
        + packed["pos_emb"][jnp.arange(S)][None, :, :]
        + packed["type_emb"][0][None, None, :]
    )
    x2 = x.reshape(B * S, HIDDEN).astype(jnp.float32)
    mask_f = attention_mask.astype(jnp.float32)

    fused = make_fused_forward(B, S)
    return fused(
        x2, mask_f, packed["emb_ln_g"], packed["emb_ln_b"],
        packed["wqkv"], packed["bqkv"], packed["wo"], packed["bo"],
        packed["ln1g"], packed["ln1b"],
        packed["wi"], packed["bi"], packed["wf"], packed["bf"],
        packed["ln2g"], packed["ln2b"],
        packed["wp"], packed["bp"], packed["wc"], packed["bc"],
    )


# ----------------------------- main -----------------------------
if __name__ == "__main__":
    key = jax.random.PRNGKey(0)
    k_params, k_ids = jax.random.split(key)

    B, S = 2, 8
    params = init_params(k_params)
    packed = pack_params(params)

    input_ids = jax.random.randint(k_ids, (B, S), 0, VOCAB, dtype=jnp.int32)
    # second sequence has 3 padding tokens at the end
    attention_mask = jnp.array(
        [[1, 1, 1, 1, 1, 1, 1, 1], [1, 1, 1, 1, 1, 0, 0, 0]], dtype=jnp.int32
    )

    logits = jax.jit(news_classifier_forward)(packed, input_ids, attention_mask)
    jax.block_until_ready(logits)
    assert logits.shape == (B, N_CLASSES)
    assert bool(jnp.all(jnp.isfinite(logits)))
    print("KERNEL_OK")
</pallas_src>

<mosaic_0001>
module attributes {stable_mosaic.version = 11 : i64} {
  func.func @kernel(%arg0: memref<16x32xf32, #tpu.memory_space<vmem>>, %arg1: memref<2x8xf32, #tpu.memory_space<vmem>>, %arg2: memref<1x32xf32, #tpu.memory_space<vmem>>, %arg3: memref<1x32xf32, #tpu.memory_space<vmem>>, %arg4: memref<2x32x96xf32, #tpu.memory_space<vmem>>, %arg5: memref<2x1x96xf32, #tpu.memory_space<vmem>>, %arg6: memref<2x32x32xf32, #tpu.memory_space<vmem>>, %arg7: memref<2x1x32xf32, #tpu.memory_space<vmem>>, %arg8: memref<2x1x32xf32, #tpu.memory_space<vmem>>, %arg9: memref<2x1x32xf32, #tpu.memory_space<vmem>>, %arg10: memref<2x32x64xf32, #tpu.memory_space<vmem>>, %arg11: memref<2x1x64xf32, #tpu.memory_space<vmem>>, %arg12: memref<2x64x32xf32, #tpu.memory_space<vmem>>, %arg13: memref<2x1x32xf32, #tpu.memory_space<vmem>>, %arg14: memref<2x1x32xf32, #tpu.memory_space<vmem>>, %arg15: memref<2x1x32xf32, #tpu.memory_space<vmem>>, %arg16: memref<32x32xf32, #tpu.memory_space<vmem>>, %arg17: memref<1x32xf32, #tpu.memory_space<vmem>>, %arg18: memref<32x4xf32, #tpu.memory_space<vmem>>, %arg19: memref<1x4xf32, #tpu.memory_space<vmem>>, %arg20: memref<2x4xf32, #tpu.memory_space<vmem>>) attributes {dimension_semantics = [], scalar_prefetch = 0 : i64, scratch_operands = 0 : i64, tpu.core_type = #tpu.core_type<tc>} {
    %c0 = arith.constant 0 : index
    %c0_0 = arith.constant 0 : index
    %0 = vector.load %arg0[%c0, %c0_0] : memref<16x32xf32, #tpu.memory_space<vmem>>, vector<16x32xf32>
    %c0_1 = arith.constant 0 : index
    %c0_2 = arith.constant 0 : index
    %1 = vector.load %arg2[%c0_1, %c0_2] : memref<1x32xf32, #tpu.memory_space<vmem>>, vector<1x32xf32>
    %c0_3 = arith.constant 0 : index
    %c0_4 = arith.constant 0 : index
    %2 = vector.load %arg3[%c0_3, %c0_4] : memref<1x32xf32, #tpu.memory_space<vmem>>, vector<1x32xf32>
    %cst = arith.constant dense<0.000000e+00> : vector<16xf32>
    %3 = vector.multi_reduction <add>, %0, %cst [1] : vector<16x32xf32> to vector<16xf32>
    %4 = vector.shape_cast %3 : vector<16xf32> to vector<16x1xf32>
    %cst_5 = arith.constant 3.200000e+01 : f32
    %5 = vector.broadcast %cst_5 : f32 to vector<16x1xf32>
    %6 = arith.divf %4, %5 : vector<16x1xf32>
    %7 = vector.broadcast %6 : vector<16x1xf32> to vector<16x32xf32>
    %8 = arith.subf %0, %7 : vector<16x32xf32>
    %9 = arith.mulf %8, %8 : vector<16x32xf32>
    %cst_6 = arith.constant dense<0.000000e+00> : vector<16xf32>
    %10 = vector.multi_reduction <add>, %9, %cst_6 [1] : vector<16x32xf32> to vector<16xf32>
    %11 = vector.shape_cast %10 : vector<16xf32> to vector<16x1xf32>
    %cst_7 = arith.constant 3.200000e+01 : f32
    %12 = vector.broadcast %cst_7 : f32 to vector<16x1xf32>
    %13 = arith.divf %11, %12 : vector<16x1xf32>
    %14 = vector.broadcast %6 : vector<16x1xf32> to vector<16x32xf32>
    %15 = arith.subf %0, %14 : vector<16x32xf32>
    %cst_8 = arith.constant 9.99999996E-13 : f32
    %16 = vector.broadcast %cst_8 : f32 to vector<16x1xf32>
    %17 = arith.addf %13, %16 : vector<16x1xf32>
    %18 = math.rsqrt %17 : vector<16x1xf32>
    %19 = vector.broadcast %18 : vector<16x1xf32> to vector<16x32xf32>
    %20 = arith.mulf %15, %19 : vector<16x32xf32>
    %21 = vector.broadcast %1 : vector<1x32xf32> to vector<16x32xf32>
    %22 = arith.mulf %20, %21 : vector<16x32xf32>
    %23 = vector.broadcast %2 : vector<1x32xf32> to vector<16x32xf32>
    %24 = arith.addf %22, %23 : vector<16x32xf32>
    %c0_9 = arith.constant 0 : index
    %c0_10 = arith.constant 0 : index
    %25 = vector.load %arg1[%c0_9, %c0_10] : memref<2x8xf32, #tpu.memory_space<vmem>>, vector<2x8xf32>
    %cst_11 = arith.constant 1.000000e+00 : f32
    %26 = vector.broadcast %cst_11 : f32 to vector<2x8xf32>
    %27 = arith.subf %25, %26 : vector<2x8xf32>
    %cst_12 = arith.constant 1.000000e+09 : f32
    %28 = vector.broadcast %cst_12 : f32 to vector<2x8xf32>
    %29 = arith.mulf %27, %28 : vector<2x8xf32>
    %c0_13 = arith.constant 0 : index
    %c0_14 = arith.constant 0 : index
    %c0_15 = arith.constant 0 : index
    %30 = vector.load %arg4[%c0_13, %c0_14, %c0_15] : memref<2x32x96xf32, #tpu.memory_space<vmem>>, vector<1x32x96xf32>
    %31 = vector.shape_cast %30 : vector<1x32x96xf32> to vector<32x96xf32>
    %c0_16 = arith.constant 0 : index
    %c0_17 = arith.constant 0 : index
    %c0_18 = arith.constant 0 : index
    %32 = vector.load %arg5[%c0_16, %c0_17, %c0_18] : memref<2x1x96xf32, #tpu.memory_space<vmem>>, vector<1x1x96xf32>
    %33 = vector.shape_cast %32 : vector<1x1x96xf32> to vector<1x96xf32>
    %c0_19 = arith.constant 0 : index
    %c0_20 = arith.constant 0 : index
    %c0_21 = arith.constant 0 : index
    %34 = vector.load %arg6[%c0_19, %c0_20, %c0_21] : memref<2x32x32xf32, #tpu.memory_space<vmem>>, vector<1x32x32xf32>
    %35 = vector.shape_cast %34 : vector<1x32x32xf32> to vector<32x32xf32>
    %cst_22 = arith.constant dense<0.000000e+00> : vector<16x96xf32>
    %36 = tpu.matmul %24, %31, %cst_22 {dimension_numbers = #tpu.dot_dimension_numbers<[1], [0], [0], [1], [0, 0, 1, 1], [], []>} : vector<16x32xf32>, vector<32x96xf32>, vector<16x96xf32> -> vector<16x96xf32>
    %37 = vector.broadcast %33 : vector<1x96xf32> to vector<16x96xf32>
    %38 = arith.addf %36, %37 : vector<16x96xf32>
    %39 = vector.extract_strided_slice %38 {offsets = [0, 0], sizes = [8, 96], strides = [1, 1]} : vector<16x96xf32> to vector<8x96xf32>
    %40 = vector.extract_strided_slice %29 {offsets = [0, 0], sizes = [1, 8], strides = [1, 1]} : vector<2x8xf32> to vector<1x8xf32>
    %cst_23 = arith.constant 0.000000e+00 : f32
    %41 = vector.broadcast %cst_23 : f32 to vector<8x32xf32>
    %42 = vector.extract_strided_slice %39 {offsets = [0, 0], sizes = [8, 8], strides = [1, 1]} : vector<8x96xf32> to vector<8x8xf32>
    %43 = vector.extract_strided_slice %39 {offsets = [0, 32], sizes = [8, 8], strides = [1, 1]} : vector<8x96xf32> to vector<8x8xf32>
    %44 = vector.extract_strided_slice %39 {offsets = [0, 64], sizes = [8, 8], strides = [1, 1]} : vector<8x96xf32> to vector<8x8xf32>
    %cst_24 = arith.constant dense<0.000000e+00> : vector<8x8xf32>
    %45 = tpu.matmul %42, %43, %cst_24 {dimension_numbers = #tpu.dot_dimension_numbers<[1], [1], [0], [0], [0, 0, 1, 0], [], []>} : vector<8x8xf32>, vector<8x8xf32>, vector<8x8xf32> -> vector<8x8xf32>
    %cst_25 = arith.constant 0.353553385 : f32
    %46 = vector.broadcast %cst_25 : f32 to vector<8x8xf32>
    %47 = arith.mulf %45, %46 : vector<8x8xf32>
    %48 = vector.broadcast %40 : vector<1x8xf32> to vector<8x8xf32>
    %49 = arith.addf %47, %48 : vector<8x8xf32>
    %cst_26 = arith.constant dense<0xFF800000> : vector<8xf32>
    %50 = vector.multi_reduction <maximumf>, %49, %cst_26 [1] : vector<8x8xf32> to vector<8xf32>
    %51 = vector.shape_cast %50 : vector<8xf32> to vector<8x1xf32>
    %52 = vector.broadcast %51 : vector<8x1xf32> to vector<8x8xf32>
    %53 = arith.subf %49, %52 : vector<8x8xf32>
    %54 = math.exp %53 : vector<8x8xf32>
    %cst_27 = arith.constant dense<0.000000e+00> : vector<8xf32>
    %55 = vector.multi_reduction <add>, %54, %cst_27 [1] : vector<8x8xf32> to vector<8xf32>
    %56 = vector.shape_cast %55 : vector<8xf32> to vector<8x1xf32>
    %57 = tpu.reciprocal %56 {approx = true} : vector<8x1xf32> -> vector<8x1xf32>
    %58 = vector.broadcast %57 : vector<8x1xf32> to vector<8x8xf32>
    %59 = arith.mulf %54, %58 : vector<8x8xf32>
    %cst_28 = arith.constant dense<0.000000e+00> : vector<8x8xf32>
    %60 = tpu.matmul %59, %44, %cst_28 {dimension_numbers = #tpu.dot_dimension_numbers<[1], [0], [0], [1], [0, 0, 1, 1], [], []>} : vector<8x8xf32>, vector<8x8xf32>, vector<8x8xf32> -> vector<8x8xf32>
    %61 = vector.extract_strided_slice %35 {offsets = [0, 0], sizes = [8, 32], strides = [1, 1]} : vector<32x32xf32> to vector<8x32xf32>
    %cst_29 = arith.constant dense<0.000000e+00> : vector<8x32xf32>
    %62 = tpu.matmul %60, %61, %cst_29 {dimension_numbers = #tpu.dot_dimension_numbers<[1], [0], [0], [1], [0, 0, 1, 1], [], []>} : vector<8x8xf32>, vector<8x32xf32>, vector<8x32xf32> -> vector<8x32xf32>
    %63 = arith.addf %41, %62 : vector<8x32xf32>
    %64 = vector.extract_strided_slice %39 {offsets = [0, 8], sizes = [8, 8], strides = [1, 1]} : vector<8x96xf32> to vector<8x8xf32>
    %65 = vector.extract_strided_slice %39 {offsets = [0, 40], sizes = [8, 8], strides = [1, 1]} : vector<8x96xf32> to vector<8x8xf32>
    %66 = vector.extract_strided_slice %39 {offsets = [0, 72], sizes = [8, 8], strides = [1, 1]} : vector<8x96xf32> to vector<8x8xf32>
    %cst_30 = arith.constant dense<0.000000e+00> : vector<8x8xf32>
    %67 = tpu.matmul %64, %65, %cst_30 {dimension_numbers = #tpu.dot_dimension_numbers<[1], [1], [0], [0], [0, 0, 1, 0], [], []>} : vector<8x8xf32>, vector<8x8xf32>, vector<8x8xf32> -> vector<8x8xf32>
    %cst_31 = arith.constant 0.353553385 : f32
    %68 = vector.broadcast %cst_31 : f32 to vector<8x8xf32>
    %69 = arith.mulf %67, %68 : vector<8x8xf32>
    %70 = vector.broadcast %40 : vector<1x8xf32> to vector<8x8xf32>
    %71 = arith.addf %69, %70 : vector<8x8xf32>
    %cst_32 = arith.constant dense<0xFF800000> : vector<8xf32>
    %72 = vector.multi_reduction <maximumf>, %71, %cst_32 [1] : vector<8x8xf32> to vector<8xf32>
    %73 = vector.shape_cast %72 : vector<8xf32> to vector<8x1xf32>
    %74 = vector.broadcast %73 : vector<8x1xf32> to vector<8x8xf32>
    %75 = arith.subf %71, %74 : vector<8x8xf32>
    %76 = math.exp %75 : vector<8x8xf32>
    %cst_33 = arith.constant dense<0.000000e+00> : vector<8xf32>
    %77 = vector.multi_reduction <add>, %76, %cst_33 [1] : vector<8x8xf32> to vector<8xf32>
    %78 = vector.shape_cast %77 : vector<8xf32> to vector<8x1xf32>
    %79 = tpu.reciprocal %78 {approx = true} : vector<8x1xf32> -> vector<8x1xf32>
    %80 = vector.broadcast %79 : vector<8x1xf32> to vector<8x8xf32>
    %81 = arith.mulf %76, %80 : vector<8x8xf32>
    %cst_34 = arith.constant dense<0.000000e+00> : vector<8x8xf32>
    %82 = tpu.matmul %81, %66, %cst_34 {dimension_numbers = #tpu.dot_dimension_numbers<[1], [0], [0], [1], [0, 0, 1, 1], [], []>} : vector<8x8xf32>, vector<8x8xf32>, vector<8x8xf32> -> vector<8x8xf32>
    %83 = vector.extract_strided_slice %35 {offsets = [8, 0], sizes = [8, 32], strides = [1, 1]} : vector<32x32xf32> to vector<8x32xf32>
    %cst_35 = arith.constant dense<0.000000e+00> : vector<8x32xf32>
    %84 = tpu.matmul %82, %83, %cst_35 {dimension_numbers = #tpu.dot_dimension_numbers<[1], [0], [0], [1], [0, 0, 1, 1], [], []>} : vector<8x8xf32>, vector<8x32xf32>, vector<8x32xf32> -> vector<8x32xf32>
    %85 = arith.addf %63, %84 : vector<8x32xf32>
    %86 = vector.extract_strided_slice %39 {offsets = [0, 16], sizes = [8, 8], strides = [1, 1]} : vector<8x96xf32> to vector<8x8xf32>
    %87 = vector.extract_strided_slice %39 {offsets = [0, 48], sizes = [8, 8], strides = [1, 1]} : vector<8x96xf32> to vector<8x8xf32>
    %88 = vector.extract_strided_slice %39 {offsets = [0, 80], sizes = [8, 8], strides = [1, 1]} : vector<8x96xf32> to vector<8x8xf32>
    %cst_36 = arith.constant dense<0.000000e+00> : vector<8x8xf32>
    %89 = tpu.matmul %86, %87, %cst_36 {dimension_numbers = #tpu.dot_dimension_numbers<[1], [1], [0], [0], [0, 0, 1, 0], [], []>} : vector<8x8xf32>, vector<8x8xf32>, vector<8x8xf32> -> vector<8x8xf32>
    %cst_37 = arith.constant 0.353553385 : f32
    %90 = vector.broadcast %cst_37 : f32 to vector<8x8xf32>
    %91 = arith.mulf %89, %90 : vector<8x8xf32>
    %92 = vector.broadcast %40 : vector<1x8xf32> to vector<8x8xf32>
    %93 = arith.addf %91, %92 : vector<8x8xf32>
    %cst_38 = arith.constant dense<0xFF800000> : vector<8xf32>
    %94 = vector.multi_reduction <maximumf>, %93, %cst_38 [1] : vector<8x8xf32> to vector<8xf32>
    %95 = vector.shape_cast %94 : vector<8xf32> to vector<8x1xf32>
    %96 = vector.broadcast %95 : vector<8x1xf32> to vector<8x8xf32>
    %97 = arith.subf %93, %96 : vector<8x8xf32>
    %98 = math.exp %97 : vector<8x8xf32>
    %cst_39 = arith.constant dense<0.000000e+00> : vector<8xf32>
    %99 = vector.multi_reduction <add>, %98, %cst_39 [1] : vector<8x8xf32> to vector<8xf32>
    %100 = vector.shape_cast %99 : vector<8xf32> to vector<8x1xf32>
    %101 = tpu.reciprocal %100 {approx = true} : vector<8x1xf32> -> vector<8x1xf32>
    %102 = vector.broadcast %101 : vector<8x1xf32> to vector<8x8xf32>
    %103 = arith.mulf %98, %102 : vector<8x8xf32>
    %cst_40 = arith.constant dense<0.000000e+00> : vector<8x8xf32>
    %104 = tpu.matmul %103, %88, %cst_40 {dimension_numbers = #tpu.dot_dimension_numbers<[1], [0], [0], [1], [0, 0, 1, 1], [], []>} : vector<8x8xf32>, vector<8x8xf32>, vector<8x8xf32> -> vector<8x8xf32>
    %105 = vector.extract_strided_slice %35 {offsets = [16, 0], sizes = [8, 32], strides = [1, 1]} : vector<32x32xf32> to vector<8x32xf32>
    %cst_41 = arith.constant dense<0.000000e+00> : vector<8x32xf32>
    %106 = tpu.matmul %104, %105, %cst_41 {dimension_numbers = #tpu.dot_dimension_numbers<[1], [0], [0], [1], [0, 0, 1, 1], [], []>} : vector<8x8xf32>, vector<8x32xf32>, vector<8x32xf32> -> vector<8x32xf32>
    %107 = arith.addf %85, %106 : vector<8x32xf32>
    %108 = vector.extract_strided_slice %39 {offsets = [0, 24], sizes = [8, 8], strides = [1, 1]} : vector<8x96xf32> to vector<8x8xf32>
    %109 = vector.extract_strided_slice %39 {offsets = [0, 56], sizes = [8, 8], strides = [1, 1]} : vector<8x96xf32> to vector<8x8xf32>
    %110 = vector.extract_strided_slice %39 {offsets = [0, 88], sizes = [8, 8], strides = [1, 1]} : vector<8x96xf32> to vector<8x8xf32>
    %cst_42 = arith.constant dense<0.000000e+00> : vector<8x8xf32>
    %111 = tpu.matmul %108, %109, %cst_42 {dimension_numbers = #tpu.dot_dimension_numbers<[1], [1], [0], [0], [0, 0, 1, 0], [], []>} : vector<8x8xf32>, vector<8x8xf32>, vector<8x8xf32> -> vector<8x8xf32>
    %cst_43 = arith.constant 0.353553385 : f32
    %112 = vector.broadcast %cst_43 : f32 to vector<8x8xf32>
    %113 = arith.mulf %111, %112 : vector<8x8xf32>
    %114 = vector.broadcast %40 : vector<1x8xf32> to vector<8x8xf32>
    %115 = arith.addf %113, %114 : vector<8x8xf32>
    %cst_44 = arith.constant dense<0xFF800000> : vector<8xf32>
    %116 = vector.multi_reduction <maximumf>, %115, %cst_44 [1] : vector<8x8xf32> to vector<8xf32>
    %117 = vector.shape_cast %116 : vector<8xf32> to vector<8x1xf32>
    %118 = vector.broadcast %117 : vector<8x1xf32> to vector<8x8xf32>
    %119 = arith.subf %115, %118 : vector<8x8xf32>
    %120 = math.exp %119 : vector<8x8xf32>
    %cst_45 = arith.constant dense<0.000000e+00> : vector<8xf32>
    %121 = vector.multi_reduction <add>, %120, %cst_45 [1] : vector<8x8xf32> to vector<8xf32>
    %122 = vector.shape_cast %121 : vector<8xf32> to vector<8x1xf32>
    %123 = tpu.reciprocal %122 {approx = true} : vector<8x1xf32> -> vector<8x1xf32>
    %124 = vector.broadcast %123 : vector<8x1xf32> to vector<8x8xf32>
    %125 = arith.mulf %120, %124 : vector<8x8xf32>
    %cst_46 = arith.constant dense<0.000000e+00> : vector<8x8xf32>
    %126 = tpu.matmul %125, %110, %cst_46 {dimension_numbers = #tpu.dot_dimension_numbers<[1], [0], [0], [1], [0, 0, 1, 1], [], []>} : vector<8x8xf32>, vector<8x8xf32>, vector<8x8xf32> -> vector<8x8xf32>
    %127 = vector.extract_strided_slice %35 {offsets = [24, 0], sizes = [8, 32], strides = [1, 1]} : vector<32x32xf32> to vector<8x32xf32>
    %cst_47 = arith.constant dense<0.000000e+00> : vector<8x32xf32>
    %128 = tpu.matmul %126, %127, %cst_47 {dimension_numbers = #tpu.dot_dimension_numbers<[1], [0], [0], [1], [0, 0, 1, 1], [], []>} : vector<8x8xf32>, vector<8x32xf32>, vector<8x32xf32> -> vector<8x32xf32>
    %129 = arith.addf %107, %128 : vector<8x32xf32>
    %130 = vector.extract_strided_slice %38 {offsets = [8, 0], sizes = [8, 96], strides = [1, 1]} : vector<16x96xf32> to vector<8x96xf32>
    %131 = vector.extract_strided_slice %29 {offsets = [1, 0], sizes = [1, 8], strides = [1, 1]} : vector<2x8xf32> to vector<1x8xf32>
    %cst_48 = arith.constant 0.000000e+00 : f32
    %132 = vector.broadcast %cst_48 : f32 to vector<8x32xf32>
    %133 = vector.extract_strided_slice %130 {offsets = [0, 0], sizes = [8, 8], strides = [1, 1]} : vector<8x96xf32> to vector<8x8xf32>
    %134 = vector.extract_strided_slice %130 {offsets = [0, 32], sizes = [8, 8], strides = [1, 1]} : vector<8x96xf32> to vector<8x8xf32>
    %135 = vector.extract_strided_slice %130 {offsets = [0, 64], sizes = [8, 8], strides = [1, 1]} : vector<8x96xf32> to vector<8x8xf32>
    %cst_49 = arith.constant dense<0.000000e+00> : vector<8x8xf32>
    %136 = tpu.matmul %133, %134, %cst_49 {dimension_numbers = #tpu.dot_dimension_numbers<[1], [1], [0], [0], [0, 0, 1, 0], [], []>} : vector<8x8xf32>, vector<8x8xf32>, vector<8x8xf32> -> vector<8x8xf32>
    %cst_50 = arith.constant 0.353553385 : f32
    %137 = vector.broadcast %cst_50 : f32 to vector<8x8xf32>
    %138 = arith.mulf %136, %137 : vector<8x8xf32>
    %139 = vector.broadcast %131 : vector<1x8xf32> to vector<8x8xf32>
    %140 = arith.addf %138, %139 : vector<8x8xf32>
    %cst_51 = arith.constant dense<0xFF800000> : vector<8xf32>
    %141 = vector.multi_reduction <maximumf>, %140, %cst_51 [1] : vector<8x8xf32> to vector<8xf32>
    %142 = vector.shape_cast %141 : vector<8xf32> to vector<8x1xf32>
    %143 = vector.broadcast %142 : vector<8x1xf32> to vector<8x8xf32>
    %144 = arith.subf %140, %143 : vector<8x8xf32>
    %145 = math.exp %144 : vector<8x8xf32>
    %cst_52 = arith.constant dense<0.000000e+00> : vector<8xf32>
    %146 = vector.multi_reduction <add>, %145, %cst_52 [1] : vector<8x8xf32> to vector<8xf32>
    %147 = vector.shape_cast %146 : vector<8xf32> to vector<8x1xf32>
    %148 = tpu.reciprocal %147 {approx = true} : vector<8x1xf32> -> vector<8x1xf32>
    %149 = vector.broadcast %148 : vector<8x1xf32> to vector<8x8xf32>
    %150 = arith.mulf %145, %149 : vector<8x8xf32>
    %cst_53 = arith.constant dense<0.000000e+00> : vector<8x8xf32>
    %151 = tpu.matmul %150, %135, %cst_53 {dimension_numbers = #tpu.dot_dimension_numbers<[1], [0], [0], [1], [0, 0, 1, 1], [], []>} : vector<8x8xf32>, vector<8x8xf32>, vector<8x8xf32> -> vector<8x8xf32>
    %152 = vector.extract_strided_slice %35 {offsets = [0, 0], sizes = [8, 32], strides = [1, 1]} : vector<32x32xf32> to vector<8x32xf32>
    %cst_54 = arith.constant dense<0.000000e+00> : vector<8x32xf32>
    %153 = tpu.matmul %151, %152, %cst_54 {dimension_numbers = #tpu.dot_dimension_numbers<[1], [0], [0], [1], [0, 0, 1, 1], [], []>} : vector<8x8xf32>, vector<8x32xf32>, vector<8x32xf32> -> vector<8x32xf32>
    %154 = arith.addf %132, %153 : vector<8x32xf32>
    %155 = vector.extract_strided_slice %130 {offsets = [0, 8], sizes = [8, 8], strides = [1, 1]} : vector<8x96xf32> to vector<8x8xf32>
    %156 = vector.extract_strided_slice %130 {offsets = [0, 40], sizes = [8, 8], strides = [1, 1]} : vector<8x96xf32> to vector<8x8xf32>
    %157 = vector.extract_strided_slice %130 {offsets = [0, 72], sizes = [8, 8], strides = [1, 1]} : vector<8x96xf32> to vector<8x8xf32>
    %cst_55 = arith.constant dense<0.000000e+00> : vector<8x8xf32>
    %158 = tpu.matmul %155, %156, %cst_55 {dimension_numbers = #tpu.dot_dimension_numbers<[1], [1], [0], [0], [0, 0, 1, 0], [], []>} : vector<8x8xf32>, vector<8x8xf32>, vector<8x8xf32> -> vector<8x8xf32>
    %cst_56 = arith.constant 0.353553385 : f32
    %159 = vector.broadcast %cst_56 : f32 to vector<8x8xf32>
    %160 = arith.mulf %158, %159 : vector<8x8xf32>
    %161 = vector.broadcast %131 : vector<1x8xf32> to vector<8x8xf32>
    %162 = arith.addf %160, %161 : vector<8x8xf32>
    %cst_57 = arith.constant dense<0xFF800000> : vector<8xf32>
    %163 = vector.multi_reduction <maximumf>, %162, %cst_57 [1] : vector<8x8xf32> to vector<8xf32>
    %164 = vector.shape_cast %163 : vector<8xf32> to vector<8x1xf32>
    %165 = vector.broadcast %164 : vector<8x1xf32> to vector<8x8xf32>
    %166 = arith.subf %162, %165 : vector<8x8xf32>
    %167 = math.exp %166 : vector<8x8xf32>
    %cst_58 = arith.constant dense<0.000000e+00> : vector<8xf32>
    %168 = vector.multi_reduction <add>, %167, %cst_58 [1] : vector<8x8xf32> to vector<8xf32>
    %169 = vector.shape_cast %168 : vector<8xf32> to vector<8x1xf32>
    %170 = tpu.reciprocal %169 {approx = true} : vector<8x1xf32> -> vector<8x1xf32>
    %171 = vector.broadcast %170 : vector<8x1xf32> to vector<8x8xf32>
    %172 = arith.mulf %167, %171 : vector<8x8xf32>
    %cst_59 = arith.constant dense<0.000000e+00> : vector<8x8xf32>
    %173 = tpu.matmul %172, %157, %cst_59 {dimension_numbers = #tpu.dot_dimension_numbers<[1], [0], [0], [1], [0, 0, 1, 1], [], []>} : vector<8x8xf32>, vector<8x8xf32>, vector<8x8xf32> -> vector<8x8xf32>
    %174 = vector.extract_strided_slice %35 {offsets = [8, 0], sizes = [8, 32], strides = [1, 1]} : vector<32x32xf32> to vector<8x32xf32>
    %cst_60 = arith.constant dense<0.000000e+00> : vector<8x32xf32>
    %175 = tpu.matmul %173, %174, %cst_60 {dimension_numbers = #tpu.dot_dimension_numbers<[1], [0], [0], [1], [0, 0, 1, 1], [], []>} : vector<8x8xf32>, vector<8x32xf32>, vector<8x32xf32> -> vector<8x32xf32>
    %176 = arith.addf %154, %175 : vector<8x32xf32>
    %177 = vector.extract_strided_slice %130 {offsets = [0, 16], sizes = [8, 8], strides = [1, 1]} : vector<8x96xf32> to vector<8x8xf32>
    %178 = vector.extract_strided_slice %130 {offsets = [0, 48], sizes = [8, 8], strides = [1, 1]} : vector<8x96xf32> to vector<8x8xf32>
    %179 = vector.extract_strided_slice %130 {offsets = [0, 80], sizes = [8, 8], strides = [1, 1]} : vector<8x96xf32> to vector<8x8xf32>
    %cst_61 = arith.constant dense<0.000000e+00> : vector<8x8xf32>
    %180 = tpu.matmul %177, %178, %cst_61 {dimension_numbers = #tpu.dot_dimension_numbers<[1], [1], [0], [0], [0, 0, 1, 0], [], []>} : vector<8x8xf32>, vector<8x8xf32>, vector<8x8xf32> -> vector<8x8xf32>
    %cst_62 = arith.constant 0.353553385 : f32
    %181 = vector.broadcast %cst_62 : f32 to vector<8x8xf32>
    %182 = arith.mulf %180, %181 : vector<8x8xf32>
    %183 = vector.broadcast %131 : vector<1x8xf32> to vector<8x8xf32>
    %184 = arith.addf %182, %183 : vector<8x8xf32>
    %cst_63 = arith.constant dense<0xFF800000> : vector<8xf32>
    %185 = vector.multi_reduction <maximumf>, %184, %cst_63 [1] : vector<8x8xf32> to vector<8xf32>
    %186 = vector.shape_cast %185 : vector<8xf32> to vector<8x1xf32>
    %187 = vector.broadcast %186 : vector<8x1xf32> to vector<8x8xf32>
    %188 = arith.subf %184, %187 : vector<8x8xf32>
    %189 = math.exp %188 : vector<8x8xf32>
    %cst_64 = arith.constant dense<0.000000e+00> : vector<8xf32>
    %190 = vector.multi_reduction <add>, %189, %cst_64 [1] : vector<8x8xf32> to vector<8xf32>
    %191 = vector.shape_cast %190 : vector<8xf32> to vector<8x1xf32>
    %192 = tpu.reciprocal %191 {approx = true} : vector<8x1xf32> -> vector<8x1xf32>
    %193 = vector.broadcast %192 : vector<8x1xf32> to vector<8x8xf32>
    %194 = arith.mulf %189, %193 : vector<8x8xf32>
    %cst_65 = arith.constant dense<0.000000e+00> : vector<8x8xf32>
    %195 = tpu.matmul %194, %179, %cst_65 {dimension_numbers = #tpu.dot_dimension_numbers<[1], [0], [0], [1], [0, 0, 1, 1], [], []>} : vector<8x8xf32>, vector<8x8xf32>, vector<8x8xf32> -> vector<8x8xf32>
    %196 = vector.extract_strided_slice %35 {offsets = [16, 0], sizes = [8, 32], strides = [1, 1]} : vector<32x32xf32> to vector<8x32xf32>
    %cst_66 = arith.constant dense<0.000000e+00> : vector<8x32xf32>
    %197 = tpu.matmul %195, %196, %cst_66 {dimension_numbers = #tpu.dot_dimension_numbers<[1], [0], [0], [1], [0, 0, 1, 1], [], []>} : vector<8x8xf32>, vector<8x32xf32>, vector<8x32xf32> -> vector<8x32xf32>
    %198 = arith.addf %176, %197 : vector<8x32xf32>
    %199 = vector.extract_strided_slice %130 {offsets = [0, 24], sizes = [8, 8], strides = [1, 1]} : vector<8x96xf32> to vector<8x8xf32>
    %200 = vector.extract_strided_slice %130 {offsets = [0, 56], sizes = [8, 8], strides = [1, 1]} : vector<8x96xf32> to vector<8x8xf32>
    %201 = vector.extract_strided_slice %130 {offsets = [0, 88], sizes = [8, 8], strides = [1, 1]} : vector<8x96xf32> to vector<8x8xf32>
    %cst_67 = arith.constant dense<0.000000e+00> : vector<8x8xf32>
    %202 = tpu.matmul %199, %200, %cst_67 {dimension_numbers = #tpu.dot_dimension_numbers<[1], [1], [0], [0], [0, 0, 1, 0], [], []>} : vector<8x8xf32>, vector<8x8xf32>, vector<8x8xf32> -> vector<8x8xf32>
    %cst_68 = arith.constant 0.353553385 : f32
    %203 = vector.broadcast %cst_68 : f32 to vector<8x8xf32>
    %204 = arith.mulf %202, %203 : vector<8x8xf32>
    %205 = vector.broadcast %131 : vector<1x8xf32> to vector<8x8xf32>
    %206 = arith.addf %204, %205 : vector<8x8xf32>
    %cst_69 = arith.constant dense<0xFF800000> : vector<8xf32>
    %207 = vector.multi_reduction <maximumf>, %206, %cst_69 [1] : vector<8x8xf32> to vector<8xf32>
    %208 = vector.shape_cast %207 : vector<8xf32> to vector<8x1xf32>
    %209 = vector.broadcast %208 : vector<8x1xf32> to vector<8x8xf32>
    %210 = arith.subf %206, %209 : vector<8x8xf32>
    %211 = math.exp %210 : vector<8x8xf32>
    %cst_70 = arith.constant dense<0.000000e+00> : vector<8xf32>
    %212 = vector.multi_reduction <add>, %211, %cst_70 [1] : vector<8x8xf32> to vector<8xf32>
    %213 = vector.shape_cast %212 : vector<8xf32> to vector<8x1xf32>
    %214 = tpu.reciprocal %213 {approx = true} : vector<8x1xf32> -> vector<8x1xf32>
    %215 = vector.broadcast %214 : vector<8x1xf32> to vector<8x8xf32>
    %216 = arith.mulf %211, %215 : vector<8x8xf32>
    %cst_71 = arith.constant dense<0.000000e+00> : vector<8x8xf32>
    %217 = tpu.matmul %216, %201, %cst_71 {dimension_numbers = #tpu.dot_dimension_numbers<[1], [0], [0], [1], [0, 0, 1, 1], [], []>} : vector<8x8xf32>, vector<8x8xf32>, vector<8x8xf32> -> vector<8x8xf32>
    %218 = vector.extract_strided_slice %35 {offsets = [24, 0], sizes = [8, 32], strides = [1, 1]} : vector<32x32xf32> to vector<8x32xf32>
    %cst_72 = arith.constant dense<0.000000e+00> : vector<8x32xf32>
    %219 = tpu.matmul %217, %218, %cst_72 {dimension_numbers = #tpu.dot_dimension_numbers<[1], [0], [0], [1], [0, 0, 1, 1], [], []>} : vector<8x8xf32>, vector<8x32xf32>, vector<8x32xf32> -> vector<8x32xf32>
    %220 = arith.addf %198, %219 : vector<8x32xf32>
    %221 = tpu.concatenate %129, %220 in 0 : vector<8x32xf32>, vector<8x32xf32> -> vector<16x32xf32>
    %c0_73 = arith.constant 0 : index
    %c0_74 = arith.constant 0 : index
    %c0_75 = arith.constant 0 : index
    %222 = vector.load %arg7[%c0_73, %c0_74, %c0_75] : memref<2x1x32xf32, #tpu.memory_space<vmem>>, vector<1x1x32xf32>
    %223 = vector.shape_cast %222 : vector<1x1x32xf32> to vector<1x32xf32>
    %224 = vector.broadcast %223 : vector<1x32xf32> to vector<16x32xf32>
    %225 = arith.addf %221, %224 : vector<16x32xf32>
    %226 = arith.addf %24, %225 : vector<16x32xf32>
    %c0_76 = arith.constant 0 : index
    %c0_77 = arith.constant 0 : index
    %c0_78 = arith.constant 0 : index
    %227 = vector.load %arg8[%c0_76, %c0_77, %c0_78] : memref<2x1x32xf32, #tpu.memory_space<vmem>>, vector<1x1x32xf32>
    %228 = vector.shape_cast %227 : vector<1x1x32xf32> to vector<1x32xf32>
    %c0_79 = arith.constant 0 : index
    %c0_80 = arith.constant 0 : index
    %c0_81 = arith.constant 0 : index
    %229 = vector.load %arg9[%c0_79, %c0_80, %c0_81] : memref<2x1x32xf32, #tpu.memory_space<vmem>>, vector<1x1x32xf32>
    %230 = vector.shape_cast %229 : vector<1x1x32xf32> to vector<1x32xf32>
    %cst_82 = arith.constant dense<0.000000e+00> : vector<16xf32>
    %231 = vector.multi_reduction <add>, %226, %cst_82 [1] : vector<16x32xf32> to vector<16xf32>
    %232 = vector.shape_cast %231 : vector<16xf32> to vector<16x1xf32>
    %cst_83 = arith.constant 3.200000e+01 : f32
    %233 = vector.broadcast %cst_83 : f32 to vector<16x1xf32>
    %234 = arith.divf %232, %233 : vector<16x1xf32>
    %235 = vector.broadcast %234 : vector<16x1xf32> to vector<16x32xf32>
    %236 = arith.subf %226, %235 : vector<16x32xf32>
    %237 = arith.mulf %236, %236 : vector<16x32xf32>
    %cst_84 = arith.constant dense<0.000000e+00> : vector<16xf32>
    %238 = vector.multi_reduction <add>, %237, %cst_84 [1] : vector<16x32xf32> to vector<16xf32>
    %239 = vector.shape_cast %238 : vector<16xf32> to vector<16x1xf32>
    %cst_85 = arith.constant 3.200000e+01 : f32
    %240 = vector.broadcast %cst_85 : f32 to vector<16x1xf32>
    %241 = arith.divf %239, %240 : vector<16x1xf32>
    %242 = vector.broadcast %234 : vector<16x1xf32> to vector<16x32xf32>
    %243 = arith.subf %226, %242 : vector<16x32xf32>
    %cst_86 = arith.constant 9.99999996E-13 : f32
    %244 = vector.broadcast %cst_86 : f32 to vector<16x1xf32>
    %245 = arith.addf %241, %244 : vector<16x1xf32>
    %246 = math.rsqrt %245 : vector<16x1xf32>
    %247 = vector.broadcast %246 : vector<16x1xf32> to vector<16x32xf32>
    %248 = arith.mulf %243, %247 : vector<16x32xf32>
    %249 = vector.broadcast %228 : vector<1x32xf32> to vector<16x32xf32>
    %250 = arith.mulf %248, %249 : vector<16x32xf32>
    %251 = vector.broadcast %230 : vector<1x32xf32> to vector<16x32xf32>
    %252 = arith.addf %250, %251 : vector<16x32xf32>
    %c0_87 = arith.constant 0 : index
    %c0_88 = arith.constant 0 : index
    %c0_89 = arith.constant 0 : index
    %253 = vector.load %arg10[%c0_87, %c0_88, %c0_89] : memref<2x32x64xf32, #tpu.memory_space<vmem>>, vector<1x32x64xf32>
    %254 = vector.shape_cast %253 : vector<1x32x64xf32> to vector<32x64xf32>
    %cst_90 = arith.constant dense<0.000000e+00> : vector<16x64xf32>
    %255 = tpu.matmul %252, %254, %cst_90 {dimension_numbers = #tpu.dot_dimension_numbers<[1], [0], [0], [1], [0, 0, 1, 1], [], []>} : vector<16x32xf32>, vector<32x64xf32>, vector<16x64xf32> -> vector<16x64xf32>
    %c0_91 = arith.constant 0 : index
    %c0_92 = arith.constant 0 : index
    %c0_93 = arith.constant 0 : index
    %256 = vector.load %arg11[%c0_91, %c0_92, %c0_93] : memref<2x1x64xf32, #tpu.memory_space<vmem>>, vector<1x1x64xf32>
    %257 = vector.shape_cast %256 : vector<1x1x64xf32> to vector<1x64xf32>
    %258 = vector.broadcast %257 : vector<1x64xf32> to vector<16x64xf32>
    %259 = arith.addf %255, %258 : vector<16x64xf32>
    %cst_94 = arith.constant 5.000000e-01 : f32
    %260 = vector.broadcast %cst_94 : f32 to vector<16x64xf32>
    %261 = arith.mulf %260, %259 : vector<16x64xf32>
    %cst_95 = arith.constant 0.707106769 : f32
    %262 = vector.broadcast %cst_95 : f32 to vector<16x64xf32>
    %263 = arith.mulf %259, %262 : vector<16x64xf32>
    %264 = math.erf %263 : vector<16x64xf32>
    %cst_96 = arith.constant 1.000000e+00 : f32
    %265 = vector.broadcast %cst_96 : f32 to vector<16x64xf32>
    %266 = arith.addf %265, %264 : vector<16x64xf32>
    %267 = arith.mulf %261, %266 : vector<16x64xf32>
    %c0_97 = arith.constant 0 : index
    %c0_98 = arith.constant 0 : index
    %c0_99 = arith.constant 0 : index
    %268 = vector.load %arg12[%c0_97, %c0_98, %c0_99] : memref<2x64x32xf32, #tpu.memory_space<vmem>>, vector<1x64x32xf32>
    %269 = vector.shape_cast %268 : vector<1x64x32xf32> to vector<64x32xf32>
    %cst_100 = arith.constant dense<0.000000e+00> : vector<16x32xf32>
    %270 = tpu.matmul %267, %269, %cst_100 {dimension_numbers = #tpu.dot_dimension_numbers<[1], [0], [0], [1], [0, 0, 1, 1], [], []>} : vector<16x64xf32>, vector<64x32xf32>, vector<16x32xf32> -> vector<16x32xf32>
    %c0_101 = arith.constant 0 : index
    %c0_102 = arith.constant 0 : index
    %c0_103 = arith.constant 0 : index
    %271 = vector.load %arg13[%c0_101, %c0_102, %c0_103] : memref<2x1x32xf32, #tpu.memory_space<vmem>>, vector<1x1x32xf32>
    %272 = vector.shape_cast %271 : vector<1x1x32xf32> to vector<1x32xf32>
    %273 = vector.broadcast %272 : vector<1x32xf32> to vector<16x32xf32>
    %274 = arith.addf %270, %273 : vector<16x32xf32>
    %275 = arith.addf %252, %274 : vector<16x32xf32>
    %c0_104 = arith.constant 0 : index
    %c0_105 = arith.constant 0 : index
    %c0_106 = arith.constant 0 : index
    %276 = vector.load %arg14[%c0_104, %c0_105, %c0_106] : memref<2x1x32xf32, #tpu.memory_space<vmem>>, vector<1x1x32xf32>
    %277 = vector.shape_cast %276 : vector<1x1x32xf32> to vector<1x32xf32>
    %c0_107 = arith.constant 0 : index
    %c0_108 = arith.constant 0 : index
    %c0_109 = arith.constant 0 : index
    %278 = vector.load %arg15[%c0_107, %c0_108, %c0_109] : memref<2x1x32xf32, #tpu.memory_space<vmem>>, vector<1x1x32xf32>
    %279 = vector.shape_cast %278 : vector<1x1x32xf32> to vector<1x32xf32>
    %cst_110 = arith.constant dense<0.000000e+00> : vector<16xf32>
    %280 = vector.multi_reduction <add>, %275, %cst_110 [1] : vector<16x32xf32> to vector<16xf32>
    %281 = vector.shape_cast %280 : vector<16xf32> to vector<16x1xf32>
    %cst_111 = arith.constant 3.200000e+01 : f32
    %282 = vector.broadcast %cst_111 : f32 to vector<16x1xf32>
    %283 = arith.divf %281, %282 : vector<16x1xf32>
    %284 = vector.broadcast %283 : vector<16x1xf32> to vector<16x32xf32>
    %285 = arith.subf %275, %284 : vector<16x32xf32>
    %286 = arith.mulf %285, %285 : vector<16x32xf32>
    %cst_112 = arith.constant dense<0.000000e+00> : vector<16xf32>
    %287 = vector.multi_reduction <add>, %286, %cst_112 [1] : vector<16x32xf32> to vector<16xf32>
    %288 = vector.shape_cast %287 : vector<16xf32> to vector<16x1xf32>
    %cst_113 = arith.constant 3.200000e+01 : f32
    %289 = vector.broadcast %cst_113 : f32 to vector<16x1xf32>
    %290 = arith.divf %288, %289 : vector<16x1xf32>
    %291 = vector.broadcast %283 : vector<16x1xf32> to vector<16x32xf32>
    %292 = arith.subf %275, %291 : vector<16x32xf32>
    %cst_114 = arith.constant 9.99999996E-13 : f32
    %293 = vector.broadcast %cst_114 : f32 to vector<16x1xf32>
    %294 = arith.addf %290, %293 : vector<16x1xf32>
    %295 = math.rsqrt %294 : vector<16x1xf32>
    %296 = vector.broadcast %295 : vector<16x1xf32> to vector<16x32xf32>
    %297 = arith.mulf %292, %296 : vector<16x32xf32>
    %298 = vector.broadcast %277 : vector<1x32xf32> to vector<16x32xf32>
    %299 = arith.mulf %297, %298 : vector<16x32xf32>
    %300 = vector.broadcast %279 : vector<1x32xf32> to vector<16x32xf32>
    %301 = arith.addf %299, %300 : vector<16x32xf32>
    %c1 = arith.constant 1 : index
    %c0_115 = arith.constant 0 : index
    %c0_116 = arith.constant 0 : index
    %302 = vector.load %arg4[%c1, %c0_115, %c0_116] : memref<2x32x96xf32, #tpu.memory_space<vmem>>, vector<1x32x96xf32>
    %303 = vector.shape_cast %302 : vector<1x32x96xf32> to vector<32x96xf32>
    %c1_117 = arith.constant 1 : index
    %c0_118 = arith.constant 0 : index
    %c0_119 = arith.constant 0 : index
    %304 = vector.load %arg5[%c1_117, %c0_118, %c0_119] : memref<2x1x96xf32, #tpu.memory_space<vmem>>, vector<1x1x96xf32>
    %305 = vector.shape_cast %304 : vector<1x1x96xf32> to vector<1x96xf32>
    %c1_120 = arith.constant 1 : index
    %c0_121 = arith.constant 0 : index
    %c0_122 = arith.constant 0 : index
    %306 = vector.load %arg6[%c1_120, %c0_121, %c0_122] : memref<2x32x32xf32, #tpu.memory_space<vmem>>, vector<1x32x32xf32>
    %307 = vector.shape_cast %306 : vector<1x32x32xf32> to vector<32x32xf32>
    %cst_123 = arith.constant dense<0.000000e+00> : vector<16x96xf32>
    %308 = tpu.matmul %301, %303, %cst_123 {dimension_numbers = #tpu.dot_dimension_numbers<[1], [0], [0], [1], [0, 0, 1, 1], [], []>} : vector<16x32xf32>, vector<32x96xf32>, vector<16x96xf32> -> vector<16x96xf32>
    %309 = vector.broadcast %305 : vector<1x96xf32> to vector<16x96xf32>
    %310 = arith.addf %308, %309 : vector<16x96xf32>
    %311 = vector.extract_strided_slice %310 {offsets = [0, 0], sizes = [8, 96], strides = [1, 1]} : vector<16x96xf32> to vector<8x96xf32>
    %312 = vector.extract_strided_slice %29 {offsets = [0, 0], sizes = [1, 8], strides = [1, 1]} : vector<2x8xf32> to vector<1x8xf32>
    %cst_124 = arith.constant 0.000000e+00 : f32
    %313 = vector.broadcast %cst_124 : f32 to vector<8x32xf32>
    %314 = vector.extract_strided_slice %311 {offsets = [0, 0], sizes = [8, 8], strides = [1, 1]} : vector<8x96xf32> to vector<8x8xf32>
    %315 = vector.extract_strided_slice %311 {offsets = [0, 32], sizes = [8, 8], strides = [1, 1]} : vector<8x96xf32> to vector<8x8xf32>
    %316 = vector.extract_strided_slice %311 {offsets = [0, 64], sizes = [8, 8], strides = [1, 1]} : vector<8x96xf32> to vector<8x8xf32>
    %cst_125 = arith.constant dense<0.000000e+00> : vector<8x8xf32>
    %317 = tpu.matmul %314, %315, %cst_125 {dimension_numbers = #tpu.dot_dimension_numbers<[1], [1], [0], [0], [0, 0, 1, 0], [], []>} : vector<8x8xf32>, vector<8x8xf32>, vector<8x8xf32> -> vector<8x8xf32>
    %cst_126 = arith.constant 0.353553385 : f32
    %318 = vector.broadcast %cst_126 : f32 to vector<8x8xf32>
    %319 = arith.mulf %317, %318 : vector<8x8xf32>
    %320 = vector.broadcast %312 : vector<1x8xf32> to vector<8x8xf32>
    %321 = arith.addf %319, %320 : vector<8x8xf32>
    %cst_127 = arith.constant dense<0xFF800000> : vector<8xf32>
    %322 = vector.multi_reduction <maximumf>, %321, %cst_127 [1] : vector<8x8xf32> to vector<8xf32>
    %323 = vector.shape_cast %322 : vector<8xf32> to vector<8x1xf32>
    %324 = vector.broadcast %323 : vector<8x1xf32> to vector<8x8xf32>
    %325 = arith.subf %321, %324 : vector<8x8xf32>
    %326 = math.exp %325 : vector<8x8xf32>
    %cst_128 = arith.constant dense<0.000000e+00> : vector<8xf32>
    %327 = vector.multi_reduction <add>, %326, %cst_128 [1] : vector<8x8xf32> to vector<8xf32>
    %328 = vector.shape_cast %327 : vector<8xf32> to vector<8x1xf32>
    %329 = tpu.reciprocal %328 {approx = true} : vector<8x1xf32> -> vector<8x1xf32>
    %330 = vector.broadcast %329 : vector<8x1xf32> to vector<8x8xf32>
    %331 = arith.mulf %326, %330 : vector<8x8xf32>
    %cst_129 = arith.constant dense<0.000000e+00> : vector<8x8xf32>
    %332 = tpu.matmul %331, %316, %cst_129 {dimension_numbers = #tpu.dot_dimension_numbers<[1], [0], [0], [1], [0, 0, 1, 1], [], []>} : vector<8x8xf32>, vector<8x8xf32>, vector<8x8xf32> -> vector<8x8xf32>
    %333 = vector.extract_strided_slice %307 {offsets = [0, 0], sizes = [8, 32], strides = [1, 1]} : vector<32x32xf32> to vector<8x32xf32>
    %cst_130 = arith.constant dense<0.000000e+00> : vector<8x32xf32>
    %334 = tpu.matmul %332, %333, %cst_130 {dimension_numbers = #tpu.dot_dimension_numbers<[1], [0], [0], [1], [0, 0, 1, 1], [], []>} : vector<8x8xf32>, vector<8x32xf32>, vector<8x32xf32> -> vector<8x32xf32>
    %335 = arith.addf %313, %334 : vector<8x32xf32>
    %336 = vector.extract_strided_slice %311 {offsets = [0, 8], sizes = [8, 8], strides = [1, 1]} : vector<8x96xf32> to vector<8x8xf32>
    %337 = vector.extract_strided_slice %311 {offsets = [0, 40], sizes = [8, 8], strides = [1, 1]} : vector<8x96xf32> to vector<8x8xf32>
    %338 = vector.extract_strided_slice %311 {offsets = [0, 72], sizes = [8, 8], strides = [1, 1]} : vector<8x96xf32> to vector<8x8xf32>
    %cst_131 = arith.constant dense<0.000000e+00> : vector<8x8xf32>
    %339 = tpu.matmul %336, %337, %cst_131 {dimension_numbers = #tpu.dot_dimension_numbers<[1], [1], [0], [0], [0, 0, 1, 0], [], []>} : vector<8x8xf32>, vector<8x8xf32>, vector<8x8xf32> -> vector<8x8xf32>
    %cst_132 = arith.constant 0.353553385 : f32
    %340 = vector.broadcast %cst_132 : f32 to vector<8x8xf32>
    %341 = arith.mulf %339, %340 : vector<8x8xf32>
    %342 = vector.broadcast %312 : vector<1x8xf32> to vector<8x8xf32>
    %343 = arith.addf %341, %342 : vector<8x8xf32>
    %cst_133 = arith.constant dense<0xFF800000> : vector<8xf32>
    %344 = vector.multi_reduction <maximumf>, %343, %cst_133 [1] : vector<8x8xf32> to vector<8xf32>
    %345 = vector.shape_cast %344 : vector<8xf32> to vector<8x1xf32>
    %346 = vector.broadcast %345 : vector<8x1xf32> to vector<8x8xf32>
    %347 = arith.subf %343, %346 : vector<8x8xf32>
    %348 = math.exp %347 : vector<8x8xf32>
    %cst_134 = arith.constant dense<0.000000e+00> : vector<8xf32>
    %349 = vector.multi_reduction <add>, %348, %cst_134 [1] : vector<8x8xf32> to vector<8xf32>
    %350 = vector.shape_cast %349 : vector<8xf32> to vector<8x1xf32>
    %351 = tpu.reciprocal %350 {approx = true} : vector<8x1xf32> -> vector<8x1xf32>
    %352 = vector.broadcast %351 : vector<8x1xf32> to vector<8x8xf32>
    %353 = arith.mulf %348, %352 : vector<8x8xf32>
    %cst_135 = arith.constant dense<0.000000e+00> : vector<8x8xf32>
    %354 = tpu.matmul %353, %338, %cst_135 {dimension_numbers = #tpu.dot_dimension_numbers<[1], [0], [0], [1], [0, 0, 1, 1], [], []>} : vector<8x8xf32>, vector<8x8xf32>, vector<8x8xf32> -> vector<8x8xf32>
    %355 = vector.extract_strided_slice %307 {offsets = [8, 0], sizes = [8, 32], strides = [1, 1]} : vector<32x32xf32> to vector<8x32xf32>
    %cst_136 = arith.constant dense<0.000000e+00> : vector<8x32xf32>
    %356 = tpu.matmul %354, %355, %cst_136 {dimension_numbers = #tpu.dot_dimension_numbers<[1], [0], [0], [1], [0, 0, 1, 1], [], []>} : vector<8x8xf32>, vector<8x32xf32>, vector<8x32xf32> -> vector<8x32xf32>
    %357 = arith.addf %335, %356 : vector<8x32xf32>
    %358 = vector.extract_strided_slice %311 {offsets = [0, 16], sizes = [8, 8], strides = [1, 1]} : vector<8x96xf32> to vector<8x8xf32>
    %359 = vector.extract_strided_slice %311 {offsets = [0, 48], sizes = [8, 8], strides = [1, 1]} : vector<8x96xf32> to vector<8x8xf32>
    %360 = vector.extract_strided_slice %311 {offsets = [0, 80], sizes = [8, 8], strides = [1, 1]} : vector<8x96xf32> to vector<8x8xf32>
    %cst_137 = arith.constant dense<0.000000e+00> : vector<8x8xf32>
    %361 = tpu.matmul %358, %359, %cst_137 {dimension_numbers = #tpu.dot_dimension_numbers<[1], [1], [0], [0], [0, 0, 1, 0], [], []>} : vector<8x8xf32>, vector<8x8xf32>, vector<8x8xf32> -> vector<8x8xf32>
    %cst_138 = arith.constant 0.353553385 : f32
    %362 = vector.broadcast %cst_138 : f32 to vector<8x8xf32>
    %363 = arith.mulf %361, %362 : vector<8x8xf32>
    %364 = vector.broadcast %312 : vector<1x8xf32> to vector<8x8xf32>
    %365 = arith.addf %363, %364 : vector<8x8xf32>
    %cst_139 = arith.constant dense<0xFF800000> : vector<8xf32>
    %366 = vector.multi_reduction <maximumf>, %365, %cst_139 [1] : vector<8x8xf32> to vector<8xf32>
    %367 = vector.shape_cast %366 : vector<8xf32> to vector<8x1xf32>
    %368 = vector.broadcast %367 : vector<8x1xf32> to vector<8x8xf32>
    %369 = arith.subf %365, %368 : vector<8x8xf32>
    %370 = math.exp %369 : vector<8x8xf32>
    %cst_140 = arith.constant dense<0.000000e+00> : vector<8xf32>
    %371 = vector.multi_reduction <add>, %370, %cst_140 [1] : vector<8x8xf32> to vector<8xf32>
    %372 = vector.shape_cast %371 : vector<8xf32> to vector<8x1xf32>
    %373 = tpu.reciprocal %372 {approx = true} : vector<8x1xf32> -> vector<8x1xf32>
    %374 = vector.broadcast %373 : vector<8x1xf32> to vector<8x8xf32>
    %375 = arith.mulf %370, %374 : vector<8x8xf32>
    %cst_141 = arith.constant dense<0.000000e+00> : vector<8x8xf32>
    %376 = tpu.matmul %375, %360, %cst_141 {dimension_numbers = #tpu.dot_dimension_numbers<[1], [0], [0], [1], [0, 0, 1, 1], [], []>} : vector<8x8xf32>, vector<8x8xf32>, vector<8x8xf32> -> vector<8x8xf32>
    %377 = vector.extract_strided_slice %307 {offsets = [16, 0], sizes = [8, 32], strides = [1, 1]} : vector<32x32xf32> to vector<8x32xf32>
    %cst_142 = arith.constant dense<0.000000e+00> : vector<8x32xf32>
    %378 = tpu.matmul %376, %377, %cst_142 {dimension_numbers = #tpu.dot_dimension_numbers<[1], [0], [0], [1], [0, 0, 1, 1], [], []>} : vector<8x8xf32>, vector<8x32xf32>, vector<8x32xf32> -> vector<8x32xf32>
    %379 = arith.addf %357, %378 : vector<8x32xf32>
    %380 = vector.extract_strided_slice %311 {offsets = [0, 24], sizes = [8, 8], strides = [1, 1]} : vector<8x96xf32> to vector<8x8xf32>
    %381 = vector.extract_strided_slice %311 {offsets = [0, 56], sizes = [8, 8], strides = [1, 1]} : vector<8x96xf32> to vector<8x8xf32>
    %382 = vector.extract_strided_slice %311 {offsets = [0, 88], sizes = [8, 8], strides = [1, 1]} : vector<8x96xf32> to vector<8x8xf32>
    %cst_143 = arith.constant dense<0.000000e+00> : vector<8x8xf32>
    %383 = tpu.matmul %380, %381, %cst_143 {dimension_numbers = #tpu.dot_dimension_numbers<[1], [1], [0], [0], [0, 0, 1, 0], [], []>} : vector<8x8xf32>, vector<8x8xf32>, vector<8x8xf32> -> vector<8x8xf32>
    %cst_144 = arith.constant 0.353553385 : f32
    %384 = vector.broadcast %cst_144 : f32 to vector<8x8xf32>
    %385 = arith.mulf %383, %384 : vector<8x8xf32>
    %386 = vector.broadcast %312 : vector<1x8xf32> to vector<8x8xf32>
    %387 = arith.addf %385, %386 : vector<8x8xf32>
    %cst_145 = arith.constant dense<0xFF800000> : vector<8xf32>
    %388 = vector.multi_reduction <maximumf>, %387, %cst_145 [1] : vector<8x8xf32> to vector<8xf32>
    %389 = vector.shape_cast %388 : vector<8xf32> to vector<8x1xf32>
    %390 = vector.broadcast %389 : vector<8x1xf32> to vector<8x8xf32>
    %391 = arith.subf %387, %390 : vector<8x8xf32>
    %392 = math.exp %391 : vector<8x8xf32>
    %cst_146 = arith.constant dense<0.000000e+00> : vector<8xf32>
    %393 = vector.multi_reduction <add>, %392, %cst_146 [1] : vector<8x8xf32> to vector<8xf32>
    %394 = vector.shape_cast %393 : vector<8xf32> to vector<8x1xf32>
    %395 = tpu.reciprocal %394 {approx = true} : vector<8x1xf32> -> vector<8x1xf32>
    %396 = vector.broadcast %395 : vector<8x1xf32> to vector<8x8xf32>
    %397 = arith.mulf %392, %396 : vector<8x8xf32>
    %cst_147 = arith.constant dense<0.000000e+00> : vector<8x8xf32>
    %398 = tpu.matmul %397, %382, %cst_147 {dimension_numbers = #tpu.dot_dimension_numbers<[1], [0], [0], [1], [0, 0, 1, 1], [], []>} : vector<8x8xf32>, vector<8x8xf32>, vector<8x8xf32> -> vector<8x8xf32>
    %399 = vector.extract_strided_slice %307 {offsets = [24, 0], sizes = [8, 32], strides = [1, 1]} : vector<32x32xf32> to vector<8x32xf32>
    %cst_148 = arith.constant dense<0.000000e+00> : vector<8x32xf32>
    %400 = tpu.matmul %398, %399, %cst_148 {dimension_numbers = #tpu.dot_dimension_numbers<[1], [0], [0], [1], [0, 0, 1, 1], [], []>} : vector<8x8xf32>, vector<8x32xf32>, vector<8x32xf32> -> vector<8x32xf32>
    %401 = arith.addf %379, %400 : vector<8x32xf32>
    %402 = vector.extract_strided_slice %310 {offsets = [8, 0], sizes = [8, 96], strides = [1, 1]} : vector<16x96xf32> to vector<8x96xf32>
    %403 = vector.extract_strided_slice %29 {offsets = [1, 0], sizes = [1, 8], strides = [1, 1]} : vector<2x8xf32> to vector<1x8xf32>
    %cst_149 = arith.constant 0.000000e+00 : f32
    %404 = vector.broadcast %cst_149 : f32 to vector<8x32xf32>
    %405 = vector.extract_strided_slice %402 {offsets = [0, 0], sizes = [8, 8], strides = [1, 1]} : vector<8x96xf32> to vector<8x8xf32>
    %406 = vector.extract_strided_slice %402 {offsets = [0, 32], sizes = [8, 8], strides = [1, 1]} : vector<8x96xf32> to vector<8x8xf32>
    %407 = vector.extract_strided_slice %402 {offsets = [0, 64], sizes = [8, 8], strides = [1, 1]} : vector<8x96xf32> to vector<8x8xf32>
    %cst_150 = arith.constant dense<0.000000e+00> : vector<8x8xf32>
    %408 = tpu.matmul %405, %406, %cst_150 {dimension_numbers = #tpu.dot_dimension_numbers<[1], [1], [0], [0], [0, 0, 1, 0], [], []>} : vector<8x8xf32>, vector<8x8xf32>, vector<8x8xf32> -> vector<8x8xf32>
    %cst_151 = arith.constant 0.353553385 : f32
    %409 = vector.broadcast %cst_151 : f32 to vector<8x8xf32>
    %410 = arith.mulf %408, %409 : vector<8x8xf32>
    %411 = vector.broadcast %403 : vector<1x8xf32> to vector<8x8xf32>
    %412 = arith.addf %410, %411 : vector<8x8xf32>
    %cst_152 = arith.constant dense<0xFF800000> : vector<8xf32>
    %413 = vector.multi_reduction <maximumf>, %412, %cst_152 [1] : vector<8x8xf32> to vector<8xf32>
    %414 = vector.shape_cast %413 : vector<8xf32> to vector<8x1xf32>
    %415 = vector.broadcast %414 : vector<8x1xf32> to vector<8x8xf32>
    %416 = arith.subf %412, %415 : vector<8x8xf32>
    %417 = math.exp %416 : vector<8x8xf32>
    %cst_153 = arith.constant dense<0.000000e+00> : vector<8xf32>
    %418 = vector.multi_reduction <add>, %417, %cst_153 [1] : vector<8x8xf32> to vector<8xf32>
    %419 = vector.shape_cast %418 : vector<8xf32> to vector<8x1xf32>
    %420 = tpu.reciprocal %419 {approx = true} : vector<8x1xf32> -> vector<8x1xf32>
    %421 = vector.broadcast %420 : vector<8x1xf32> to vector<8x8xf32>
    %422 = arith.mulf %417, %421 : vector<8x8xf32>
    %cst_154 = arith.constant dense<0.000000e+00> : vector<8x8xf32>
    %423 = tpu.matmul %422, %407, %cst_154 {dimension_numbers = #tpu.dot_dimension_numbers<[1], [0], [0], [1], [0, 0, 1, 1], [], []>} : vector<8x8xf32>, vector<8x8xf32>, vector<8x8xf32> -> vector<8x8xf32>
    %424 = vector.extract_strided_slice %307 {offsets = [0, 0], sizes = [8, 32], strides = [1, 1]} : vector<32x32xf32> to vector<8x32xf32>
    %cst_155 = arith.constant dense<0.000000e+00> : vector<8x32xf32>
    %425 = tpu.matmul %423, %424, %cst_155 {dimension_numbers = #tpu.dot_dimension_numbers<[1], [0], [0], [1], [0, 0, 1, 1], [], []>} : vector<8x8xf32>, vector<8x32xf32>, vector<8x32xf32> -> vector<8x32xf32>
    %426 = arith.addf %404, %425 : vector<8x32xf32>
    %427 = vector.extract_strided_slice %402 {offsets = [0, 8], sizes = [8, 8], strides = [1, 1]} : vector<8x96xf32> to vector<8x8xf32>
    %428 = vector.extract_strided_slice %402 {offsets = [0, 40], sizes = [8, 8], strides = [1, 1]} : vector<8x96xf32> to vector<8x8xf32>
    %429 = vector.extract_strided_slice %402 {offsets = [0, 72], sizes = [8, 8], strides = [1, 1]} : vector<8x96xf32> to vector<8x8xf32>
    %cst_156 = arith.constant dense<0.000000e+00> : vector<8x8xf32>
    %430 = tpu.matmul %427, %428, %cst_156 {dimension_numbers = #tpu.dot_dimension_numbers<[1], [1], [0], [0], [0, 0, 1, 0], [], []>} : vector<8x8xf32>, vector<8x8xf32>, vector<8x8xf32> -> vector<8x8xf32>
    %cst_157 = arith.constant 0.353553385 : f32
    %431 = vector.broadcast %cst_157 : f32 to vector<8x8xf32>
    %432 = arith.mulf %430, %431 : vector<8x8xf32>
    %433 = vector.broadcast %403 : vector<1x8xf32> to vector<8x8xf32>
    %434 = arith.addf %432, %433 : vector<8x8xf32>
    %cst_158 = arith.constant dense<0xFF800000> : vector<8xf32>
    %435 = vector.multi_reduction <maximumf>, %434, %cst_158 [1] : vector<8x8xf32> to vector<8xf32>
    %436 = vector.shape_cast %435 : vector<8xf32> to vector<8x1xf32>
    %437 = vector.broadcast %436 : vector<8x1xf32> to vector<8x8xf32>
    %438 = arith.subf %434, %437 : vector<8x8xf32>
    %439 = math.exp %438 : vector<8x8xf32>
    %cst_159 = arith.constant dense<0.000000e+00> : vector<8xf32>
    %440 = vector.multi_reduction <add>, %439, %cst_159 [1] : vector<8x8xf32> to vector<8xf32>
    %441 = vector.shape_cast %440 : vector<8xf32> to vector<8x1xf32>
    %442 = tpu.reciprocal %441 {approx = true} : vector<8x1xf32> -> vector<8x1xf32>
    %443 = vector.broadcast %442 : vector<8x1xf32> to vector<8x8xf32>
    %444 = arith.mulf %439, %443 : vector<8x8xf32>
    %cst_160 = arith.constant dense<0.000000e+00> : vector<8x8xf32>
    %445 = tpu.matmul %444, %429, %cst_160 {dimension_numbers = #tpu.dot_dimension_numbers<[1], [0], [0], [1], [0, 0, 1, 1], [], []>} : vector<8x8xf32>, vector<8x8xf32>, vector<8x8xf32> -> vector<8x8xf32>
    %446 = vector.extract_strided_slice %307 {offsets = [8, 0], sizes = [8, 32], strides = [1, 1]} : vector<32x32xf32> to vector<8x32xf32>
    %cst_161 = arith.constant dense<0.000000e+00> : vector<8x32xf32>
    %447 = tpu.matmul %445, %446, %cst_161 {dimension_numbers = #tpu.dot_dimension_numbers<[1], [0], [0], [1], [0, 0, 1, 1], [], []>} : vector<8x8xf32>, vector<8x32xf32>, vector<8x32xf32> -> vector<8x32xf32>
    %448 = arith.addf %426, %447 : vector<8x32xf32>
    %449 = vector.extract_strided_slice %402 {offsets = [0, 16], sizes = [8, 8], strides = [1, 1]} : vector<8x96xf32> to vector<8x8xf32>
    %450 = vector.extract_strided_slice %402 {offsets = [0, 48], sizes = [8, 8], strides = [1, 1]} : vector<8x96xf32> to vector<8x8xf32>
    %451 = vector.extract_strided_slice %402 {offsets = [0, 80], sizes = [8, 8], strides = [1, 1]} : vector<8x96xf32> to vector<8x8xf32>
    %cst_162 = arith.constant dense<0.000000e+00> : vector<8x8xf32>
    %452 = tpu.matmul %449, %450, %cst_162 {dimension_numbers = #tpu.dot_dimension_numbers<[1], [1], [0], [0], [0, 0, 1, 0], [], []>} : vector<8x8xf32>, vector<8x8xf32>, vector<8x8xf32> -> vector<8x8xf32>
    %cst_163 = arith.constant 0.353553385 : f32
    %453 = vector.broadcast %cst_163 : f32 to vector<8x8xf32>
    %454 = arith.mulf %452, %453 : vector<8x8xf32>
    %455 = vector.broadcast %403 : vector<1x8xf32> to vector<8x8xf32>
    %456 = arith.addf %454, %455 : vector<8x8xf32>
    %cst_164 = arith.constant dense<0xFF800000> : vector<8xf32>
    %457 = vector.multi_reduction <maximumf>, %456, %cst_164 [1] : vector<8x8xf32> to vector<8xf32>
    %458 = vector.shape_cast %457 : vector<8xf32> to vector<8x1xf32>
    %459 = vector.broadcast %458 : vector<8x1xf32> to vector<8x8xf32>
    %460 = arith.subf %456, %459 : vector<8x8xf32>
    %461 = math.exp %460 : vector<8x8xf32>
    %cst_165 = arith.constant dense<0.000000e+00> : vector<8xf32>
    %462 = vector.multi_reduction <add>, %461, %cst_165 [1] : vector<8x8xf32> to vector<8xf32>
    %463 = vector.shape_cast %462 : vector<8xf32> to vector<8x1xf32>
    %464 = tpu.reciprocal %463 {approx = true} : vector<8x1xf32> -> vector<8x1xf32>
    %465 = vector.broadcast %464 : vector<8x1xf32> to vector<8x8xf32>
    %466 = arith.mulf %461, %465 : vector<8x8xf32>
    %cst_166 = arith.constant dense<0.000000e+00> : vector<8x8xf32>
    %467 = tpu.matmul %466, %451, %cst_166 {dimension_numbers = #tpu.dot_dimension_numbers<[1], [0], [0], [1], [0, 0, 1, 1], [], []>} : vector<8x8xf32>, vector<8x8xf32>, vector<8x8xf32> -> vector<8x8xf32>
    %468 = vector.extract_strided_slice %307 {offsets = [16, 0], sizes = [8, 32], strides = [1, 1]} : vector<32x32xf32> to vector<8x32xf32>
    %cst_167 = arith.constant dense<0.000000e+00> : vector<8x32xf32>
    %469 = tpu.matmul %467, %468, %cst_167 {dimension_numbers = #tpu.dot_dimension_numbers<[1], [0], [0], [1], [0, 0, 1, 1], [], []>} : vector<8x8xf32>, vector<8x32xf32>, vector<8x32xf32> -> vector<8x32xf32>
    %470 = arith.addf %448, %469 : vector<8x32xf32>
    %471 = vector.extract_strided_slice %402 {offsets = [0, 24], sizes = [8, 8], strides = [1, 1]} : vector<8x96xf32> to vector<8x8xf32>
    %472 = vector.extract_strided_slice %402 {offsets = [0, 56], sizes = [8, 8], strides = [1, 1]} : vector<8x96xf32> to vector<8x8xf32>
    %473 = vector.extract_strided_slice %402 {offsets = [0, 88], sizes = [8, 8], strides = [1, 1]} : vector<8x96xf32> to vector<8x8xf32>
    %cst_168 = arith.constant dense<0.000000e+00> : vector<8x8xf32>
    %474 = tpu.matmul %471, %472, %cst_168 {dimension_numbers = #tpu.dot_dimension_numbers<[1], [1], [0], [0], [0, 0, 1, 0], [], []>} : vector<8x8xf32>, vector<8x8xf32>, vector<8x8xf32> -> vector<8x8xf32>
    %cst_169 = arith.constant 0.353553385 : f32
    %475 = vector.broadcast %cst_169 : f32 to vector<8x8xf32>
    %476 = arith.mulf %474, %475 : vector<8x8xf32>
    %477 = vector.broadcast %403 : vector<1x8xf32> to vector<8x8xf32>
    %478 = arith.addf %476, %477 : vector<8x8xf32>
    %cst_170 = arith.constant dense<0xFF800000> : vector<8xf32>
    %479 = vector.multi_reduction <maximumf>, %478, %cst_170 [1] : vector<8x8xf32> to vector<8xf32>
    %480 = vector.shape_cast %479 : vector<8xf32> to vector<8x1xf32>
    %481 = vector.broadcast %480 : vector<8x1xf32> to vector<8x8xf32>
    %482 = arith.subf %478, %481 : vector<8x8xf32>
    %483 = math.exp %482 : vector<8x8xf32>
    %cst_171 = arith.constant dense<0.000000e+00> : vector<8xf32>
    %484 = vector.multi_reduction <add>, %483, %cst_171 [1] : vector<8x8xf32> to vector<8xf32>
    %485 = vector.shape_cast %484 : vector<8xf32> to vector<8x1xf32>
    %486 = tpu.reciprocal %485 {approx = true} : vector<8x1xf32> -> vector<8x1xf32>
    %487 = vector.broadcast %486 : vector<8x1xf32> to vector<8x8xf32>
    %488 = arith.mulf %483, %487 : vector<8x8xf32>
    %cst_172 = arith.constant dense<0.000000e+00> : vector<8x8xf32>
    %489 = tpu.matmul %488, %473, %cst_172 {dimension_numbers = #tpu.dot_dimension_numbers<[1], [0], [0], [1], [0, 0, 1, 1], [], []>} : vector<8x8xf32>, vector<8x8xf32>, vector<8x8xf32> -> vector<8x8xf32>
    %490 = vector.extract_strided_slice %307 {offsets = [24, 0], sizes = [8, 32], strides = [1, 1]} : vector<32x32xf32> to vector<8x32xf32>
    %cst_173 = arith.constant dense<0.000000e+00> : vector<8x32xf32>
    %491 = tpu.matmul %489, %490, %cst_173 {dimension_numbers = #tpu.dot_dimension_numbers<[1], [0], [0], [1], [0, 0, 1, 1], [], []>} : vector<8x8xf32>, vector<8x32xf32>, vector<8x32xf32> -> vector<8x32xf32>
    %492 = arith.addf %470, %491 : vector<8x32xf32>
    %493 = tpu.concatenate %401, %492 in 0 : vector<8x32xf32>, vector<8x32xf32> -> vector<16x32xf32>
    %c1_174 = arith.constant 1 : index
    %c0_175 = arith.constant 0 : index
    %c0_176 = arith.constant 0 : index
    %494 = vector.load %arg7[%c1_174, %c0_175, %c0_176] : memref<2x1x32xf32, #tpu.memory_space<vmem>>, vector<1x1x32xf32>
    %495 = vector.shape_cast %494 : vector<1x1x32xf32> to vector<1x32xf32>
    %496 = vector.broadcast %495 : vector<1x32xf32> to vector<16x32xf32>
    %497 = arith.addf %493, %496 : vector<16x32xf32>
    %498 = arith.addf %301, %497 : vector<16x32xf32>
    %c1_177 = arith.constant 1 : index
    %c0_178 = arith.constant 0 : index
    %c0_179 = arith.constant 0 : index
    %499 = vector.load %arg8[%c1_177, %c0_178, %c0_179] : memref<2x1x32xf32, #tpu.memory_space<vmem>>, vector<1x1x32xf32>
    %500 = vector.shape_cast %499 : vector<1x1x32xf32> to vector<1x32xf32>
    %c1_180 = arith.constant 1 : index
    %c0_181 = arith.constant 0 : index
    %c0_182 = arith.constant 0 : index
    %501 = vector.load %arg9[%c1_180, %c0_181, %c0_182] : memref<2x1x32xf32, #tpu.memory_space<vmem>>, vector<1x1x32xf32>
    %502 = vector.shape_cast %501 : vector<1x1x32xf32> to vector<1x32xf32>
    %cst_183 = arith.constant dense<0.000000e+00> : vector<16xf32>
    %503 = vector.multi_reduction <add>, %498, %cst_183 [1] : vector<16x32xf32> to vector<16xf32>
    %504 = vector.shape_cast %503 : vector<16xf32> to vector<16x1xf32>
    %cst_184 = arith.constant 3.200000e+01 : f32
    %505 = vector.broadcast %cst_184 : f32 to vector<16x1xf32>
    %506 = arith.divf %504, %505 : vector<16x1xf32>
    %507 = vector.broadcast %506 : vector<16x1xf32> to vector<16x32xf32>
    %508 = arith.subf %498, %507 : vector<16x32xf32>
    %509 = arith.mulf %508, %508 : vector<16x32xf32>
    %cst_185 = arith.constant dense<0.000000e+00> : vector<16xf32>
    %510 = vector.multi_reduction <add>, %509, %cst_185 [1] : vector<16x32xf32> to vector<16xf32>
    %511 = vector.shape_cast %510 : vector<16xf32> to vector<16x1xf32>
    %cst_186 = arith.constant 3.200000e+01 : f32
    %512 = vector.broadcast %cst_186 : f32 to vector<16x1xf32>
    %513 = arith.divf %511, %512 : vector<16x1xf32>
    %514 = vector.broadcast %506 : vector<16x1xf32> to vector<16x32xf32>
    %515 = arith.subf %498, %514 : vector<16x32xf32>
    %cst_187 = arith.constant 9.99999996E-13 : f32
    %516 = vector.broadcast %cst_187 : f32 to vector<16x1xf32>
    %517 = arith.addf %513, %516 : vector<16x1xf32>
    %518 = math.rsqrt %517 : vector<16x1xf32>
    %519 = vector.broadcast %518 : vector<16x1xf32> to vector<16x32xf32>
    %520 = arith.mulf %515, %519 : vector<16x32xf32>
    %521 = vector.broadcast %500 : vector<1x32xf32> to vector<16x32xf32>
    %522 = arith.mulf %520, %521 : vector<16x32xf32>
    %523 = vector.broadcast %502 : vector<1x32xf32> to vector<16x32xf32>
    %524 = arith.addf %522, %523 : vector<16x32xf32>
    %c1_188 = arith.constant 1 : index
    %c0_189 = arith.constant 0 : index
    %c0_190 = arith.constant 0 : index
    %525 = vector.load %arg10[%c1_188, %c0_189, %c0_190] : memref<2x32x64xf32, #tpu.memory_space<vmem>>, vector<1x32x64xf32>
    %526 = vector.shape_cast %525 : vector<1x32x64xf32> to vector<32x64xf32>
    %cst_191 = arith.constant dense<0.000000e+00> : vector<16x64xf32>
    %527 = tpu.matmul %524, %526, %cst_191 {dimension_numbers = #tpu.dot_dimension_numbers<[1], [0], [0], [1], [0, 0, 1, 1], [], []>} : vector<16x32xf32>, vector<32x64xf32>, vector<16x64xf32> -> vector<16x64xf32>
    %c1_192 = arith.constant 1 : index
    %c0_193 = arith.constant 0 : index
    %c0_194 = arith.constant 0 : index
    %528 = vector.load %arg11[%c1_192, %c0_193, %c0_194] : memref<2x1x64xf32, #tpu.memory_space<vmem>>, vector<1x1x64xf32>
    %529 = vector.shape_cast %528 : vector<1x1x64xf32> to vector<1x64xf32>
    %530 = vector.broadcast %529 : vector<1x64xf32> to vector<16x64xf32>
    %531 = arith.addf %527, %530 : vector<16x64xf32>
    %cst_195 = arith.constant 5.000000e-01 : f32
    %532 = vector.broadcast %cst_195 : f32 to vector<16x64xf32>
    %533 = arith.mulf %532, %531 : vector<16x64xf32>
    %cst_196 = arith.constant 0.707106769 : f32
    %534 = vector.broadcast %cst_196 : f32 to vector<16x64xf32>
    %535 = arith.mulf %531, %534 : vector<16x64xf32>
    %536 = math.erf %535 : vector<16x64xf32>
    %cst_197 = arith.constant 1.000000e+00 : f32
    %537 = vector.broadcast %cst_197 : f32 to vector<16x64xf32>
    %538 = arith.addf %537, %536 : vector<16x64xf32>
    %539 = arith.mulf %533, %538 : vector<16x64xf32>
    %c1_198 = arith.constant 1 : index
    %c0_199 = arith.constant 0 : index
    %c0_200 = arith.constant 0 : index
    %540 = vector.load %arg12[%c1_198, %c0_199, %c0_200] : memref<2x64x32xf32, #tpu.memory_space<vmem>>, vector<1x64x32xf32>
    %541 = vector.shape_cast %540 : vector<1x64x32xf32> to vector<64x32xf32>
    %cst_201 = arith.constant dense<0.000000e+00> : vector<16x32xf32>
    %542 = tpu.matmul %539, %541, %cst_201 {dimension_numbers = #tpu.dot_dimension_numbers<[1], [0], [0], [1], [0, 0, 1, 1], [], []>} : vector<16x64xf32>, vector<64x32xf32>, vector<16x32xf32> -> vector<16x32xf32>
    %c1_202 = arith.constant 1 : index
    %c0_203 = arith.constant 0 : index
    %c0_204 = arith.constant 0 : index
    %543 = vector.load %arg13[%c1_202, %c0_203, %c0_204] : memref<2x1x32xf32, #tpu.memory_space<vmem>>, vector<1x1x32xf32>
    %544 = vector.shape_cast %543 : vector<1x1x32xf32> to vector<1x32xf32>
    %545 = vector.broadcast %544 : vector<1x32xf32> to vector<16x32xf32>
    %546 = arith.addf %542, %545 : vector<16x32xf32>
    %547 = arith.addf %524, %546 : vector<16x32xf32>
    %c1_205 = arith.constant 1 : index
    %c0_206 = arith.constant 0 : index
    %c0_207 = arith.constant 0 : index
    %548 = vector.load %arg14[%c1_205, %c0_206, %c0_207] : memref<2x1x32xf32, #tpu.memory_space<vmem>>, vector<1x1x32xf32>
    %549 = vector.shape_cast %548 : vector<1x1x32xf32> to vector<1x32xf32>
    %c1_208 = arith.constant 1 : index
    %c0_209 = arith.constant 0 : index
    %c0_210 = arith.constant 0 : index
    %550 = vector.load %arg15[%c1_208, %c0_209, %c0_210] : memref<2x1x32xf32, #tpu.memory_space<vmem>>, vector<1x1x32xf32>
    %551 = vector.shape_cast %550 : vector<1x1x32xf32> to vector<1x32xf32>
    %cst_211 = arith.constant dense<0.000000e+00> : vector<16xf32>
    %552 = vector.multi_reduction <add>, %547, %cst_211 [1] : vector<16x32xf32> to vector<16xf32>
    %553 = vector.shape_cast %552 : vector<16xf32> to vector<16x1xf32>
    %cst_212 = arith.constant 3.200000e+01 : f32
    %554 = vector.broadcast %cst_212 : f32 to vector<16x1xf32>
    %555 = arith.divf %553, %554 : vector<16x1xf32>
    %556 = vector.broadcast %555 : vector<16x1xf32> to vector<16x32xf32>
    %557 = arith.subf %547, %556 : vector<16x32xf32>
    %558 = arith.mulf %557, %557 : vector<16x32xf32>
    %cst_213 = arith.constant dense<0.000000e+00> : vector<16xf32>
    %559 = vector.multi_reduction <add>, %558, %cst_213 [1] : vector<16x32xf32> to vector<16xf32>
    %560 = vector.shape_cast %559 : vector<16xf32> to vector<16x1xf32>
    %cst_214 = arith.constant 3.200000e+01 : f32
    %561 = vector.broadcast %cst_214 : f32 to vector<16x1xf32>
    %562 = arith.divf %560, %561 : vector<16x1xf32>
    %563 = vector.broadcast %555 : vector<16x1xf32> to vector<16x32xf32>
    %564 = arith.subf %547, %563 : vector<16x32xf32>
    %cst_215 = arith.constant 9.99999996E-13 : f32
    %565 = vector.broadcast %cst_215 : f32 to vector<16x1xf32>
    %566 = arith.addf %562, %565 : vector<16x1xf32>
    %567 = math.rsqrt %566 : vector<16x1xf32>
    %568 = vector.broadcast %567 : vector<16x1xf32> to vector<16x32xf32>
    %569 = arith.mulf %564, %568 : vector<16x32xf32>
    %570 = vector.broadcast %549 : vector<1x32xf32> to vector<16x32xf32>
    %571 = arith.mulf %569, %570 : vector<16x32xf32>
    %572 = vector.broadcast %551 : vector<1x32xf32> to vector<16x32xf32>
    %573 = arith.addf %571, %572 : vector<16x32xf32>
    %574 = tpu.iota {dimensions = array<i32: 1>} : vector<2x16xi32>
    %575 = tpu.iota {dimensions = array<i32: 0>} : vector<2x16xi32>
    %c8_i32 = arith.constant 8 : i32
    %576 = vector.broadcast %c8_i32 : i32 to vector<2x16xi32>
    %577 = arith.muli %575, %576 : vector<2x16xi32>
    %578 = arith.cmpi eq, %574, %577 : vector<2x16xi32>
    %cst_216 = arith.constant 1.000000e+00 : f32
    %cst_217 = arith.constant 0.000000e+00 : f32
    %579 = vector.broadcast %cst_216 : f32 to vector<2x16xf32>
    %580 = vector.broadcast %cst_217 : f32 to vector<2x16xf32>
    %581 = arith.select %578, %579, %580 : vector<2x16xi1>, vector<2x16xf32>
    %cst_218 = arith.constant dense<0.000000e+00> : vector<2x32xf32>
    %582 = tpu.matmul %581, %573, %cst_218 {dimension_numbers = #tpu.dot_dimension_numbers<[1], [0], [0], [1], [0, 0, 1, 1], [], []>} : vector<2x16xf32>, vector<16x32xf32>, vector<2x32xf32> -> vector<2x32xf32>
    %c0_219 = arith.constant 0 : index
    %c0_220 = arith.constant 0 : index
    %583 = vector.load %arg16[%c0_219, %c0_220] : memref<32x32xf32, #tpu.memory_space<vmem>>, vector<32x32xf32>
    %cst_221 = arith.constant dense<0.000000e+00> : vector<2x32xf32>
    %584 = tpu.matmul %582, %583, %cst_221 {dimension_numbers = #tpu.dot_dimension_numbers<[1], [0], [0], [1], [0, 0, 1, 1], [], []>} : vector<2x32xf32>, vector<32x32xf32>, vector<2x32xf32> -> vector<2x32xf32>
    %c0_222 = arith.constant 0 : index
    %c0_223 = arith.constant 0 : index
    %585 = vector.load %arg17[%c0_222, %c0_223] : memref<1x32xf32, #tpu.memory_space<vmem>>, vector<1x32xf32>
    %586 = vector.broadcast %585 : vector<1x32xf32> to vector<2x32xf32>
    %587 = arith.addf %584, %586 : vector<2x32xf32>
    %588 = math.tanh %587 : vector<2x32xf32>
    %c0_224 = arith.constant 0 : index
    %c0_225 = arith.constant 0 : index
    %589 = vector.load %arg18[%c0_224, %c0_225] : memref<32x4xf32, #tpu.memory_space<vmem>>, vector<32x4xf32>
    %cst_226 = arith.constant dense<0.000000e+00> : vector<2x4xf32>
    %590 = tpu.matmul %588, %589, %cst_226 {dimension_numbers = #tpu.dot_dimension_numbers<[1], [0], [0], [1], [0, 0, 1, 1], [], []>} : vector<2x32xf32>, vector<32x4xf32>, vector<2x4xf32> -> vector<2x4xf32>
    %c0_227 = arith.constant 0 : index
    %c0_228 = arith.constant 0 : index
    %591 = vector.load %arg19[%c0_227, %c0_228] : memref<1x4xf32, #tpu.memory_space<vmem>>, vector<1x4xf32>
    %592 = vector.broadcast %591 : vector<1x4xf32> to vector<2x4xf32>
    %593 = arith.addf %590, %592 : vector<2x4xf32>
    %c0_229 = arith.constant 0 : index
    %c0_230 = arith.constant 0 : index
    %594 = vector.load %arg20[%c0_229, %c0_230] : memref<2x4xf32, #tpu.memory_space<vmem>>, vector<2x4xf32>
    tpu.vector_store %arg20[%c0_229, %c0_230], %593 {strides = array<i32>} : memref<2x4xf32, #tpu.memory_space<vmem>>, vector<2x4xf32>,
    return
  }
}

</mosaic_0001>

<llo_original>
// kernel: news_classifier_forward.1
$region0: #{news_classifier_forward.1}
  #allocation0 [shape = 'u32[]', space=smem, size = 0x4, offset = 0x4, fixed_abs, tag = 'smem constant byte address 0x4 - core index']
  #allocation1 [shape = 'u32[144,128]{1,0:T(1,128)}', space=vmem, size = 0x12000, scoped, tag = 'internal scratch']
  %s0 = inlined_call_operand.vmem [shape: f32[16,32], index: 0, kind: input, shape index: {}]
  %s1 = inlined_call_operand.vmem [shape: f32[2,8], index: 1, kind: input, shape index: {}]
  %s2 = inlined_call_operand.vmem [shape: f32[1,32], index: 2, kind: input, shape index: {}]
  %s3 = inlined_call_operand.vmem [shape: f32[1,32], index: 3, kind: input, shape index: {}]
  %s4 = inlined_call_operand.vmem [shape: f32[2,32,96], index: 4, kind: input, shape index: {}]
  %s5 = inlined_call_operand.vmem [shape: f32[2,1,96], index: 5, kind: input, shape index: {}]
  %s6 = inlined_call_operand.vmem [shape: f32[2,32,32], index: 6, kind: input, shape index: {}]
  %s7 = inlined_call_operand.vmem [shape: f32[2,1,32], index: 7, kind: input, shape index: {}]
  %s8 = inlined_call_operand.vmem [shape: f32[2,1,32], index: 8, kind: input, shape index: {}]
  %s9 = inlined_call_operand.vmem [shape: f32[2,1,32], index: 9, kind: input, shape index: {}]
  %s10 = inlined_call_operand.vmem [shape: f32[2,32,64], index: 10, kind: input, shape index: {}]
  %s11 = inlined_call_operand.vmem [shape: f32[2,1,64], index: 11, kind: input, shape index: {}]
  %s12 = inlined_call_operand.vmem [shape: f32[2,64,32], index: 12, kind: input, shape index: {}]
  %s13 = inlined_call_operand.vmem [shape: f32[2,1,32], index: 13, kind: input, shape index: {}]
  %s14 = inlined_call_operand.vmem [shape: f32[2,1,32], index: 14, kind: input, shape index: {}]
  %s15 = inlined_call_operand.vmem [shape: f32[2,1,32], index: 15, kind: input, shape index: {}]
  %s16 = inlined_call_operand.vmem [shape: f32[32,32], index: 16, kind: input, shape index: {}]
  %s17 = inlined_call_operand.vmem [shape: f32[1,32], index: 17, kind: input, shape index: {}]
  %s18 = inlined_call_operand.vmem [shape: f32[32,4], index: 18, kind: input, shape index: {}]
  %s19 = inlined_call_operand.vmem [shape: f32[1,4], index: 19, kind: input, shape index: {}]
  %s20 = inlined_call_operand.hbm [shape: f32[2,4], index: 20, kind: output, shape index: {}]
  %s21 = sld [smem:[#allocation0]]
  $region90: #{news_classifier_forward.1} parent=0
    _
  %s23 = ssub.s32 1, %s21
  %s24 = scalar_select 0, %s23, %s21
  $region1: #{news_classifier_forward.1} parent=0
    #allocation2 [shape = 'u8[1024]{0}', space=vmem, size = 0x400, scoped, tag = 'output window, operand 0, single buffered']
    #allocation3 [shape = 's32[1]{0}', space=sflag, size = 0x4, scoped, tag = 'scoped memory for news_classifier_forward.1']
    %25 = vsyncpa [#allocation3], 0
    // Predicated region
    $region2: #{news_classifier_forward.1} parent=1 // pred_check
      _
    $region3: #{news_classifier_forward.1} parent=1 // pred_check_branch
      %27 = sbr.rel (0) target = $region5
    $region4: #{news_classifier_forward.1} parent=1 // pred_region
      _
    $region5: #{news_classifier_forward.1} parent=1 // pred_fallthru
      _
    // Predicated region
    $region6: #{news_classifier_forward.1} parent=1 // pred_check
      _
    $region7: #{news_classifier_forward.1} parent=1 // pred_check_branch
      %29 = sbr.rel (0) target = $region9
    $region8: #{news_classifier_forward.1} parent=1 // pred_region
      _
    $region9: #{news_classifier_forward.1} parent=1 // pred_fallthru
      _
    // Predicated region
    $region10: #{news_classifier_forward.1} parent=1 // pred_check
      _
    $region11: #{news_classifier_forward.1} parent=1 // pred_check_branch
      %31 = sbr.rel (0) target = $region13
    $region12: #{news_classifier_forward.1} parent=1 // pred_region
      _
    $region13: #{news_classifier_forward.1} parent=1 // pred_fallthru
      _
    // Predicated region
    $region14: #{news_classifier_forward.1} parent=1 // pred_check
      _
    $region15: #{news_classifier_forward.1} parent=1 // pred_check_branch
      %33 = sbr.rel (0) target = $region17
    $region16: #{news_classifier_forward.1} parent=1 // pred_region
      _
    $region17: #{news_classifier_forward.1} parent=1 // pred_fallthru
      _
    // Predicated region
    $region18: #{news_classifier_forward.1} parent=1 // pred_check
      _
    $region19: #{news_classifier_forward.1} parent=1 // pred_check_branch
      %35 = sbr.rel (0) target = $region21
    $region20: #{news_classifier_forward.1} parent=1 // pred_region
      _
    $region21: #{news_classifier_forward.1} parent=1 // pred_fallthru
      _
    // Predicated region
    $region22: #{news_classifier_forward.1} parent=1 // pred_check
      _
    $region23: #{news_classifier_forward.1} parent=1 // pred_check_branch
      %37 = sbr.rel (0) target = $region25
    $region24: #{news_classifier_forward.1} parent=1 // pred_region
      _
    $region25: #{news_classifier_forward.1} parent=1 // pred_fallthru
      _
    // Predicated region
    $region26: #{news_classifier_forward.1} parent=1 // pred_check
      _
    $region27: #{news_classifier_forward.1} parent=1 // pred_check_branch
      %39 = sbr.rel (0) target = $region29
    $region28: #{news_classifier_forward.1} parent=1 // pred_region
      _
    $region29: #{news_classifier_forward.1} parent=1 // pred_fallthru
      _
    // Predicated region
    $region30: #{news_classifier_forward.1} parent=1 // pred_check
      _
    $region31: #{news_classifier_forward.1} parent=1 // pred_check_branch
      %41 = sbr.rel (0) target = $region33
    $region32: #{news_classifier_forward.1} parent=1 // pred_region
      _
    $region33: #{news_classifier_forward.1} parent=1 // pred_fallthru
      _
    // Predicated region
    $region34: #{news_classifier_forward.1} parent=1 // pred_check
      _
    $region35: #{news_classifier_forward.1} parent=1 // pred_check_branch
      %43 = sbr.rel (0) target = $region37
    $region36: #{news_classifier_forward.1} parent=1 // pred_region
      _
    $region37: #{news_classifier_forward.1} parent=1 // pred_fallthru
      _
    // Predicated region
    $region38: #{news_classifier_forward.1} parent=1 // pred_check
      _
    $region39: #{news_classifier_forward.1} parent=1 // pred_check_branch
      %45 = sbr.rel (0) target = $region41
    $region40: #{news_classifier_forward.1} parent=1 // pred_region
      _
    $region41: #{news_classifier_forward.1} parent=1 // pred_fallthru
      _
    // Predicated region
    $region42: #{news_classifier_forward.1} parent=1 // pred_check
      _
    $region43: #{news_classifier_forward.1} parent=1 // pred_check_branch
      %47 = sbr.rel (0) target = $region45
    $region44: #{news_classifier_forward.1} parent=1 // pred_region
      _
    $region45: #{news_classifier_forward.1} parent=1 // pred_fallthru
      _
    // Predicated region
    $region46: #{news_classifier_forward.1} parent=1 // pred_check
      _
    $region47: #{news_classifier_forward.1} parent=1 // pred_check_branch
      %49 = sbr.rel (0) target = $region49
    $region48: #{news_classifier_forward.1} parent=1 // pred_region
      _
    $region49: #{news_classifier_forward.1} parent=1 // pred_fallthru
      _
    // Predicated region
    $region50: #{news_classifier_forward.1} parent=1 // pred_check
      _
    $region51: #{news_classifier_forward.1} parent=1 // pred_check_branch
      %51 = sbr.rel (0) target = $region53
    $region52: #{news_classifier_forward.1} parent=1 // pred_region
      _
    $region53: #{news_classifier_forward.1} parent=1 // pred_fallthru
      _
    // Predicated region
    $region54: #{news_classifier_forward.1} parent=1 // pred_check
      _
    $region55: #{news_classifier_forward.1} parent=1 // pred_check_branch
      %53 = sbr.rel (0) target = $region57
    $region56: #{news_classifier_forward.1} parent=1 // pred_region
      _
    $region57: #{news_classifier_forward.1} parent=1 // pred_fallthru
      _
    // Predicated region
    $region58: #{news_classifier_forward.1} parent=1 // pred_check
      _
    $region59: #{news_classifier_forward.1} parent=1 // pred_check_branch
      %55 = sbr.rel (0) target = $region61
    $region60: #{news_classifier_forward.1} parent=1 // pred_region
      _
    $region61: #{news_classifier_forward.1} parent=1 // pred_fallthru
      _
    // Predicated region
    $region62: #{news_classifier_forward.1} parent=1 // pred_check
      _
    $region63: #{news_classifier_forward.1} parent=1 // pred_check_branch
      %57 = sbr.rel (0) target = $region65
    $region64: #{news_classifier_forward.1} parent=1 // pred_region
      _
    $region65: #{news_classifier_forward.1} parent=1 // pred_fallthru
      _
    // Predicated region
    $region66: #{news_classifier_forward.1} parent=1 // pred_check
      _
    $region67: #{news_classifier_forward.1} parent=1 // pred_check_branch
      %59 = sbr.rel (0) target = $region69
    $region68: #{news_classifier_forward.1} parent=1 // pred_region
      _
    $region69: #{news_classifier_forward.1} parent=1 // pred_fallthru
      _
    // Predicated region
    $region70: #{news_classifier_forward.1} parent=1 // pred_check
      _
    $region71: #{news_classifier_forward.1} parent=1 // pred_check_branch
      %61 = sbr.rel (0) target = $region73
    $region72: #{news_classifier_forward.1} parent=1 // pred_region
      _
    $region73: #{news_classifier_forward.1} parent=1 // pred_fallthru
      _
    // Predicated region
    $region74: #{news_classifier_forward.1} parent=1 // pred_check
      _
    $region75: #{news_classifier_forward.1} parent=1 // pred_check_branch
      %63 = sbr.rel (0) target = $region77
    $region76: #{news_classifier_forward.1} parent=1 // pred_region
      _
    $region77: #{news_classifier_forward.1} parent=1 // pred_fallthru
      _
    // Predicated region
    $region78: #{news_classifier_forward.1} parent=1 // pred_check
      _
    $region79: #{news_classifier_forward.1} parent=1 // pred_check_branch
      %65 = sbr.rel (0) target = $region81
    $region80: #{news_classifier_forward.1} parent=1 // pred_region
      _
    $region81: #{news_classifier_forward.1} parent=1 // pred_fallthru
      _
    %v66 = vld [vmem:[%s0] sm:$0xff]
    %v67 = vld [vmem:[%s0 + $0x8] sm:$0xff]
    %v68 = vld [vmem:[%s2] sm:$0x1]
    %v69 = vld [vmem:[%s3] sm:$0x1]
    %vm70 = vcmask 261120
    %v71 = vsel %vm70, %v66, 0.0
    %72 = vadd.xlane.f32.xlu0 %v71
    %v73 = vpop.xlane.xlu0 %72
    %v74 = vsel %vm70, %v67, 0.0
    %75 = vadd.xlane.f32.xlu0 %v74
    %v76 = vpop.xlane.xlu0 %75
    %v77 = vrcp.pop 32.0
    %v78 = vmul.f32 %v73, %v77
    %v79 = vmul.f32 %v76, %v77
    %v80 = vsub.f32 %v66, %v78
    %v81 = vsub.f32 %v67, %v79
    %v82 = vmul.f32 %v80, %v80
    %v83 = vmul.f32 %v81, %v81
    %v84 = vsel %vm70, %v82, 0.0
    %85 = vadd.xlane.f32.xlu0 %v84
    %v86 = vpop.xlane.xlu0 %85
    %v87 = vsel %vm70, %v83, 0.0
    %88 = vadd.xlane.f32.xlu0 %v87
    %v89 = vpop.xlane.xlu0 %88
    %v90 = vmul.f32 %v86, %v77
    %v91 = vmul.f32 %v89, %v77
    %v92 = vadd.f32 %v90, 1e-12
    %v93 = vadd.f32 %v91, 1e-12
    %v94 = vrsqrt.pop %v92
    %v95 = vrsqrt.pop %v93
    %v96 = vmul.f32 %v80, %v94
    %v97 = vmul.f32 %v81, %v95
    %v99 = vlaneseq
    %v100 = vshrl.u32 %v99, 7
    %v101 = vsub.s32 0, %v100
    %v102 = vrot.slane %v68, %v101
    %v104 = vmul.f32 %v96, %v102
    %v105 = vmul.f32 %v97, %v102
    %v107 = vlaneseq
    %v108 = vshrl.u32 %v107, 7
    %v109 = vsub.s32 0, %v108
    %v110 = vrot.slane %v69, %v109
    %v112 = vadd.f32 %v104, %v110
    %v113 = vadd.f32 %v105, %v110
    %v114 = vld [vmem:[%s1] sm:$0x3]
    %v115 = vsub.f32 %v114, 1.0
    %v116 = vmul.f32 %v115, 1e+09
    %v117 = vld [vmem:[%s4] sm:$0xff]
    %v118 = vld [vmem:[%s4 + $0x8] sm:$0xff]
    %v119 = vld [vmem:[%s4 + $0x10] sm:$0xff]
    %v120 = vld [vmem:[%s4 + $0x18] sm:$0xff]
    %v121 = vld [vmem:[%s5] sm:$0x1]
    %v122 = vld [vmem:[%s6] sm:$0xff]
    %v123 = vld [vmem:[%s6 + $0x8] sm:$0xff]
    %v124 = vld [vmem:[%s6 + $0x10] sm:$0xff]
    %v125 = vld [vmem:[%s6 + $0x18] sm:$0xff]
    %v127 = vlaneseq
    %v128 = vshrl.u32 %v127, 7
    %v129 = vsub.s32 0, %v128
    %v130 = vrot.slane %v121, %v129
    %v133 = vsel %vm70, %v112, 0
    %v136 = vsel %vm70, %v113, 0
    %138 = vmatprep.subr.mxu0 0.0
    %139 = vmatpush1.msra.mxu0 %v117
    %140 = vmatprep.subr.mxu0 0.0
    %141 = vmatpush1.msra.mxu0 %v118
    %142 = vmatprep.subr.mxu0 0.0
    %143 = vmatpush1.msra.mxu0 %v119
    %144 = vmatprep.subr.mxu0 0.0
    %145 = vmatpush1.msra.mxu0 %v120
    %146 = vmatprep.subr.mxu0 0.0
    %147 = vmatpush1.msra.mxu0 0.0
    %148 = vmatprep.subr.mxu0 0.0
    %149 = vmatpush1.msra.mxu0 0.0
    %150 = vmatprep.subr.mxu0 0.0
    %151 = vmatpush1.msra.mxu0 0.0
    %152 = vmatprep.subr.mxu0 0.0
    %153 = vmatpush1.msra.mxu0 0.0
    %154 = vmatprep.subr.mxu0 0.0
    %155 = vmatpush1.msra.mxu0 0.0
    %156 = vmatprep.subr.mxu0 0.0
    %157 = vmatpush1.msra.mxu0 0.0
    %158 = vmatprep.subr.mxu0 0.0
    %159 = vmatpush1.msra.mxu0 0.0
    %160 = vmatprep.subr.mxu0 0.0
    %161 = vmatpush1.msra.mxu0 0.0
    %162 = vmatprep.subr.mxu0 0.0
    %163 = vmatpush1.msra.mxu0 0.0
    %164 = vmatprep.subr.mxu0 0.0
    %165 = vmatpush1.msra.mxu0 0.0
    %166 = vmatprep.subr.mxu0 0.0
    %167 = vmatpush1.msra.mxu0 0.0
    %168 = vmatprep.subr.mxu0 0.0
    %169 = vmatpush1.msra.mxu0 0.0
    %170 = vmatprep.subr.mxu0 0.0
    %171 = vmatpush1.msra.mxu0 0.0
    %172 = vmatprep.subr.mxu0 0.0
    %173 = vmatpush1.msra.mxu0 0.0
    %174 = vmatprep.subr.mxu0 0.0
    %175 = vmatpush1.msra.mxu0 0.0
    %176 = vmatprep.subr.mxu0 0.0
    %177 = vmatpush1.msra.mxu0 0.0
    %178 = vmatprep.subr.mxu0 0.0
    %179 = vmatpush1.msra.mxu0 0.0
    %180 = vmatprep.subr.mxu0 0.0
    %181 = vmatpush1.msra.mxu0 0.0
    %182 = vmatprep.subr.mxu0 0.0
    %183 = vmatpush1.msra.mxu0 0.0
    %184 = vmatprep.subr.mxu0 0.0
    %185 = vmatpush1.msra.mxu0 0.0
    %186 = vmatprep.subr.mxu0 0.0
    %187 = vmatpush1.msra.mxu0 0.0
    %188 = vmatprep.subr.mxu0 0.0
    %189 = vmatpush1.msra.mxu0 0.0
    %190 = vmatprep.subr.mxu0 0.0
    %191 = vmatpush1.msra.mxu0 0.0
    %192 = vmatprep.subr.mxu0 0.0
    %193 = vmatpush1.msra.mxu0 0.0
    %194 = vmatprep.subr.mxu0 0.0
    %195 = vmatpush1.msra.mxu0 0.0
    %196 = vmatprep.subr.mxu0 0.0
    %197 = vmatpush1.msra.mxu0 0.0
    %198 = vmatprep.subr.mxu0 0.0
    %199 = vmatpush1.msra.mxu0 0.0
    %200 = vmatprep.subr.mxu0 0.0
    %201 = vmatpush1.msra.mxu0 0.0
    %202 = vmatprep.mubr.f32.mxu0 0.0
    %203 = vmatmul.mubr.f32.gmra.mrb[0].mxu0 %v133
    %v204 = vpop.f32.mrb[0].mxu0
    %v205 = vadd.f32 %v130, %v204
    %v206 = vpop.f32.mrb[0].mxu0
    %207 = vmatprep.mubr.f32.mxu0 0.0
    %208 = vmatmul.mubr.f32.gmra.mrb[0].mxu0 %v136
    %v209 = vpop.f32.mrb[0].mxu0
    %v210 = vadd.f32 %v130, %v209
    %v211 = vpop.f32.mrb[0].mxu0
    %212 = vdwg.mxu0
    %214 = vrot.lane.b32.xlu0 %v205, 96
    %v215 = vpop.permute.xlu0 %214
    %vm216 = vcmask 64512
    %v217 = vsel %vm216, %v205, 0
    %v219 = vsel %vm216, %v215, 0
    %221 = vmatprep.subr.mxu0 0.0
    %222 = vmatpush1.xpose.msra.mxu0 %v219
    %223 = vmatprep.subr.mxu0 0.0
    %224 = vmatpush1.xpose.msra.mxu0 0.0
    %225 = vmatprep.subr.mxu0 0.0
    %226 = vmatpush1.xpose.msra.mxu0 0.0
    %227 = vmatprep.subr.mxu0 0.0
    %228 = vmatpush1.xpose.msra.mxu0 0.0
    %229 = vmatprep.subr.mxu0 0.0
    %230 = vmatpush1.xpose.msra.mxu0 0.0
    %231 = vmatprep.subr.mxu0 0.0
    %232 = vmatpush1.xpose.msra.mxu0 0.0
    %233 = vmatprep.subr.mxu0 0.0
    %234 = vmatpush1.xpose.msra.mxu0 0.0
    %235 = vmatprep.subr.mxu0 0.0
    %236 = vmatpush1.xpose.msra.mxu0 0.0
    %237 = vmatprep.subr.mxu0 0.0
    %238 = vmatpush1.xpose.msra.mxu0 0.0
    %239 = vmatprep.subr.mxu0 0.0
    %240 = vmatpush1.xpose.msra.mxu0 0.0
    %241 = vmatprep.subr.mxu0 0.0
    %242 = vmatpush1.xpose.msra.mxu0 0.0
    %243 = vmatprep.subr.mxu0 0.0
    %244 = vmatpush1.xpose.msra.mxu0 0.0
    %245 = vmatprep.subr.mxu0 0.0
    %246 = vmatpush1.xpose.msra.mxu0 0.0
    %247 = vmatprep.subr.mxu0 0.0
    %248 = vmatpush1.xpose.msra.mxu0 0.0
    %249 = vmatprep.subr.mxu0 0.0
    %250 = vmatpush1.xpose.msra.mxu0 0.0
    %251 = vmatprep.subr.mxu0 0.0
    %252 = vmatpush1.xpose.msra.mxu0 0.0
    %253 = vmatprep.subr.mxu0 0.0
    %254 = vmatpush1.xpose.msra.mxu0 0.0
    %255 = vmatprep.subr.mxu0 0.0
    %256 = vmatpush1.xpose.msra.mxu0 0.0
    %257 = vmatprep.subr.mxu0 0.0
    %258 = vmatpush1.xpose.msra.mxu0 0.0
    %259 = vmatprep.subr.mxu0 0.0
    %260 = vmatpush1.xpose.msra.mxu0 0.0
    %261 = vmatprep.subr.mxu0 0.0
    %262 = vmatpush1.xpose.msra.mxu0 0.0
    %263 = vmatprep.subr.mxu0 0.0
    %264 = vmatpush1.xpose.msra.mxu0 0.0
    %265 = vmatprep.subr.mxu0 0.0
    %266 = vmatpush1.xpose.msra.mxu0 0.0
    %267 = vmatprep.subr.mxu0 0.0
    %268 = vmatpush1.xpose.msra.mxu0 0.0
    %269 = vmatprep.subr.mxu0 0.0
    %270 = vmatpush1.xpose.msra.mxu0 0.0
    %271 = vmatprep.subr.mxu0 0.0
    %272 = vmatpush1.xpose.msra.mxu0 0.0
    %273 = vmatprep.subr.mxu0 0.0
    %274 = vmatpush1.xpose.msra.mxu0 0.0
    %275 = vmatprep.subr.mxu0 0.0
    %276 = vmatpush1.xpose.msra.mxu0 0.0
    %277 = vmatprep.subr.mxu0 0.0
    %278 = vmatpush1.xpose.msra.mxu0 0.0
    %279 = vmatprep.subr.mxu0 0.0
    %280 = vmatpush1.xpose.msra.mxu0 0.0
    %281 = vmatprep.subr.mxu0 0.0
    %282 = vmatpush1.xpose.msra.mxu0 0.0
    %283 = vmatprep.subr.mxu0 0.0
    %284 = vmatpush1.xpose.msra.mxu0 0.0
    %285 = vmatprep.mubr.f32.mxu0 0.0
    %286 = vmatmul.mubr.f32.gmra.mrb[0].mxu0 %v217
    %v287 = vpop.f32.mrb[0].mxu0
    %v288 = vadd.f32 0.0, %v287
    %v289 = vpop.f32.mrb[0].mxu0
    %290 = vdwg.mxu0
    %v291 = vmul.f32 %v288, 0.35355338
    %v292 = vlaneseq
    %v293 = vshrl.u32 %v292, 7
    %v294 = vsub.s32 0, %v293
    %v295 = vrot.slane %v116, %v294
    %v296 = vadd.f32 %v291, %v295
    %v297 = vsel %vm216, %v296, -inf
    %298 = vmax.xlane.f32.xlu0 %v297
    %v299 = vpop.xlane.xlu0 %298
    %v300 = vsub.f32 %v296, %v299
    %v301 = vmul.f32 %v300, 1.442695
    %v302 = vpow.pop %v301
    %v303 = vsel %vm216, %v302, 0.0
    %304 = vadd.xlane.f32.xlu0 %v303
    %v305 = vpop.xlane.xlu0 %304
    %v306 = vrcp.pop %v305
    %v307 = vmul.f32 %v302, %v306
    %308 = vrot.lane.b32.xlu0 %v205, 64
    %v309 = vpop.permute.xlu0 %308
    %v312 = vsel %vm216, %v307, 0
    %314 = vmatprep.subr.mxu0 0.0
    %315 = vmatpush1.msra.mxu0 %v309
    %316 = vmatprep.subr.mxu0 0.0
    %317 = vmatpush1.msra.mxu0 0.0
    %318 = vmatprep.subr.mxu0 0.0
    %319 = vmatpush1.msra.mxu0 0.0
    %320 = vmatprep.subr.mxu0 0.0
    %321 = vmatpush1.msra.mxu0 0.0
    %322 = vmatprep.subr.mxu0 0.0
    %323 = vmatpush1.msra.mxu0 0.0
    %324 = vmatprep.subr.mxu0 0.0
    %325 = vmatpush1.msra.mxu0 0.0
    %326 = vmatprep.subr.mxu0 0.0
    %327 = vmatpush1.msra.mxu0 0.0
    %328 = vmatprep.subr.mxu0 0.0
    %329 = vmatpush1.msra.mxu0 0.0
    %330 = vmatprep.subr.mxu0 0.0
    %331 = vmatpush1.msra.mxu0 0.0
    %332 = vmatprep.subr.mxu0 0.0
    %333 = vmatpush1.msra.mxu0 0.0
    %334 = vmatprep.subr.mxu0 0.0
    %335 = vmatpush1.msra.mxu0 0.0
    %336 = vmatprep.subr.mxu0 0.0
    %337 = vmatpush1.msra.mxu0 0.0
    %338 = vmatprep.subr.mxu0 0.0
    %339 = vmatpush1.msra.mxu0 0.0
    %340 = vmatprep.subr.mxu0 0.0
    %341 = vmatpush1.msra.mxu0 0.0
    %342 = vmatprep.subr.mxu0 0.0
    %343 = vmatpush1.msra.mxu0 0.0
    %344 = vmatprep.subr.mxu0 0.0
    %345 = vmatpush1.msra.mxu0 0.0
    %346 = vmatprep.subr.mxu0 0.0
    %347 = vmatpush1.msra.mxu0 0.0
    %348 = vmatprep.subr.mxu0 0.0
    %349 = vmatpush1.msra.mxu0 0.0
    %350 = vmatprep.subr.mxu0 0.0
    %351 = vmatpush1.msra.mxu0 0.0
    %352 = vmatprep.subr.mxu0 0.0
    %353 = vmatpush1.msra.mxu0 0.0
    %354 = vmatprep.subr.mxu0 0.0
    %355 = vmatpush1.msra.mxu0 0.0
    %356 = vmatprep.subr.mxu0 0.0
    %357 = vmatpush1.msra.mxu0 0.0
    %358 = vmatprep.subr.mxu0 0.0
    %359 = vmatpush1.msra.mxu0 0.0
    %360 = vmatprep.subr.mxu0 0.0
    %361 = vmatpush1.msra.mxu0 0.0
    %362 = vmatprep.subr.mxu0 0.0
    %363 = vmatpush1.msra.mxu0 0.0
    %364 = vmatprep.subr.mxu0 0.0
    %365 = vmatpush1.msra.mxu0 0.0
    %366 = vmatprep.subr.mxu0 0.0
    %367 = vmatpush1.msra.mxu0 0.0
    %368 = vmatprep.subr.mxu0 0.0
    %369 = vmatpush1.msra.mxu0 0.0
    %370 = vmatprep.subr.mxu0 0.0
    %371 = vmatpush1.msra.mxu0 0.0
    %372 = vmatprep.subr.mxu0 0.0
    %373 = vmatpush1.msra.mxu0 0.0
    %374 = vmatprep.subr.mxu0 0.0
    %375 = vmatpush1.msra.mxu0 0.0
    %376 = vmatprep.subr.mxu0 0.0
    %377 = vmatpush1.msra.mxu0 0.0
    %378 = vmatprep.mubr.f32.mxu0 0.0
    %379 = vmatmul.mubr.f32.gmra.mrb[0].mxu0 %v312
    %v380 = vpop.f32.mrb[0].mxu0
    %v381 = vadd.f32 0.0, %v380
    %v382 = vpop.f32.mrb[0].mxu0
    %383 = vdwg.mxu0
    %384 = vrot.lane.b32.xlu0 %v205, 120
    %v385 = vpop.permute.xlu0 %384
    %386 = vrot.lane.b32.xlu0 %v205, 88
    %v387 = vpop.permute.xlu0 %386
    %v388 = vsel %vm216, %v385, 0
    %v390 = vsel %vm216, %v387, 0
    %392 = vmatprep.subr.mxu0 0.0
    %393 = vmatpush1.xpose.msra.mxu0 %v390
    %394 = vmatprep.subr.mxu0 0.0
    %395 = vmatpush1.xpose.msra.mxu0 0.0
    %396 = vmatprep.subr.mxu0 0.0
    %397 = vmatpush1.xpose.msra.mxu0 0.0
    %398 = vmatprep.subr.mxu0 0.0
    %399 = vmatpush1.xpose.msra.mxu0 0.0
    %400 = vmatprep.subr.mxu0 0.0
    %401 = vmatpush1.xpose.msra.mxu0 0.0
    %402 = vmatprep.subr.mxu0 0.0
    %403 = vmatpush1.xpose.msra.mxu0 0.0
    %404 = vmatprep.subr.mxu0 0.0
    %405 = vmatpush1.xpose.msra.mxu0 0.0
    %406 = vmatprep.subr.mxu0 0.0
    %407 = vmatpush1.xpose.msra.mxu0 0.0
    %408 = vmatprep.subr.mxu0 0.0
    %409 = vmatpush1.xpose.msra.mxu0 0.0
    %410 = vmatprep.subr.mxu0 0.0
    %411 = vmatpush1.xpose.msra.mxu0 0.0
    %412 = vmatprep.subr.mxu0 0.0
    %413 = vmatpush1.xpose.msra.mxu0 0.0
    %414 = vmatprep.subr.mxu0 0.0
    %415 = vmatpush1.xpose.msra.mxu0 0.0
    %416 = vmatprep.subr.mxu0 0.0
    %417 = vmatpush1.xpose.msra.mxu0 0.0
    %418 = vmatprep.subr.mxu0 0.0
    %419 = vmatpush1.xpose.msra.mxu0 0.0
    %420 = vmatprep.subr.mxu0 0.0
    %421 = vmatpush1.xpose.msra.mxu0 0.0
    %422 = vmatprep.subr.mxu0 0.0
    %423 = vmatpush1.xpose.msra.mxu0 0.0
    %424 = vmatprep.subr.mxu0 0.0
    %425 = vmatpush1.xpose.msra.mxu0 0.0
    %426 = vmatprep.subr.mxu0 0.0
    %427 = vmatpush1.xpose.msra.mxu0 0.0
    %428 = vmatprep.subr.mxu0 0.0
    %429 = vmatpush1.xpose.msra.mxu0 0.0
    %430 = vmatprep.subr.mxu0 0.0
    %431 = vmatpush1.xpose.msra.mxu0 0.0
    %432 = vmatprep.subr.mxu0 0.0
    %433 = vmatpush1.xpose.msra.mxu0 0.0
    %434 = vmatprep.subr.mxu0 0.0
    %435 = vmatpush1.xpose.msra.mxu0 0.0
    %436 = vmatprep.subr.mxu0 0.0
    %437 = vmatpush1.xpose.msra.mxu0 0.0
    %438 = vmatprep.subr.mxu0 0.0
    %439 = vmatpush1.xpose.msra.mxu0 0.0
    %440 = vmatprep.subr.mxu0 0.0
    %441 = vmatpush1.xpose.msra.mxu0 0.0
    %442 = vmatprep.subr.mxu0 0.0
    %443 = vmatpush1.xpose.msra.mxu0 0.0
    %444 = vmatprep.subr.mxu0 0.0
    %445 = vmatpush1.xpose.msra.mxu0 0.0
    %446 = vmatprep.subr.mxu0 0.0
    %447 = vmatpush1.xpose.msra.mxu0 0.0
    %448 = vmatprep.subr.mxu0 0.0
    %449 = vmatpush1.xpose.msra.mxu0 0.0
    %450 = vmatprep.subr.mxu0 0.0
    %451 = vmatpush1.xpose.msra.mxu0 0.0
    %452 = vmatprep.subr.mxu0 0.0
    %453 = vmatpush1.xpose.msra.mxu0 0.0
    %454 = vmatprep.subr.mxu0 0.0
    %455 = vmatpush1.xpose.msra.mxu0 0.0
    %456 = vmatprep.mubr.f32.mxu0 0.0
    %457 = vmatmul.mubr.f32.gmra.mrb[0].mxu0 %v388
    %v458 = vpop.f32.mrb[0].mxu0
    %v459 = vadd.f32 0.0, %v458
    %v460 = vpop.f32.mrb[0].mxu0
    %461 = vdwg.mxu0
    %v462 = vmul.f32 %v459, 0.35355338
    %v463 = vadd.f32 %v462, %v295
    %v464 = vsel %vm216, %v463, -inf
    %465 = vmax.xlane.f32.xlu0 %v464
    %v466 = vpop.xlane.xlu0 %465
    %v467 = vsub.f32 %v463, %v466
    %v468 = vmul.f32 %v467, 1.442695
    %v469 = vpow.pop %v468
    %v470 = vsel %vm216, %v469, 0.0
    %471 = vadd.xlane.f32.xlu0 %v470
    %v472 = vpop.xlane.xlu0 %471
    %v473 = vrcp.pop %v472
    %v474 = vmul.f32 %v469, %v473
    %475 = vrot.lane.b32.xlu0 %v205, 56
    %v476 = vpop.permute.xlu0 %475
    %v479 = vsel %vm216, %v474, 0
    %481 = vmatprep.subr.mxu0 0.0
    %482 = vmatpush1.msra.mxu0 %v476
    %483 = vmatprep.subr.mxu0 0.0
    %484 = vmatpush1.msra.mxu0 0.0
    %485 = vmatprep.subr.mxu0 0.0
    %486 = vmatpush1.msra.mxu0 0.0
    %487 = vmatprep.subr.mxu0 0.0
    %488 = vmatpush1.msra.mxu0 0.0
    %489 = vmatprep.subr.mxu0 0.0
    %490 = vmatpush1.msra.mxu0 0.0
    %491 = vmatprep.subr.mxu0 0.0
    %492 = vmatpush1.msra.mxu0 0.0
    %493 = vmatprep.subr.mxu0 0.0
    %494 = vmatpush1.msra.mxu0 0.0
    %495 = vmatprep.subr.mxu0 0.0
    %496 = vmatpush1.msra.mxu0 0.0
    %497 = vmatprep.subr.mxu0 0.0
    %498 = vmatpush1.msra.mxu0 0.0
    %499 = vmatprep.subr.mxu0 0.0
    %500 = vmatpush1.msra.mxu0 0.0
    %501 = vmatprep.subr.mxu0 0.0
    %502 = vmatpush1.msra.mxu0 0.0
    %503 = vmatprep.subr.mxu0 0.0
    %504 = vmatpush1.msra.mxu0 0.0
    %505 = vmatprep.subr.mxu0 0.0
    %506 = vmatpush1.msra.mxu0 0.0
    %507 = vmatprep.subr.mxu0 0.0
    %508 = vmatpush1.msra.mxu0 0.0
    %509 = vmatprep.subr.mxu0 0.0
    %510 = vmatpush1.msra.mxu0 0.0
    %511 = vmatprep.subr.mxu0 0.0
    %512 = vmatpush1.msra.mxu0 0.0
    %513 = vmatprep.subr.mxu0 0.0
    %514 = vmatpush1.msra.mxu0 0.0
    %515 = vmatprep.subr.mxu0 0.0
    %516 = vmatpush1.msra.mxu0 0.0
    %517 = vmatprep.subr.mxu0 0.0
    %518 = vmatpush1.msra.mxu0 0.0
    %519 = vmatprep.subr.mxu0 0.0
    %520 = vmatpush1.msra.mxu0 0.0
    %521 = vmatprep.subr.mxu0 0.0
    %522 = vmatpush1.msra.mxu0 0.0
    %523 = vmatprep.subr.mxu0 0.0
    %524 = vmatpush1.msra.mxu0 0.0
    %525 = vmatprep.subr.mxu0 0.0
    %526 = vmatpush1.msra.mxu0 0.0
    %527 = vmatprep.subr.mxu0 0.0
    %528 = vmatpush1.msra.mxu0 0.0
    %529 = vmatprep.subr.mxu0 0.0
    %530 = vmatpush1.msra.mxu0 0.0
    %531 = vmatprep.subr.mxu0 0.0
    %532 = vmatpush1.msra.mxu0 0.0
    %533 = vmatprep.subr.mxu0 0.0
    %534 = vmatpush1.msra.mxu0 0.0
    %535 = vmatprep.subr.mxu0 0.0
    %536 = vmatpush1.msra.mxu0 0.0
    %537 = vmatprep.subr.mxu0 0.0
    %538 = vmatpush1.msra.mxu0 0.0
    %539 = vmatprep.subr.mxu0 0.0
    %540 = vmatpush1.msra.mxu0 0.0
    %541 = vmatprep.subr.mxu0 0.0
    %542 = vmatpush1.msra.mxu0 0.0
    %543 = vmatprep.subr.mxu0 0.0
    %544 = vmatpush1.msra.mxu0 0.0
    %545 = vmatprep.mubr.f32.mxu0 0.0
    %546 = vmatmul.mubr.f32.gmra.mrb[0].mxu0 %v479
    %v547 = vpop.f32.mrb[0].mxu0
    %v548 = vadd.f32 0.0, %v547
    %v549 = vpop.f32.mrb[0].mxu0
    %550 = vdwg.mxu0
    %v552 = vsel %vm216, %v548, 0
    %554 = vmatprep.subr.mxu0 0.0
    %555 = vmatpush1.msra.mxu0 %v123
    %556 = vmatprep.subr.mxu0 0.0
    %557 = vmatpush1.msra.mxu0 0.0
    %558 = vmatprep.subr.mxu0 0.0
    %559 = vmatpush1.msra.mxu0 0.0
    %560 = vmatprep.subr.mxu0 0.0
    %561 = vmatpush1.msra.mxu0 0.0
    %562 = vmatprep.subr.mxu0 0.0
    %563 = vmatpush1.msra.mxu0 0.0
    %564 = vmatprep.subr.mxu0 0.0
    %565 = vmatpush1.msra.mxu0 0.0
    %566 = vmatprep.subr.mxu0 0.0
    %567 = vmatpush1.msra.mxu0 0.0
    %568 = vmatprep.subr.mxu0 0.0
    %569 = vmatpush1.msra.mxu0 0.0
    %570 = vmatprep.subr.mxu0 0.0
    %571 = vmatpush1.msra.mxu0 0.0
    %572 = vmatprep.subr.mxu0 0.0
    %573 = vmatpush1.msra.mxu0 0.0
    %574 = vmatprep.subr.mxu0 0.0
    %575 = vmatpush1.msra.mxu0 0.0
    %576 = vmatprep.subr.mxu0 0.0
    %577 = vmatpush1.msra.mxu0 0.0
    %578 = vmatprep.subr.mxu0 0.0
    %579 = vmatpush1.msra.mxu0 0.0
    %580 = vmatprep.subr.mxu0 0.0
    %581 = vmatpush1.msra.mxu0 0.0
    %582 = vmatprep.subr.mxu0 0.0
    %583 = vmatpush1.msra.mxu0 0.0
    %584 = vmatprep.subr.mxu0 0.0
    %585 = vmatpush1.msra.mxu0 0.0
    %586 = vmatprep.subr.mxu0 0.0
    %587 = vmatpush1.msra.mxu0 0.0
    %588 = vmatprep.subr.mxu0 0.0
    %589 = vmatpush1.msra.mxu0 0.0
    %590 = vmatprep.subr.mxu0 0.0
    %591 = vmatpush1.msra.mxu0 0.0
    %592 = vmatprep.subr.mxu0 0.0
    %593 = vmatpush1.msra.mxu0 0.0
    %594 = vmatprep.subr.mxu0 0.0
    %595 = vmatpush1.msra.mxu0 0.0
    %596 = vmatprep.subr.mxu0 0.0
    %597 = vmatpush1.msra.mxu0 0.0
    %598 = vmatprep.subr.mxu0 0.0
    %599 = vmatpush1.msra.mxu0 0.0
    %600 = vmatprep.subr.mxu0 0.0
    %601 = vmatpush1.msra.mxu0 0.0
    %602 = vmatprep.subr.mxu0 0.0
    %603 = vmatpush1.msra.mxu0 0.0
    %604 = vmatprep.subr.mxu0 0.0
    %605 = vmatpush1.msra.mxu0 0.0
    %606 = vmatprep.subr.mxu0 0.0
    %607 = vmatpush1.msra.mxu0 0.0
    %608 = vmatprep.subr.mxu0 0.0
    %609 = vmatpush1.msra.mxu0 0.0
    %610 = vmatprep.subr.mxu0 0.0
    %611 = vmatpush1.msra.mxu0 0.0
    %612 = vmatprep.subr.mxu0 0.0
    %613 = vmatpush1.msra.mxu0 0.0
    %614 = vmatprep.subr.mxu0 0.0
    %615 = vmatpush1.msra.mxu0 0.0
    %616 = vmatprep.subr.mxu0 0.0
    %617 = vmatpush1.msra.mxu0 0.0
    %618 = vmatprep.mubr.f32.mxu0 0.0
    %619 = vmatmul.mubr.f32.gmra.mrb[0].mxu0 %v552
    %v620 = vpop.f32.mrb[0].mxu0
    %v621 = vadd.f32 0.0, %v620
    %v622 = vpop.f32.mrb[0].mxu0
    %623 = vdwg.mxu0
    %v625 = vsel %vm216, %v381, 0
    %627 = vmatprep.subr.mxu0 0.0
    %628 = vmatpush1.msra.mxu0 %v122
    %629 = vmatprep.subr.mxu0 0.0
    %630 = vmatpush1.msra.mxu0 0.0
    %631 = vmatprep.subr.mxu0 0.0
    %632 = vmatpush1.msra.mxu0 0.0
    %633 = vmatprep.subr.mxu0 0.0
    %634 = vmatpush1.msra.mxu0 0.0
    %635 = vmatprep.subr.mxu0 0.0
    %636 = vmatpush1.msra.mxu0 0.0
    %637 = vmatprep.subr.mxu0 0.0
    %638 = vmatpush1.msra.mxu0 0.0
    %639 = vmatprep.subr.mxu0 0.0
    %640 = vmatpush1.msra.mxu0 0.0
    %641 = vmatprep.subr.mxu0 0.0
    %642 = vmatpush1.msra.mxu0 0.0
    %643 = vmatprep.subr.mxu0 0.0
    %644 = vmatpush1.msra.mxu0 0.0
    %645 = vmatprep.subr.mxu0 0.0
    %646 = vmatpush1.msra.mxu0 0.0
    %647 = vmatprep.subr.mxu0 0.0
    %648 = vmatpush1.msra.mxu0 0.0
    %649 = vmatprep.subr.mxu0 0.0
    %650 = vmatpush1.msra.mxu0 0.0
    %651 = vmatprep.subr.mxu0 0.0
    %652 = vmatpush1.msra.mxu0 0.0
    %653 = vmatprep.subr.mxu0 0.0
    %654 = vmatpush1.msra.mxu0 0.0
    %655 = vmatprep.subr.mxu0 0.0
    %656 = vmatpush1.msra.mxu0 0.0
    %657 = vmatprep.subr.mxu0 0.0
    %658 = vmatpush1.msra.mxu0 0.0
    %659 = vmatprep.subr.mxu0 0.0
    %660 = vmatpush1.msra.mxu0 0.0
    %661 = vmatprep.subr.mxu0 0.0
    %662 = vmatpush1.msra.mxu0 0.0
    %663 = vmatprep.subr.mxu0 0.0
    %664 = vmatpush1.msra.mxu0 0.0
    %665 = vmatprep.subr.mxu0 0.0
    %666 = vmatpush1.msra.mxu0 0.0
    %667 = vmatprep.subr.mxu0 0.0
    %668 = vmatpush1.msra.mxu0 0.0
    %669 = vmatprep.subr.mxu0 0.0
    %670 = vmatpush1.msra.mxu0 0.0
    %671 = vmatprep.subr.mxu0 0.0
    %672 = vmatpush1.msra.mxu0 0.0
    %673 = vmatprep.subr.mxu0 0.0
    %674 = vmatpush1.msra.mxu0 0.0
    %675 = vmatprep.subr.mxu0 0.0
    %676 = vmatpush1.msra.mxu0 0.0
    %677 = vmatprep.subr.mxu0 0.0
    %678 = vmatpush1.msra.mxu0 0.0
    %679 = vmatprep.subr.mxu0 0.0
    %680 = vmatpush1.msra.mxu0 0.0
    %681 = vmatprep.subr.mxu0 0.0
    %682 = vmatpush1.msra.mxu0 0.0
    %683 = vmatprep.subr.mxu0 0.0
    %684 = vmatpush1.msra.mxu0 0.0
    %685 = vmatprep.subr.mxu0 0.0
    %686 = vmatpush1.msra.mxu0 0.0
    %687 = vmatprep.subr.mxu0 0.0
    %688 = vmatpush1.msra.mxu0 0.0
    %689 = vmatprep.subr.mxu0 0.0
    %690 = vmatpush1.msra.mxu0 0.0
    %691 = vmatprep.mubr.f32.mxu0 0.0
    %692 = vmatmul.mubr.f32.gmra.mrb[0].mxu0 %v625
    %v693 = vpop.f32.mrb[0].mxu0
    %v694 = vadd.f32 %v621, %v693
    %v695 = vpop.f32.mrb[0].mxu0
    %696 = vdwg.mxu0
    %697 = vrot.lane.b32.xlu0 %v205, 112
    %v698 = vpop.permute.xlu0 %697
    %699 = vrot.lane.b32.xlu0 %v205, 80
    %v700 = vpop.permute.xlu0 %699
    %v701 = vsel %vm216, %v698, 0
    %v703 = vsel %vm216, %v700, 0
    %705 = vmatprep.subr.mxu0 0.0
    %706 = vmatpush1.xpose.msra.mxu0 %v703
    %707 = vmatprep.subr.mxu0 0.0
    %708 = vmatpush1.xpose.msra.mxu0 0.0
    %709 = vmatprep.subr.mxu0 0.0
    %710 = vmatpush1.xpose.msra.mxu0 0.0
    %711 = vmatprep.subr.mxu0 0.0
    %712 = vmatpush1.xpose.msra.mxu0 0.0
    %713 = vmatprep.subr.mxu0 0.0
    %714 = vmatpush1.xpose.msra.mxu0 0.0
    %715 = vmatprep.subr.mxu0 0.0
    %716 = vmatpush1.xpose.msra.mxu0 0.0
    %717 = vmatprep.subr.mxu0 0.0
    %718 = vmatpush1.xpose.msra.mxu0 0.0
    %719 = vmatprep.subr.mxu0 0.0
    %720 = vmatpush1.xpose.msra.mxu0 0.0
    %721 = vmatprep.subr.mxu0 0.0
    %722 = vmatpush1.xpose.msra.mxu0 0.0
    %723 = vmatprep.subr.mxu0 0.0
    %724 = vmatpush1.xpose.msra.mxu0 0.0
    %725 = vmatprep.subr.mxu0 0.0
    %726 = vmatpush1.xpose.msra.mxu0 0.0
    %727 = vmatprep.subr.mxu0 0.0
    %728 = vmatpush1.xpose.msra.mxu0 0.0
    %729 = vmatprep.subr.mxu0 0.0
    %730 = vmatpush1.xpose.msra.mxu0 0.0
    %731 = vmatprep.subr.mxu0 0.0
    %732 = vmatpush1.xpose.msra.mxu0 0.0
    %733 = vmatprep.subr.mxu0 0.0
    %734 = vmatpush1.xpose.msra.mxu0 0.0
    %735 = vmatprep.subr.mxu0 0.0
    %736 = vmatpush1.xpose.msra.mxu0 0.0
    %737 = vmatprep.subr.mxu0 0.0
    %738 = vmatpush1.xpose.msra.mxu0 0.0
    %739 = vmatprep.subr.mxu0 0.0
    %740 = vmatpush1.xpose.msra.mxu0 0.0
    %741 = vmatprep.subr.mxu0 0.0
    %742 = vmatpush1.xpose.msra.mxu0 0.0
    %743 = vmatprep.subr.mxu0 0.0
    %744 = vmatpush1.xpose.msra.mxu0 0.0
    %745 = vmatprep.subr.mxu0 0.0
    %746 = vmatpush1.xpose.msra.mxu0 0.0
    %747 = vmatprep.subr.mxu0 0.0
    %748 = vmatpush1.xpose.msra.mxu0 0.0
    %749 = vmatprep.subr.mxu0 0.0
    %750 = vmatpush1.xpose.msra.mxu0 0.0
    %751 = vmatprep.subr.mxu0 0.0
    %752 = vmatpush1.xpose.msra.mxu0 0.0
    %753 = vmatprep.subr.mxu0 0.0
    %754 = vmatpush1.xpose.msra.mxu0 0.0
    %755 = vmatprep.subr.mxu0 0.0
    %756 = vmatpush1.xpose.msra.mxu0 0.0
    %757 = vmatprep.subr.mxu0 0.0
    %758 = vmatpush1.xpose.msra.mxu0 0.0
    %759 = vmatprep.subr.mxu0 0.0
    %760 = vmatpush1.xpose.msra.mxu0 0.0
    %761 = vmatprep.subr.mxu0 0.0
    %762 = vmatpush1.xpose.msra.mxu0 0.0
    %763 = vmatprep.subr.mxu0 0.0
    %764 = vmatpush1.xpose.msra.mxu0 0.0
    %765 = vmatprep.subr.mxu0 0.0
    %766 = vmatpush1.xpose.msra.mxu0 0.0
    %767 = vmatprep.subr.mxu0 0.0
    %768 = vmatpush1.xpose.msra.mxu0 0.0
    %769 = vmatprep.mubr.f32.mxu0 0.0
    %770 = vmatmul.mubr.f32.gmra.mrb[0].mxu0 %v701
    %v771 = vpop.f32.mrb[0].mxu0
    %v772 = vadd.f32 0.0, %v771
    %v773 = vpop.f32.mrb[0].mxu0
    %774 = vdwg.mxu0
    %v775 = vmul.f32 %v772, 0.35355338
    %v776 = vadd.f32 %v775, %v295
    %v777 = vsel %vm216, %v776, -inf
    %778 = vmax.xlane.f32.xlu0 %v777
    %v779 = vpop.xlane.xlu0 %778
    %v780 = vsub.f32 %v776, %v779
    %v781 = vmul.f32 %v780, 1.442695
    %v782 = vpow.pop %v781
    %v783 = vsel %vm216, %v782, 0.0
    %784 = vadd.xlane.f32.xlu0 %v783
    %v785 = vpop.xlane.xlu0 %784
    %v786 = vrcp.pop %v785
    %v787 = vmul.f32 %v782, %v786
    %788 = vrot.lane.b32.xlu0 %v205, 48
    %v789 = vpop.permute.xlu0 %788
    %v792 = vsel %vm216, %v787, 0
    %794 = vmatprep.subr.mxu0 0.0
    %795 = vmatpush1.msra.mxu0 %v789
    %796 = vmatprep.subr.mxu0 0.0
    %797 = vmatpush1.msra.mxu0 0.0
    %798 = vmatprep.subr.mxu0 0.0
    %799 = vmatpush1.msra.mxu0 0.0
    %800 = vmatprep.subr.mxu0 0.0
    %801 = vmatpush1.msra.mxu0 0.0
    %802 = vmatprep.subr.mxu0 0.0
    %803 = vmatpush1.msra.mxu0 0.0
    %804 = vmatprep.subr.mxu0 0.0
    %805 = vmatpush1.msra.mxu0 0.0
    %806 = vmatprep.subr.mxu0 0.0
    %807 = vmatpush1.msra.mxu0 0.0
    %808 = vmatprep.subr.mxu0 0.0
    %809 = vmatpush1.msra.mxu0 0.0
    %810 = vmatprep.subr.mxu0 0.0
    %811 = vmatpush1.msra.mxu0 0.0
    %812 = vmatprep.subr.mxu0 0.0
    %813 = vmatpush1.msra.mxu0 0.0
    %814 = vmatprep.subr.mxu0 0.0
    %815 = vmatpush1.msra.mxu0 0.0
    %816 = vmatprep.subr.mxu0 0.0
    %817 = vmatpush1.msra.mxu0 0.0
    %818 = vmatprep.subr.mxu0 0.0
    %819 = vmatpush1.msra.mxu0 0.0
    %820 = vmatprep.subr.mxu0 0.0
    %821 = vmatpush1.msra.mxu0 0.0
    %822 = vmatprep.subr.mxu0 0.0
    %823 = vmatpush1.msra.mxu0 0.0
    %824 = vmatprep.subr.mxu0 0.0
    %825 = vmatpush1.msra.mxu0 0.0
    %826 = vmatprep.subr.mxu0 0.0
    %827 = vmatpush1.msra.mxu0 0.0
    %828 = vmatprep.subr.mxu0 0.0
    %829 = vmatpush1.msra.mxu0 0.0
    %830 = vmatprep.subr.mxu0 0.0
    %831 = vmatpush1.msra.mxu0 0.0
    %832 = vmatprep.subr.mxu0 0.0
    %833 = vmatpush1.msra.mxu0 0.0
    %834 = vmatprep.subr.mxu0 0.0
    %835 = vmatpush1.msra.mxu0 0.0
    %836 = vmatprep.subr.mxu0 0.0
    %837 = vmatpush1.msra.mxu0 0.0
    %838 = vmatprep.subr.mxu0 0.0
    %839 = vmatpush1.msra.mxu0 0.0
    %840 = vmatprep.subr.mxu0 0.0
    %841 = vmatpush1.msra.mxu0 0.0
    %842 = vmatprep.subr.mxu0 0.0
    %843 = vmatpush1.msra.mxu0 0.0
    %844 = vmatprep.subr.mxu0 0.0
    %845 = vmatpush1.msra.mxu0 0.0
    %846 = vmatprep.subr.mxu0 0.0
    %847 = vmatpush1.msra.mxu0 0.0
    %848 = vmatprep.subr.mxu0 0.0
    %849 = vmatpush1.msra.mxu0 0.0
    %850 = vmatprep.subr.mxu0 0.0
    %851 = vmatpush1.msra.mxu0 0.0
    %852 = vmatprep.subr.mxu0 0.0
    %853 = vmatpush1.msra.mxu0 0.0
    %854 = vmatprep.subr.mxu0 0.0
    %855 = vmatpush1.msra.mxu0 0.0
    %856 = vmatprep.subr.mxu0 0.0
    %857 = vmatpush1.msra.mxu0 0.0
    %858 = vmatprep.mubr.f32.mxu0 0.0
    %859 = vmatmul.mubr.f32.gmra.mrb[0].mxu0 %v792
    %v860 = vpop.f32.mrb[0].mxu0
    %v861 = vadd.f32 0.0, %v860
    %v862 = vpop.f32.mrb[0].mxu0
    %863 = vdwg.mxu0
    %v865 = vsel %vm216, %v861, 0
    %867 = vmatprep.subr.mxu0 0.0
    %868 = vmatpush1.msra.mxu0 %v124
    %869 = vmatprep.subr.mxu0 0.0
    %870 = vmatpush1.msra.mxu0 0.0
    %871 = vmatprep.subr.mxu0 0.0
    %872 = vmatpush1.msra.mxu0 0.0
    %873 = vmatprep.subr.mxu0 0.0
    %874 = vmatpush1.msra.mxu0 0.0
    %875 = vmatprep.subr.mxu0 0.0
    %876 = vmatpush1.msra.mxu0 0.0
    %877 = vmatprep.subr.mxu0 0.0
    %878 = vmatpush1.msra.mxu0 0.0
    %879 = vmatprep.subr.mxu0 0.0
    %880 = vmatpush1.msra.mxu0 0.0
    %881 = vmatprep.subr.mxu0 0.0
    %882 = vmatpush1.msra.mxu0 0.0
    %883 = vmatprep.subr.mxu0 0.0
    %884 = vmatpush1.msra.mxu0 0.0
    %885 = vmatprep.subr.mxu0 0.0
    %886 = vmatpush1.msra.mxu0 0.0
    %887 = vmatprep.subr.mxu0 0.0
    %888 = vmatpush1.msra.mxu0 0.0
    %889 = vmatprep.subr.mxu0 0.0
    %890 = vmatpush1.msra.mxu0 0.0
    %891 = vmatprep.subr.mxu0 0.0
    %892 = vmatpush1.msra.mxu0 0.0
    %893 = vmatprep.subr.mxu0 0.0
    %894 = vmatpush1.msra.mxu0 0.0
    %895 = vmatprep.subr.mxu0 0.0
    %896 = vmatpush1.msra.mxu0 0.0
    %897 = vmatprep.subr.mxu0 0.0
    %898 = vmatpush1.msra.mxu0 0.0
    %899 = vmatprep.subr.mxu0 0.0
    %900 = vmatpush1.msra.mxu0 0.0
    %901 = vmatprep.subr.mxu0 0.0
    %902 = vmatpush1.msra.mxu0 0.0
    %903 = vmatprep.subr.mxu0 0.0
    %904 = vmatpush1.msra.mxu0 0.0
    %905 = vmatprep.subr.mxu0 0.0
    %906 = vmatpush1.msra.mxu0 0.0
    %907 = vmatprep.subr.mxu0 0.0
    %908 = vmatpush1.msra.mxu0 0.0
    %909 = vmatprep.subr.mxu0 0.0
    %910 = vmatpush1.msra.mxu0 0.0
    %911 = vmatprep.subr.mxu0 0.0
    %912 = vmatpush1.msra.mxu0 0.0
    %913 = vmatprep.subr.mxu0 0.0
    %914 = vmatpush1.msra.mxu0 0.0
    %915 = vmatprep.subr.mxu0 0.0
    %916 = vmatpush1.msra.mxu0 0.0
    %917 = vmatprep.subr.mxu0 0.0
    %918 = vmatpush1.msra.mxu0 0.0
    %919 = vmatprep.subr.mxu0 0.0
    %920 = vmatpush1.msra.mxu0 0.0
    %921 = vmatprep.subr.mxu0 0.0
    %922 = vmatpush1.msra.mxu0 0.0
    %923 = vmatprep.subr.mxu0 0.0
    %924 = vmatpush1.msra.mxu0 0.0
    %925 = vmatprep.subr.mxu0 0.0
    %926 = vmatpush1.msra.mxu0 0.0
    %927 = vmatprep.subr.mxu0 0.0
    %928 = vmatpush1.msra.mxu0 0.0
    %929 = vmatprep.subr.mxu0 0.0
    %930 = vmatpush1.msra.mxu0 0.0
    %931 = vmatprep.mubr.f32.mxu0 0.0
    %932 = vmatmul.mubr.f32.gmra.mrb[0].mxu0 %v865
    %v933 = vpop.f32.mrb[0].mxu0
    %v934 = vadd.f32 0.0, %v933
    %v935 = vpop.f32.mrb[0].mxu0
    %936 = vdwg.mxu0
    %v937 = vadd.f32 %v694, %v934
    %938 = vrot.lane.b32.xlu0 %v205, 104
    %v939 = vpop.permute.xlu0 %938
    %940 = vrot.lane.b32.xlu0 %v205, 72
    %v941 = vpop.permute.xlu0 %940
    %v942 = vsel %vm216, %v939, 0
    %v944 = vsel %vm216, %v941, 0
    %946 = vmatprep.subr.mxu0 0.0
    %947 = vmatpush1.xpose.msra.mxu0 %v944
    %948 = vmatprep.subr.mxu0 0.0
    %949 = vmatpush1.xpose.msra.mxu0 0.0
    %950 = vmatprep.subr.mxu0 0.0
    %951 = vmatpush1.xpose.msra.mxu0 0.0
    %952 = vmatprep.subr.mxu0 0.0
    %953 = vmatpush1.xpose.msra.mxu0 0.0
    %954 = vmatprep.subr.mxu0 0.0
    %955 = vmatpush1.xpose.msra.mxu0 0.0
    %956 = vmatprep.subr.mxu0 0.0
    %957 = vmatpush1.xpose.msra.mxu0 0.0
    %958 = vmatprep.subr.mxu0 0.0
    %959 = vmatpush1.xpose.msra.mxu0 0.0
    %960 = vmatprep.subr.mxu0 0.0
    %961 = vmatpush1.xpose.msra.mxu0 0.0
    %962 = vmatprep.subr.mxu0 0.0
    %963 = vmatpush1.xpose.msra.mxu0 0.0
    %964 = vmatprep.subr.mxu0 0.0
    %965 = vmatpush1.xpose.msra.mxu0 0.0
    %966 = vmatprep.subr.mxu0 0.0
    %967 = vmatpush1.xpose.msra.mxu0 0.0
    %968 = vmatprep.subr.mxu0 0.0
    %969 = vmatpush1.xpose.msra.mxu0 0.0
    %970 = vmatprep.subr.mxu0 0.0
    %971 = vmatpush1.xpose.msra.mxu0 0.0
    %972 = vmatprep.subr.mxu0 0.0
    %973 = vmatpush1.xpose.msra.mxu0 0.0
    %974 = vmatprep.subr.mxu0 0.0
    %975 = vmatpush1.xpose.msra.mxu0 0.0
    %976 = vmatprep.subr.mxu0 0.0
    %977 = vmatpush1.xpose.msra.mxu0 0.0
    %978 = vmatprep.subr.mxu0 0.0
    %979 = vmatpush1.xpose.msra.mxu0 0.0
    %980 = vmatprep.subr.mxu0 0.0
    %981 = vmatpush1.xpose.msra.mxu0 0.0
    %982 = vmatprep.subr.mxu0 0.0
    %983 = vmatpush1.xpose.msra.mxu0 0.0
    %984 = vmatprep.subr.mxu0 0.0
    %985 = vmatpush1.xpose.msra.mxu0 0.0
    %986 = vmatprep.subr.mxu0 0.0
    %987 = vmatpush1.xpose.msra.mxu0 0.0
    %988 = vmatprep.subr.mxu0 0.0
    %989 = vmatpush1.xpose.msra.mxu0 0.0
    %990 = vmatprep.subr.mxu0 0.0
    %991 = vmatpush1.xpose.msra.mxu0 0.0
    %992 = vmatprep.subr.mxu0 0.0
    %993 = vmatpush1.xpose.msra.mxu0 0.0
    %994 = vmatprep.subr.mxu0 0.0
    %995 = vmatpush1.xpose.msra.mxu0 0.0
    %996 = vmatprep.subr.mxu0 0.0
    %997 = vmatpush1.xpose.msra.mxu0 0.0
    %998 = vmatprep.subr.mxu0 0.0
    %999 = vmatpush1.xpose.msra.mxu0 0.0
    %1000 = vmatprep.subr.mxu0 0.0
    %1001 = vmatpush1.xpose.msra.mxu0 0.0
    %1002 = vmatprep.subr.mxu0 0.0
    %1003 = vmatpush1.xpose.msra.mxu0 0.0
    %1004 = vmatprep.subr.mxu0 0.0
    %1005 = vmatpush1.xpose.msra.mxu0 0.0
    %1006 = vmatprep.subr.mxu0 0.0
    %1007 = vmatpush1.xpose.msra.mxu0 0.0
    %1008 = vmatprep.subr.mxu0 0.0
    %1009 = vmatpush1.xpose.msra.mxu0 0.0
    %1010 = vmatprep.mubr.f32.mxu0 0.0
    %1011 = vmatmul.mubr.f32.gmra.mrb[0].mxu0 %v942
    %v1012 = vpop.f32.mrb[0].mxu0
    %v1013 = vadd.f32 0.0, %v1012
    %v1014 = vpop.f32.mrb[0].mxu0
    %1015 = vdwg.mxu0
    %v1016 = vmul.f32 %v1013, 0.35355338
    %v1017 = vadd.f32 %v1016, %v295
    %v1018 = vsel %vm216, %v1017, -inf
    %1019 = vmax.xlane.f32.xlu0 %v1018
    %v1020 = vpop.xlane.xlu0 %1019
    %v1021 = vsub.f32 %v1017, %v1020
    %v1022 = vmul.f32 %v1021, 1.442695
    %v1023 = vpow.pop %v1022
    %v1024 = vsel %vm216, %v1023, 0.0
    %1025 = vadd.xlane.f32.xlu0 %v1024
    %v1026 = vpop.xlane.xlu0 %1025
    %v1027 = vrcp.pop %v1026
    %v1028 = vmul.f32 %v1023, %v1027
    %1029 = vrot.lane.b32.xlu0 %v205, 40
    %v1030 = vpop.permute.xlu0 %1029
    %v1033 = vsel %vm216, %v1028, 0
    %1035 = vmatprep.subr.mxu0 0.0
    %1036 = vmatpush1.msra.mxu0 %v1030
    %1037 = vmatprep.subr.mxu0 0.0
    %1038 = vmatpush1.msra.mxu0 0.0
    %1039 = vmatprep.subr.mxu0 0.0
    %1040 = vmatpush1.msra.mxu0 0.0
    %1041 = vmatprep.subr.mxu0 0.0
    %1042 = vmatpush1.msra.mxu0 0.0
    %1043 = vmatprep.subr.mxu0 0.0
    %1044 = vmatpush1.msra.mxu0 0.0
    %1045 = vmatprep.subr.mxu0 0.0
    %1046 = vmatpush1.msra.mxu0 0.0
    %1047 = vmatprep.subr.mxu0 0.0
    %1048 = vmatpush1.msra.mxu0 0.0
    %1049 = vmatprep.subr.mxu0 0.0
    %1050 = vmatpush1.msra.mxu0 0.0
    %1051 = vmatprep.subr.mxu0 0.0
    %1052 = vmatpush1.msra.mxu0 0.0
    %1053 = vmatprep.subr.mxu0 0.0
    %1054 = vmatpush1.msra.mxu0 0.0
    %1055 = vmatprep.subr.mxu0 0.0
    %1056 = vmatpush1.msra.mxu0 0.0
    %1057 = vmatprep.subr.mxu0 0.0
    %1058 = vmatpush1.msra.mxu0 0.0
    %1059 = vmatprep.subr.mxu0 0.0
    %1060 = vmatpush1.msra.mxu0 0.0
    %1061 = vmatprep.subr.mxu0 0.0
    %1062 = vmatpush1.msra.mxu0 0.0
    %1063 = vmatprep.subr.mxu0 0.0
    %1064 = vmatpush1.msra.mxu0 0.0
    %1065 = vmatprep.subr.mxu0 0.0
    %1066 = vmatpush1.msra.mxu0 0.0
    %1067 = vmatprep.subr.mxu0 0.0
    %1068 = vmatpush1.msra.mxu0 0.0
    %1069 = vmatprep.subr.mxu0 0.0
    %1070 = vmatpush1.msra.mxu0 0.0
    %1071 = vmatprep.subr.mxu0 0.0
    %1072 = vmatpush1.msra.mxu0 0.0
    %1073 = vmatprep.subr.mxu0 0.0
    %1074 = vmatpush1.msra.mxu0 0.0
    %1075 = vmatprep.subr.mxu0 0.0
    %1076 = vmatpush1.msra.mxu0 0.0
    %1077 = vmatprep.subr.mxu0 0.0
    %1078 = vmatpush1.msra.mxu0 0.0
    %1079 = vmatprep.subr.mxu0 0.0
    %1080 = vmatpush1.msra.mxu0 0.0
    %1081 = vmatprep.subr.mxu0 0.0
    %1082 = vmatpush1.msra.mxu0 0.0
    %1083 = vmatprep.subr.mxu0 0.0
    %1084 = vmatpush1.msra.mxu0 0.0
    %1085 = vmatprep.subr.mxu0 0.0
    %1086 = vmatpush1.msra.mxu0 0.0
    %1087 = vmatprep.subr.mxu0 0.0
    %1088 = vmatpush1.msra.mxu0 0.0
    %1089 = vmatprep.subr.mxu0 0.0
    %1090 = vmatpush1.msra.mxu0 0.0
    %1091 = vmatprep.subr.mxu0 0.0
    %1092 = vmatpush1.msra.mxu0 0.0
    %1093 = vmatprep.subr.mxu0 0.0
    %1094 = vmatpush1.msra.mxu0 0.0
    %1095 = vmatprep.subr.mxu0 0.0
    %1096 = vmatpush1.msra.mxu0 0.0
    %1097 = vmatprep.subr.mxu0 0.0
    %1098 = vmatpush1.msra.mxu0 0.0
    %1099 = vmatprep.mubr.f32.mxu0 0.0
    %1100 = vmatmul.mubr.f32.gmra.mrb[0].mxu0 %v1033
    %v1101 = vpop.f32.mrb[0].mxu0
    %v1102 = vadd.f32 0.0, %v1101
    %v1103 = vpop.f32.mrb[0].mxu0
    %1104 = vdwg.mxu0
    %v1106 = vsel %vm216, %v1102, 0
    %1108 = vmatprep.subr.mxu0 0.0
    %1109 = vmatpush1.msra.mxu0 %v125
    %1110 = vmatprep.subr.mxu0 0.0
    %1111 = vmatpush1.msra.mxu0 0.0
    %1112 = vmatprep.subr.mxu0 0.0
    %1113 = vmatpush1.msra.mxu0 0.0
    %1114 = vmatprep.subr.mxu0 0.0
    %1115 = vmatpush1.msra.mxu0 0.0
    %1116 = vmatprep.subr.mxu0 0.0
    %1117 = vmatpush1.msra.mxu0 0.0
    %1118 = vmatprep.subr.mxu0 0.0
    %1119 = vmatpush1.msra.mxu0 0.0
    %1120 = vmatprep.subr.mxu0 0.0
    %1121 = vmatpush1.msra.mxu0 0.0
    %1122 = vmatprep.subr.mxu0 0.0
    %1123 = vmatpush1.msra.mxu0 0.0
    %1124 = vmatprep.subr.mxu0 0.0
    %1125 = vmatpush1.msra.mxu0 0.0
    %1126 = vmatprep.subr.mxu0 0.0
    %1127 = vmatpush1.msra.mxu0 0.0
    %1128 = vmatprep.subr.mxu0 0.0
    %1129 = vmatpush1.msra.mxu0 0.0
    %1130 = vmatprep.subr.mxu0 0.0
    %1131 = vmatpush1.msra.mxu0 0.0
    %1132 = vmatprep.subr.mxu0 0.0
    %1133 = vmatpush1.msra.mxu0 0.0
    %1134 = vmatprep.subr.mxu0 0.0
    %1135 = vmatpush1.msra.mxu0 0.0
    %1136 = vmatprep.subr.mxu0 0.0
    %1137 = vmatpush1.msra.mxu0 0.0
    %1138 = vmatprep.subr.mxu0 0.0
    %1139 = vmatpush1.msra.mxu0 0.0
    %1140 = vmatprep.subr.mxu0 0.0
    %1141 = vmatpush1.msra.mxu0 0.0
    %1142 = vmatprep.subr.mxu0 0.0
    %1143 = vmatpush1.msra.mxu0 0.0
    %1144 = vmatprep.subr.mxu0 0.0
    %1145 = vmatpush1.msra.mxu0 0.0
    %1146 = vmatprep.subr.mxu0 0.0
    %1147 = vmatpush1.msra.mxu0 0.0
    %1148 = vmatprep.subr.mxu0 0.0
    %1149 = vmatpush1.msra.mxu0 0.0
    %1150 = vmatprep.subr.mxu0 0.0
    %1151 = vmatpush1.msra.mxu0 0.0
    %1152 = vmatprep.subr.mxu0 0.0
    %1153 = vmatpush1.msra.mxu0 0.0
    %1154 = vmatprep.subr.mxu0 0.0
    %1155 = vmatpush1.msra.mxu0 0.0
    %1156 = vmatprep.subr.mxu0 0.0
    %1157 = vmatpush1.msra.mxu0 0.0
    %1158 = vmatprep.subr.mxu0 0.0
    %1159 = vmatpush1.msra.mxu0 0.0
    %1160 = vmatprep.subr.mxu0 0.0
    %1161 = vmatpush1.msra.mxu0 0.0
    %1162 = vmatprep.subr.mxu0 0.0
    %1163 = vmatpush1.msra.mxu0 0.0
    %1164 = vmatprep.subr.mxu0 0.0
    %1165 = vmatpush1.msra.mxu0 0.0
    %1166 = vmatprep.subr.mxu0 0.0
    %1167 = vmatpush1.msra.mxu0 0.0
    %1168 = vmatprep.subr.mxu0 0.0
    %1169 = vmatpush1.msra.mxu0 0.0
    %1170 = vmatprep.subr.mxu0 0.0
    %1171 = vmatpush1.msra.mxu0 0.0
    %1172 = vmatprep.mubr.f32.mxu0 0.0
    %1173 = vmatmul.mubr.f32.gmra.mrb[0].mxu0 %v1106
    %v1174 = vpop.f32.mrb[0].mxu0
    %v1175 = vadd.f32 0.0, %v1174
    %v1176 = vpop.f32.mrb[0].mxu0
    %1177 = vdwg.mxu0
    %v1178 = vadd.f32 %v937, %v1175
    %1180 = vrot.lane.b32.xlu0 %v210, 96
    %v1181 = vpop.permute.xlu0 %1180
    %v1182 = vsel %vm216, %v210, 0
    %v1184 = vsel %vm216, %v1181, 0
    %1186 = vmatprep.subr.mxu0 0.0
    %1187 = vmatpush1.xpose.msra.mxu0 %v1184
    %1188 = vmatprep.subr.mxu0 0.0
    %1189 = vmatpush1.xpose.msra.mxu0 0.0
    %1190 = vmatprep.subr.mxu0 0.0
    %1191 = vmatpush1.xpose.msra.mxu0 0.0
    %1192 = vmatprep.subr.mxu0 0.0
    %1193 = vmatpush1.xpose.msra.mxu0 0.0
    %1194 = vmatprep.subr.mxu0 0.0
    %1195 = vmatpush1.xpose.msra.mxu0 0.0
    %1196 = vmatprep.subr.mxu0 0.0
    %1197 = vmatpush1.xpose.msra.mxu0 0.0
    %1198 = vmatprep.subr.mxu0 0.0
    %1199 = vmatpush1.xpose.msra.mxu0 0.0
    %1200 = vmatprep.subr.mxu0 0.0
    %1201 = vmatpush1.xpose.msra.mxu0 0.0
    %1202 = vmatprep.subr.mxu0 0.0
    %1203 = vmatpush1.xpose.msra.mxu0 0.0
    %1204 = vmatprep.subr.mxu0 0.0
    %1205 = vmatpush1.xpose.msra.mxu0 0.0
    %1206 = vmatprep.subr.mxu0 0.0
    %1207 = vmatpush1.xpose.msra.mxu0 0.0
    %1208 = vmatprep.subr.mxu0 0.0
    %1209 = vmatpush1.xpose.msra.mxu0 0.0
    %1210 = vmatprep.subr.mxu0 0.0
    %1211 = vmatpush1.xpose.msra.mxu0 0.0
    %1212 = vmatprep.subr.mxu0 0.0
    %1213 = vmatpush1.xpose.msra.mxu0 0.0
    %1214 = vmatprep.subr.mxu0 0.0
    %1215 = vmatpush1.xpose.msra.mxu0 0.0
    %1216 = vmatprep.subr.mxu0 0.0
    %1217 = vmatpush1.xpose.msra.mxu0 0.0
    %1218 = vmatprep.subr.mxu0 0.0
    %1219 = vmatpush1.xpose.msra.mxu0 0.0
    %1220 = vmatprep.subr.mxu0 0.0
    %1221 = vmatpush1.xpose.msra.mxu0 0.0
    %1222 = vmatprep.subr.mxu0 0.0
    %1223 = vmatpush1.xpose.msra.mxu0 0.0
    %1224 = vmatprep.subr.mxu0 0.0
    %1225 = vmatpush1.xpose.msra.mxu0 0.0
    %1226 = vmatprep.subr.mxu0 0.0
    %1227 = vmatpush1.xpose.msra.mxu0 0.0
    %1228 = vmatprep.subr.mxu0 0.0
    %1229 = vmatpush1.xpose.msra.mxu0 0.0
    %1230 = vmatprep.subr.mxu0 0.0
    %1231 = vmatpush1.xpose.msra.mxu0 0.0
    %1232 = vmatprep.subr.mxu0 0.0
    %1233 = vmatpush1.xpose.msra.mxu0 0.0
    %1234 = vmatprep.subr.mxu0 0.0
    %1235 = vmatpush1.xpose.msra.mxu0 0.0
    %1236 = vmatprep.subr.mxu0 0.0
    %1237 = vmatpush1.xpose.msra.mxu0 0.0
    %1238 = vmatprep.subr.mxu0 0.0
    %1239 = vmatpush1.xpose.msra.mxu0 0.0
    %1240 = vmatprep.subr.mxu0 0.0
    %1241 = vmatpush1.xpose.msra.mxu0 0.0
    %1242 = vmatprep.subr.mxu0 0.0
    %1243 = vmatpush1.xpose.msra.mxu0 0.0
    %1244 = vmatprep.subr.mxu0 0.0
    %1245 = vmatpush1.xpose.msra.mxu0 0.0
    %1246 = vmatprep.subr.mxu0 0.0
    %1247 = vmatpush1.xpose.msra.mxu0 0.0
    %1248 = vmatprep.subr.mxu0 0.0
    %1249 = vmatpush1.xpose.msra.mxu0 0.0
    %1250 = vmatprep.mubr.f32.mxu0 0.0
    %1251 = vmatmul.mubr.f32.gmra.mrb[0].mxu0 %v1182
    %v1252 = vpop.f32.mrb[0].mxu0
    %v1253 = vadd.f32 0.0, %v1252
    %v1254 = vpop.f32.mrb[0].mxu0
    %1255 = vdwg.mxu0
    %v1256 = vmul.f32 %v1253, 0.35355338
    %v1257 = vlaneseq
    %v1258 = vshrl.u32 %v1257, 7
    %v1259 = vsub.s32 1, %v1258
    %v1260 = vrot.slane %v116, %v1259
    %v1261 = vadd.f32 %v1256, %v1260
    %v1262 = vsel %vm216, %v1261, -inf
    %1263 = vmax.xlane.f32.xlu0 %v1262
    %v1264 = vpop.xlane.xlu0 %1263
    %v1265 = vsub.f32 %v1261, %v1264
    %v1266 = vmul.f32 %v1265, 1.442695
    %v1267 = vpow.pop %v1266
    %v1268 = vsel %vm216, %v1267, 0.0
    %1269 = vadd.xlane.f32.xlu0 %v1268
    %v1270 = vpop.xlane.xlu0 %1269
    %v1271 = vrcp.pop %v1270
    %v1272 = vmul.f32 %v1267, %v1271
    %1273 = vrot.lane.b32.xlu0 %v210, 64
    %v1274 = vpop.permute.xlu0 %1273
    %v1277 = vsel %vm216, %v1272, 0
    %1279 = vmatprep.subr.mxu0 0.0
    %1280 = vmatpush1.msra.mxu0 %v1274
    %1281 = vmatprep.subr.mxu0 0.0
    %1282 = vmatpush1.msra.mxu0 0.0
    %1283 = vmatprep.subr.mxu0 0.0
    %1284 = vmatpush1.msra.mxu0 0.0
    %1285 = vmatprep.subr.mxu0 0.0
    %1286 = vmatpush1.msra.mxu0 0.0
    %1287 = vmatprep.subr.mxu0 0.0
    %1288 = vmatpush1.msra.mxu0 0.0
    %1289 = vmatprep.subr.mxu0 0.0
    %1290 = vmatpush1.msra.mxu0 0.0
    %1291 = vmatprep.subr.mxu0 0.0
    %1292 = vmatpush1.msra.mxu0 0.0
    %1293 = vmatprep.subr.mxu0 0.0
    %1294 = vmatpush1.msra.mxu0 0.0
    %1295 = vmatprep.subr.mxu0 0.0
    %1296 = vmatpush1.msra.mxu0 0.0
    %1297 = vmatprep.subr.mxu0 0.0
    %1298 = vmatpush1.msra.mxu0 0.0
    %1299 = vmatprep.subr.mxu0 0.0
    %1300 = vmatpush1.msra.mxu0 0.0
    %1301 = vmatprep.subr.mxu0 0.0
    %1302 = vmatpush1.msra.mxu0 0.0
    %1303 = vmatprep.subr.mxu0 0.0
    %1304 = vmatpush1.msra.mxu0 0.0
    %1305 = vmatprep.subr.mxu0 0.0
    %1306 = vmatpush1.msra.mxu0 0.0
    %1307 = vmatprep.subr.mxu0 0.0
    %1308 = vmatpush1.msra.mxu0 0.0
    %1309 = vmatprep.subr.mxu0 0.0
    %1310 = vmatpush1.msra.mxu0 0.0
    %1311 = vmatprep.subr.mxu0 0.0
    %1312 = vmatpush1.msra.mxu0 0.0
    %1313 = vmatprep.subr.mxu0 0.0
    %1314 = vmatpush1.msra.mxu0 0.0
    %1315 = vmatprep.subr.mxu0 0.0
    %1316 = vmatpush1.msra.mxu0 0.0
    %1317 = vmatprep.subr.mxu0 0.0
    %1318 = vmatpush1.msra.mxu0 0.0
    %1319 = vmatprep.subr.mxu0 0.0
    %1320 = vmatpush1.msra.mxu0 0.0
    %1321 = vmatprep.subr.mxu0 0.0
    %1322 = vmatpush1.msra.mxu0 0.0
    %1323 = vmatprep.subr.mxu0 0.0
    %1324 = vmatpush1.msra.mxu0 0.0
    %1325 = vmatprep.subr.mxu0 0.0
    %1326 = vmatpush1.msra.mxu0 0.0
    %1327 = vmatprep.subr.mxu0 0.0
    %1328 = vmatpush1.msra.mxu0 0.0
    %1329 = vmatprep.subr.mxu0 0.0
    %1330 = vmatpush1.msra.mxu0 0.0
    %1331 = vmatprep.subr.mxu0 0.0
    %1332 = vmatpush1.msra.mxu0 0.0
    %1333 = vmatprep.subr.mxu0 0.0
    %1334 = vmatpush1.msra.mxu0 0.0
    %1335 = vmatprep.subr.mxu0 0.0
    %1336 = vmatpush1.msra.mxu0 0.0
    %1337 = vmatprep.subr.mxu0 0.0
    %1338 = vmatpush1.msra.mxu0 0.0
    %1339 = vmatprep.subr.mxu0 0.0
    %1340 = vmatpush1.msra.mxu0 0.0
    %1341 = vmatprep.subr.mxu0 0.0
    %1342 = vmatpush1.msra.mxu0 0.0
    %1343 = vmatprep.mubr.f32.mxu0 0.0
    %1344 = vmatmul.mubr.f32.gmra.mrb[0].mxu0 %v1277
    %v1345 = vpop.f32.mrb[0].mxu0
    %v1346 = vadd.f32 0.0, %v1345
    %v1347 = vpop.f32.mrb[0].mxu0
    %1348 = vdwg.mxu0
    %1349 = vrot.lane.b32.xlu0 %v210, 120
    %v1350 = vpop.permute.xlu0 %1349
    %1351 = vrot.lane.b32.xlu0 %v210, 88
    %v1352 = vpop.permute.xlu0 %1351
    %v1353 = vsel %vm216, %v1350, 0
    %v1355 = vsel %vm216, %v1352, 0
    %1357 = vmatprep.subr.mxu0 0.0
    %1358 = vmatpush1.xpose.msra.mxu0 %v1355
    %1359 = vmatprep.subr.mxu0 0.0
    %1360 = vmatpush1.xpose.msra.mxu0 0.0
    %1361 = vmatprep.subr.mxu0 0.0
    %1362 = vmatpush1.xpose.msra.mxu0 0.0
    %1363 = vmatprep.subr.mxu0 0.0
    %1364 = vmatpush1.xpose.msra.mxu0 0.0
    %1365 = vmatprep.subr.mxu0 0.0
    %1366 = vmatpush1.xpose.msra.mxu0 0.0
    %1367 = vmatprep.subr.mxu0 0.0
    %1368 = vmatpush1.xpose.msra.mxu0 0.0
    %1369 = vmatprep.subr.mxu0 0.0
    %1370 = vmatpush1.xpose.msra.mxu0 0.0
    %1371 = vmatprep.subr.mxu0 0.0
    %1372 = vmatpush1.xpose.msra.mxu0 0.0
    %1373 = vmatprep.subr.mxu0 0.0
    %1374 = vmatpush1.xpose.msra.mxu0 0.0
    %1375 = vmatprep.subr.mxu0 0.0
    %1376 = vmatpush1.xpose.msra.mxu0 0.0
    %1377 = vmatprep.subr.mxu0 0.0
    %1378 = vmatpush1.xpose.msra.mxu0 0.0
    %1379 = vmatprep.subr.mxu0 0.0
    %1380 = vmatpush1.xpose.msra.mxu0 0.0
    %1381 = vmatprep.subr.mxu0 0.0
    %1382 = vmatpush1.xpose.msra.mxu0 0.0
    %1383 = vmatprep.subr.mxu0 0.0
    %1384 = vmatpush1.xpose.msra.mxu0 0.0
    %1385 = vmatprep.subr.mxu0 0.0
    %1386 = vmatpush1.xpose.msra.mxu0 0.0
    %1387 = vmatprep.subr.mxu0 0.0
    %1388 = vmatpush1.xpose.msra.mxu0 0.0
    %1389 = vmatprep.subr.mxu0 0.0
    %1390 = vmatpush1.xpose.msra.mxu0 0.0
    %1391 = vmatprep.subr.mxu0 0.0
    %1392 = vmatpush1.xpose.msra.mxu0 0.0
    %1393 = vmatprep.subr.mxu0 0.0
    %1394 = vmatpush1.xpose.msra.mxu0 0.0
    %1395 = vmatprep.subr.mxu0 0.0
    %1396 = vmatpush1.xpose.msra.mxu0 0.0
    %1397 = vmatprep.subr.mxu0 0.0
    %1398 = vmatpush1.xpose.msra.mxu0 0.0
    %1399 = vmatprep.subr.mxu0 0.0
    %1400 = vmatpush1.xpose.msra.mxu0 0.0
    %1401 = vmatprep.subr.mxu0 0.0
    %1402 = vmatpush1.xpose.msra.mxu0 0.0
    %1403 = vmatprep.subr.mxu0 0.0
    %1404 = vmatpush1.xpose.msra.mxu0 0.0
    %1405 = vmatprep.subr.mxu0 0.0
    %1406 = vmatpush1.xpose.msra.mxu0 0.0
    %1407 = vmatprep.subr.mxu0 0.0
    %1408 = vmatpush1.xpose.msra.mxu0 0.0
    %1409 = vmatprep.subr.mxu0 0.0
    %1410 = vmatpush1.xpose.msra.mxu0 0.0
    %1411 = vmatprep.subr.mxu0 0.0
    %1412 = vmatpush1.xpose.msra.mxu0 0.0
    %1413 = vmatprep.subr.mxu0 0.0
    %1414 = vmatpush1.xpose.msra.mxu0 0.0
    %1415 = vmatprep.subr.mxu0 0.0
    %1416 = vmatpush1.xpose.msra.mxu0 0.0
    %1417 = vmatprep.subr.mxu0 0.0
    %1418 = vmatpush1.xpose.msra.mxu0 0.0
    %1419 = vmatprep.subr.mxu0 0.0
    %1420 = vmatpush1.xpose.msra.mxu0 0.0
    %1421 = vmatprep.mubr.f32.mxu0 0.0
    %1422 = vmatmul.mubr.f32.gmra.mrb[0].mxu0 %v1353
    %v1423 = vpop.f32.mrb[0].mxu0
    %v1424 = vadd.f32 0.0, %v1423
    %v1425 = vpop.f32.mrb[0].mxu0
    %1426 = vdwg.mxu0
    %v1427 = vmul.f32 %v1424, 0.35355338
    %v1428 = vadd.f32 %v1427, %v1260
    %v1429 = vsel %vm216, %v1428, -inf
    %1430 = vmax.xlane.f32.xlu0 %v1429
    %v1431 = vpop.xlane.xlu0 %1430
    %v1432 = vsub.f32 %v1428, %v1431
    %v1433 = vmul.f32 %v1432, 1.442695
    %v1434 = vpow.pop %v1433
    %v1435 = vsel %vm216, %v1434, 0.0
    %1436 = vadd.xlane.f32.xlu0 %v1435
    %v1437 = vpop.xlane.xlu0 %1436
    %v1438 = vrcp.pop %v1437
    %v1439 = vmul.f32 %v1434, %v1438
    %1440 = vrot.lane.b32.xlu0 %v210, 56
    %v1441 = vpop.permute.xlu0 %1440
    %v1444 = vsel %vm216, %v1439, 0
    %1446 = vmatprep.subr.mxu0 0.0
    %1447 = vmatpush1.msra.mxu0 %v1441
    %1448 = vmatprep.subr.mxu0 0.0
    %1449 = vmatpush1.msra.mxu0 0.0
    %1450 = vmatprep.subr.mxu0 0.0
    %1451 = vmatpush1.msra.mxu0 0.0
    %1452 = vmatprep.subr.mxu0 0.0
    %1453 = vmatpush1.msra.mxu0 0.0
    %1454 = vmatprep.subr.mxu0 0.0
    %1455 = vmatpush1.msra.mxu0 0.0
    %1456 = vmatprep.subr.mxu0 0.0
    %1457 = vmatpush1.msra.mxu0 0.0
    %1458 = vmatprep.subr.mxu0 0.0
    %1459 = vmatpush1.msra.mxu0 0.0
    %1460 = vmatprep.subr.mxu0 0.0
    %1461 = vmatpush1.msra.mxu0 0.0
    %1462 = vmatprep.subr.mxu0 0.0
    %1463 = vmatpush1.msra.mxu0 0.0
    %1464 = vmatprep.subr.mxu0 0.0
    %1465 = vmatpush1.msra.mxu0 0.0
    %1466 = vmatprep.subr.mxu0 0.0
    %1467 = vmatpush1.msra.mxu0 0.0
    %1468 = vmatprep.subr.mxu0 0.0
    %1469 = vmatpush1.msra.mxu0 0.0
    %1470 = vmatprep.subr.mxu0 0.0
    %1471 = vmatpush1.msra.mxu0 0.0
    %1472 = vmatprep.subr.mxu0 0.0
    %1473 = vmatpush1.msra.mxu0 0.0
    %1474 = vmatprep.subr.mxu0 0.0
    %1475 = vmatpush1.msra.mxu0 0.0
    %1476 = vmatprep.subr.mxu0 0.0
    %1477 = vmatpush1.msra.mxu0 0.0
    %1478 = vmatprep.subr.mxu0 0.0
    %1479 = vmatpush1.msra.mxu0 0.0
    %1480 = vmatprep.subr.mxu0 0.0
    %1481 = vmatpush1.msra.mxu0 0.0
    %1482 = vmatprep.subr.mxu0 0.0
    %1483 = vmatpush1.msra.mxu0 0.0
    %1484 = vmatprep.subr.mxu0 0.0
    %1485 = vmatpush1.msra.mxu0 0.0
    %1486 = vmatprep.subr.mxu0 0.0
    %1487 = vmatpush1.msra.mxu0 0.0
    %1488 = vmatprep.subr.mxu0 0.0
    %1489 = vmatpush1.msra.mxu0 0.0
    %1490 = vmatprep.subr.mxu0 0.0
    %1491 = vmatpush1.msra.mxu0 0.0
    %1492 = vmatprep.subr.mxu0 0.0
    %1493 = vmatpush1.msra.mxu0 0.0
    %1494 = vmatprep.subr.mxu0 0.0
    %1495 = vmatpush1.msra.mxu0 0.0
    %1496 = vmatprep.subr.mxu0 0.0
    %1497 = vmatpush1.msra.mxu0 0.0
    %1498 = vmatprep.subr.mxu0 0.0
    %1499 = vmatpush1.msra.mxu0 0.0
    %1500 = vmatprep.subr.mxu0 0.0
    %1501 = vmatpush1.msra.mxu0 0.0
    %1502 = vmatprep.subr.mxu0 0.0
    %1503 = vmatpush1.msra.mxu0 0.0
    %1504 = vmatprep.subr.mxu0 0.0
    %1505 = vmatpush1.msra.mxu0 0.0
    %1506 = vmatprep.subr.mxu0 0.0
    %1507 = vmatpush1.msra.mxu0 0.0
    %1508 = vmatprep.subr.mxu0 0.0
    %1509 = vmatpush1.msra.mxu0 0.0
    %1510 = vmatprep.mubr.f32.mxu0 0.0
    %1511 = vmatmul.mubr.f32.gmra.mrb[0].mxu0 %v1444
    %v1512 = vpop.f32.mrb[0].mxu0
    %v1513 = vadd.f32 0.0, %v1512
    %v1514 = vpop.f32.mrb[0].mxu0
    %1515 = vdwg.mxu0
    %v1517 = vsel %vm216, %v1513, 0
    %1519 = vmatprep.subr.mxu0 0.0
    %1520 = vmatpush1.msra.mxu0 %v123
    %1521 = vmatprep.subr.mxu0 0.0
    %1522 = vmatpush1.msra.mxu0 0.0
    %1523 = vmatprep.subr.mxu0 0.0
    %1524 = vmatpush1.msra.mxu0 0.0
    %1525 = vmatprep.subr.mxu0 0.0
    %1526 = vmatpush1.msra.mxu0 0.0
    %1527 = vmatprep.subr.mxu0 0.0
    %1528 = vmatpush1.msra.mxu0 0.0
    %1529 = vmatprep.subr.mxu0 0.0
    %1530 = vmatpush1.msra.mxu0 0.0
    %1531 = vmatprep.subr.mxu0 0.0
    %1532 = vmatpush1.msra.mxu0 0.0
    %1533 = vmatprep.subr.mxu0 0.0
    %1534 = vmatpush1.msra.mxu0 0.0
    %1535 = vmatprep.subr.mxu0 0.0
    %1536 = vmatpush1.msra.mxu0 0.0
    %1537 = vmatprep.subr.mxu0 0.0
    %1538 = vmatpush1.msra.mxu0 0.0
    %1539 = vmatprep.subr.mxu0 0.0
    %1540 = vmatpush1.msra.mxu0 0.0
    %1541 = vmatprep.subr.mxu0 0.0
    %1542 = vmatpush1.msra.mxu0 0.0
    %1543 = vmatprep.subr.mxu0 0.0
    %1544 = vmatpush1.msra.mxu0 0.0
    %1545 = vmatprep.subr.mxu0 0.0
    %1546 = vmatpush1.msra.mxu0 0.0
    %1547 = vmatprep.subr.mxu0 0.0
    %1548 = vmatpush1.msra.mxu0 0.0
    %1549 = vmatprep.subr.mxu0 0.0
    %1550 = vmatpush1.msra.mxu0 0.0
    %1551 = vmatprep.subr.mxu0 0.0
    %1552 = vmatpush1.msra.mxu0 0.0
    %1553 = vmatprep.subr.mxu0 0.0
    %1554 = vmatpush1.msra.mxu0 0.0
    %1555 = vmatprep.subr.mxu0 0.0
    %1556 = vmatpush1.msra.mxu0 0.0
    %1557 = vmatprep.subr.mxu0 0.0
    %1558 = vmatpush1.msra.mxu0 0.0
    %1559 = vmatprep.subr.mxu0 0.0
    %1560 = vmatpush1.msra.mxu0 0.0
    %1561 = vmatprep.subr.mxu0 0.0
    %1562 = vmatpush1.msra.mxu0 0.0
    %1563 = vmatprep.subr.mxu0 0.0
    %1564 = vmatpush1.msra.mxu0 0.0
    %1565 = vmatprep.subr.mxu0 0.0
    %1566 = vmatpush1.msra.mxu0 0.0
    %1567 = vmatprep.subr.mxu0 0.0
    %1568 = vmatpush1.msra.mxu0 0.0
    %1569 = vmatprep.subr.mxu0 0.0
    %1570 = vmatpush1.msra.mxu0 0.0
    %1571 = vmatprep.subr.mxu0 0.0
    %1572 = vmatpush1.msra.mxu0 0.0
    %1573 = vmatprep.subr.mxu0 0.0
    %1574 = vmatpush1.msra.mxu0 0.0
    %1575 = vmatprep.subr.mxu0 0.0
    %1576 = vmatpush1.msra.mxu0 0.0
    %1577 = vmatprep.subr.mxu0 0.0
    %1578 = vmatpush1.msra.mxu0 0.0
    %1579 = vmatprep.subr.mxu0 0.0
    %1580 = vmatpush1.msra.mxu0 0.0
    %1581 = vmatprep.subr.mxu0 0.0
    %1582 = vmatpush1.msra.mxu0 0.0
    %1583 = vmatprep.mubr.f32.mxu0 0.0
    %1584 = vmatmul.mubr.f32.gmra.mrb[0].mxu0 %v1517
    %v1585 = vpop.f32.mrb[0].mxu0
    %v1586 = vadd.f32 0.0, %v1585
    %v1587 = vpop.f32.mrb[0].mxu0
    %1588 = vdwg.mxu0
    %v1590 = vsel %vm216, %v1346, 0
    %1592 = vmatprep.subr.mxu0 0.0
    %1593 = vmatpush1.msra.mxu0 %v122
    %1594 = vmatprep.subr.mxu0 0.0
    %1595 = vmatpush1.msra.mxu0 0.0
    %1596 = vmatprep.subr.mxu0 0.0
    %1597 = vmatpush1.msra.mxu0 0.0
    %1598 = vmatprep.subr.mxu0 0.0
    %1599 = vmatpush1.msra.mxu0 0.0
    %1600 = vmatprep.subr.mxu0 0.0
    %1601 = vmatpush1.msra.mxu0 0.0
    %1602 = vmatprep.subr.mxu0 0.0
    %1603 = vmatpush1.msra.mxu0 0.0
    %1604 = vmatprep.subr.mxu0 0.0
    %1605 = vmatpush1.msra.mxu0 0.0
    %1606 = vmatprep.subr.mxu0 0.0
    %1607 = vmatpush1.msra.mxu0 0.0
    %1608 = vmatprep.subr.mxu0 0.0
    %1609 = vmatpush1.msra.mxu0 0.0
    %1610 = vmatprep.subr.mxu0 0.0
    %1611 = vmatpush1.msra.mxu0 0.0
    %1612 = vmatprep.subr.mxu0 0.0
    %1613 = vmatpush1.msra.mxu0 0.0
    %1614 = vmatprep.subr.mxu0 0.0
    %1615 = vmatpush1.msra.mxu0 0.0
    %1616 = vmatprep.subr.mxu0 0.0
    %1617 = vmatpush1.msra.mxu0 0.0
    %1618 = vmatprep.subr.mxu0 0.0
    %1619 = vmatpush1.msra.mxu0 0.0
    %1620 = vmatprep.subr.mxu0 0.0
    %1621 = vmatpush1.msra.mxu0 0.0
    %1622 = vmatprep.subr.mxu0 0.0
    %1623 = vmatpush1.msra.mxu0 0.0
    %1624 = vmatprep.subr.mxu0 0.0
    %1625 = vmatpush1.msra.mxu0 0.0
    %1626 = vmatprep.subr.mxu0 0.0
    %1627 = vmatpush1.msra.mxu0 0.0
    %1628 = vmatprep.subr.mxu0 0.0
    %1629 = vmatpush1.msra.mxu0 0.0
    %1630 = vmatprep.subr.mxu0 0.0
    %1631 = vmatpush1.msra.mxu0 0.0
    %1632 = vmatprep.subr.mxu0 0.0
    %1633 = vmatpush1.msra.mxu0 0.0
    %1634 = vmatprep.subr.mxu0 0.0
    %1635 = vmatpush1.msra.mxu0 0.0
    %1636 = vmatprep.subr.mxu0 0.0
    %1637 = vmatpush1.msra.mxu0 0.0
    %1638 = vmatprep.subr.mxu0 0.0
    %1639 = vmatpush1.msra.mxu0 0.0
    %1640 = vmatprep.subr.mxu0 0.0
    %1641 = vmatpush1.msra.mxu0 0.0
    %1642 = vmatprep.subr.mxu0 0.0
    %1643 = vmatpush1.msra.mxu0 0.0
    %1644 = vmatprep.subr.mxu0 0.0
    %1645 = vmatpush1.msra.mxu0 0.0
    %1646 = vmatprep.subr.mxu0 0.0
    %1647 = vmatpush1.msra.mxu0 0.0
    %1648 = vmatprep.subr.mxu0 0.0
    %1649 = vmatpush1.msra.mxu0 0.0
    %1650 = vmatprep.subr.mxu0 0.0
    %1651 = vmatpush1.msra.mxu0 0.0
    %1652 = vmatprep.subr.mxu0 0.0
    %1653 = vmatpush1.msra.mxu0 0.0
    %1654 = vmatprep.subr.mxu0 0.0
    %1655 = vmatpush1.msra.mxu0 0.0
    %1656 = vmatprep.mubr.f32.mxu0 0.0
    %1657 = vmatmul.mubr.f32.gmra.mrb[0].mxu0 %v1590
    %v1658 = vpop.f32.mrb[0].mxu0
    %v1659 = vadd.f32 %v1586, %v1658
    %v1660 = vpop.f32.mrb[0].mxu0
    %1661 = vdwg.mxu0
    %1662 = vrot.lane.b32.xlu0 %v210, 112
    %v1663 = vpop.permute.xlu0 %1662
    %1664 = vrot.lane.b32.xlu0 %v210, 80
    %v1665 = vpop.permute.xlu0 %1664
    %v1666 = vsel %vm216, %v1663, 0
    %v1668 = vsel %vm216, %v1665, 0
    %1670 = vmatprep.subr.mxu0 0.0
    %1671 = vmatpush1.xpose.msra.mxu0 %v1668
    %1672 = vmatprep.subr.mxu0 0.0
    %1673 = vmatpush1.xpose.msra.mxu0 0.0
    %1674 = vmatprep.subr.mxu0 0.0
    %1675 = vmatpush1.xpose.msra.mxu0 0.0
    %1676 = vmatprep.subr.mxu0 0.0
    %1677 = vmatpush1.xpose.msra.mxu0 0.0
    %1678 = vmatprep.subr.mxu0 0.0
    %1679 = vmatpush1.xpose.msra.mxu0 0.0
    %1680 = vmatprep.subr.mxu0 0.0
    %1681 = vmatpush1.xpose.msra.mxu0 0.0
    %1682 = vmatprep.subr.mxu0 0.0
    %1683 = vmatpush1.xpose.msra.mxu0 0.0
    %1684 = vmatprep.subr.mxu0 0.0
    %1685 = vmatpush1.xpose.msra.mxu0 0.0
    %1686 = vmatprep.subr.mxu0 0.0
    %1687 = vmatpush1.xpose.msra.mxu0 0.0
    %1688 = vmatprep.subr.mxu0 0.0
    %1689 = vmatpush1.xpose.msra.mxu0 0.0
    %1690 = vmatprep.subr.mxu0 0.0
    %1691 = vmatpush1.xpose.msra.mxu0 0.0
    %1692 = vmatprep.subr.mxu0 0.0
    %1693 = vmatpush1.xpose.msra.mxu0 0.0
    %1694 = vmatprep.subr.mxu0 0.0
    %1695 = vmatpush1.xpose.msra.mxu0 0.0
    %1696 = vmatprep.subr.mxu0 0.0
    %1697 = vmatpush1.xpose.msra.mxu0 0.0
    %1698 = vmatprep.subr.mxu0 0.0
    %1699 = vmatpush1.xpose.msra.mxu0 0.0
    %1700 = vmatprep.subr.mxu0 0.0
    %1701 = vmatpush1.xpose.msra.mxu0 0.0
    %1702 = vmatprep.subr.mxu0 0.0
    %1703 = vmatpush1.xpose.msra.mxu0 0.0
    %1704 = vmatprep.subr.mxu0 0.0
    %1705 = vmatpush1.xpose.msra.mxu0 0.0
    %1706 = vmatprep.subr.mxu0 0.0
    %1707 = vmatpush1.xpose.msra.mxu0 0.0
    %1708 = vmatprep.subr.mxu0 0.0
    %1709 = vmatpush1.xpose.msra.mxu0 0.0
    %1710 = vmatprep.subr.mxu0 0.0
    %1711 = vmatpush1.xpose.msra.mxu0 0.0
    %1712 = vmatprep.subr.mxu0 0.0
    %1713 = vmatpush1.xpose.msra.mxu0 0.0
    %1714 = vmatprep.subr.mxu0 0.0
    %1715 = vmatpush1.xpose.msra.mxu0 0.0
    %1716 = vmatprep.subr.mxu0 0.0
    %1717 = vmatpush1.xpose.msra.mxu0 0.0
    %1718 = vmatprep.subr.mxu0 0.0
    %1719 = vmatpush1.xpose.msra.mxu0 0.0
    %1720 = vmatprep.subr.mxu0 0.0
    %1721 = vmatpush1.xpose.msra.mxu0 0.0
    %1722 = vmatprep.subr.mxu0 0.0
    %1723 = vmatpush1.xpose.msra.mxu0 0.0
    %1724 = vmatprep.subr.mxu0 0.0
    %1725 = vmatpush1.xpose.msra.mxu0 0.0
    %1726 = vmatprep.subr.mxu0 0.0
    %1727 = vmatpush1.xpose.msra.mxu0 0.0
    %1728 = vmatprep.subr.mxu0 0.0
    %1729 = vmatpush1.xpose.msra.mxu0 0.0
    %1730 = vmatprep.subr.mxu0 0.0
    %1731 = vmatpush1.xpose.msra.mxu0 0.0
    %1732 = vmatprep.subr.mxu0 0.0
    %1733 = vmatpush1.xpose.msra.mxu0 0.0
    %1734 = vmatprep.mubr.f32.mxu0 0.0
    %1735 = vmatmul.mubr.f32.gmra.mrb[0].mxu0 %v1666
    %v1736 = vpop.f32.mrb[0].mxu0
    %v1737 = vadd.f32 0.0, %v1736
    %v1738 = vpop.f32.mrb[0].mxu0
    %1739 = vdwg.mxu0
    %v1740 = vmul.f32 %v1737, 0.35355338
    %v1741 = vadd.f32 %v1740, %v1260
    %v1742 = vsel %vm216, %v1741, -inf
    %1743 = vmax.xlane.f32.xlu0 %v1742
    %v1744 = vpop.xlane.xlu0 %1743
    %v1745 = vsub.f32 %v1741, %v1744
    %v1746 = vmul.f32 %v1745, 1.442695
    %v1747 = vpow.pop %v1746
    %v1748 = vsel %vm216, %v1747, 0.0
    %1749 = vadd.xlane.f32.xlu0 %v1748
    %v1750 = vpop.xlane.xlu0 %1749
    %v1751 = vrcp.pop %v1750
    %v1752 = vmul.f32 %v1747, %v1751
    %1753 = vrot.lane.b32.xlu0 %v210, 48
    %v1754 = vpop.permute.xlu0 %1753
    %v1757 = vsel %vm216, %v1752, 0
    %1759 = vmatprep.subr.mxu0 0.0
    %1760 = vmatpush1.msra.mxu0 %v1754
    %1761 = vmatprep.subr.mxu0 0.0
    %1762 = vmatpush1.msra.mxu0 0.0
    %1763 = vmatprep.subr.mxu0 0.0
    %1764 = vmatpush1.msra.mxu0 0.0
    %1765 = vmatprep.subr.mxu0 0.0
    %1766 = vmatpush1.msra.mxu0 0.0
    %1767 = vmatprep.subr.mxu0 0.0
    %1768 = vmatpush1.msra.mxu0 0.0
    %1769 = vmatprep.subr.mxu0 0.0
    %1770 = vmatpush1.msra.mxu0 0.0
    %1771 = vmatprep.subr.mxu0 0.0
    %1772 = vmatpush1.msra.mxu0 0.0
    %1773 = vmatprep.subr.mxu0 0.0
    %1774 = vmatpush1.msra.mxu0 0.0
    %1775 = vmatprep.subr.mxu0 0.0
    %1776 = vmatpush1.msra.mxu0 0.0
    %1777 = vmatprep.subr.mxu0 0.0
    %1778 = vmatpush1.msra.mxu0 0.0
    %1779 = vmatprep.subr.mxu0 0.0
    %1780 = vmatpush1.msra.mxu0 0.0
    %1781 = vmatprep.subr.mxu0 0.0
    %1782 = vmatpush1.msra.mxu0 0.0
    %1783 = vmatprep.subr.mxu0 0.0
    %1784 = vmatpush1.msra.mxu0 0.0
    %1785 = vmatprep.subr.mxu0 0.0
    %1786 = vmatpush1.msra.mxu0 0.0
    %1787 = vmatprep.subr.mxu0 0.0
    %1788 = vmatpush1.msra.mxu0 0.0
    %1789 = vmatprep.subr.mxu0 0.0
    %1790 = vmatpush1.msra.mxu0 0.0
    %1791 = vmatprep.subr.mxu0 0.0
    %1792 = vmatpush1.msra.mxu0 0.0
    %1793 = vmatprep.subr.mxu0 0.0
    %1794 = vmatpush1.msra.mxu0 0.0
    %1795 = vmatprep.subr.mxu0 0.0
    %1796 = vmatpush1.msra.mxu0 0.0
    %1797 = vmatprep.subr.mxu0 0.0
    %1798 = vmatpush1.msra.mxu0 0.0
    %1799 = vmatprep.subr.mxu0 0.0
    %1800 = vmatpush1.msra.mxu0 0.0
    %1801 = vmatprep.subr.mxu0 0.0
    %1802 = vmatpush1.msra.mxu0 0.0
    %1803 = vmatprep.subr.mxu0 0.0
    %1804 = vmatpush1.msra.mxu0 0.0
    %1805 = vmatprep.subr.mxu0 0.0
    %1806 = vmatpush1.msra.mxu0 0.0
    %1807 = vmatprep.subr.mxu0 0.0
    %1808 = vmatpush1.msra.mxu0 0.0
    %1809 = vmatprep.subr.mxu0 0.0
    %1810 = vmatpush1.msra.mxu0 0.0
    %1811 = vmatprep.subr.mxu0 0.0
    %1812 = vmatpush1.msra.mxu0 0.0
    %1813 = vmatprep.subr.mxu0 0.0
    %1814 = vmatpush1.msra.mxu0 0.0
    %1815 = vmatprep.subr.mxu0 0.0
    %1816 = vmatpush1.msra.mxu0 0.0
    %1817 = vmatprep.subr.mxu0 0.0
    %1818 = vmatpush1.msra.mxu0 0.0
    %1819 = vmatprep.subr.mxu0 0.0
    %1820 = vmatpush1.msra.mxu0 0.0
    %1821 = vmatprep.subr.mxu0 0.0
    %1822 = vmatpush1.msra.mxu0 0.0
    %1823 = vmatprep.mubr.f32.mxu0 0.0
    %1824 = vmatmul.mubr.f32.gmra.mrb[0].mxu0 %v1757
    %v1825 = vpop.f32.mrb[0].mxu0
    %v1826 = vadd.f32 0.0, %v1825
    %v1827 = vpop.f32.mrb[0].mxu0
    %1828 = vdwg.mxu0
    %v1830 = vsel %vm216, %v1826, 0
    %1832 = vmatprep.subr.mxu0 0.0
    %1833 = vmatpush1.msra.mxu0 %v124
    %1834 = vmatprep.subr.mxu0 0.0
    %1835 = vmatpush1.msra.mxu0 0.0
    %1836 = vmatprep.subr.mxu0 0.0
    %1837 = vmatpush1.msra.mxu0 0.0
    %1838 = vmatprep.subr.mxu0 0.0
    %1839 = vmatpush1.msra.mxu0 0.0
    %1840 = vmatprep.subr.mxu0 0.0
    %1841 = vmatpush1.msra.mxu0 0.0
    %1842 = vmatprep.subr.mxu0 0.0
    %1843 = vmatpush1.msra.mxu0 0.0
    %1844 = vmatprep.subr.mxu0 0.0
    %1845 = vmatpush1.msra.mxu0 0.0
    %1846 = vmatprep.subr.mxu0 0.0
    %1847 = vmatpush1.msra.mxu0 0.0
    %1848 = vmatprep.subr.mxu0 0.0
    %1849 = vmatpush1.msra.mxu0 0.0
    %1850 = vmatprep.subr.mxu0 0.0
    %1851 = vmatpush1.msra.mxu0 0.0
    %1852 = vmatprep.subr.mxu0 0.0
    %1853 = vmatpush1.msra.mxu0 0.0
    %1854 = vmatprep.subr.mxu0 0.0
    %1855 = vmatpush1.msra.mxu0 0.0
    %1856 = vmatprep.subr.mxu0 0.0
    %1857 = vmatpush1.msra.mxu0 0.0
    %1858 = vmatprep.subr.mxu0 0.0
    %1859 = vmatpush1.msra.mxu0 0.0
    %1860 = vmatprep.subr.mxu0 0.0
    %1861 = vmatpush1.msra.mxu0 0.0
    %1862 = vmatprep.subr.mxu0 0.0
    %1863 = vmatpush1.msra.mxu0 0.0
    %1864 = vmatprep.subr.mxu0 0.0
    %1865 = vmatpush1.msra.mxu0 0.0
    %1866 = vmatprep.subr.mxu0 0.0
    %1867 = vmatpush1.msra.mxu0 0.0
    %1868 = vmatprep.subr.mxu0 0.0
    %1869 = vmatpush1.msra.mxu0 0.0
    %1870 = vmatprep.subr.mxu0 0.0
    %1871 = vmatpush1.msra.mxu0 0.0
    %1872 = vmatprep.subr.mxu0 0.0
    %1873 = vmatpush1.msra.mxu0 0.0
    %1874 = vmatprep.subr.mxu0 0.0
    %1875 = vmatpush1.msra.mxu0 0.0
    %1876 = vmatprep.subr.mxu0 0.0
    %1877 = vmatpush1.msra.mxu0 0.0
    %1878 = vmatprep.subr.mxu0 0.0
    %1879 = vmatpush1.msra.mxu0 0.0
    %1880 = vmatprep.subr.mxu0 0.0
    %1881 = vmatpush1.msra.mxu0 0.0
    %1882 = vmatprep.subr.mxu0 0.0
    %1883 = vmatpush1.msra.mxu0 0.0
    %1884 = vmatprep.subr.mxu0 0.0
    %1885 = vmatpush1.msra.mxu0 0.0
    %1886 = vmatprep.subr.mxu0 0.0
    %1887 = vmatpush1.msra.mxu0 0.0
    %1888 = vmatprep.subr.mxu0 0.0
    %1889 = vmatpush1.msra.mxu0 0.0
    %1890 = vmatprep.subr.mxu0 0.0
    %1891 = vmatpush1.msra.mxu0 0.0
    %1892 = vmatprep.subr.mxu0 0.0
    %1893 = vmatpush1.msra.mxu0 0.0
    %1894 = vmatprep.subr.mxu0 0.0
    %1895 = vmatpush1.msra.mxu0 0.0
    %1896 = vmatprep.mubr.f32.mxu0 0.0
    %1897 = vmatmul.mubr.f32.gmra.mrb[0].mxu0 %v1830
    %v1898 = vpop.f32.mrb[0].mxu0
    %v1899 = vadd.f32 0.0, %v1898
    %v1900 = vpop.f32.mrb[0].mxu0
    %1901 = vdwg.mxu0
    %v1902 = vadd.f32 %v1659, %v1899
    %1903 = vrot.lane.b32.xlu0 %v210, 104
    %v1904 = vpop.permute.xlu0 %1903
    %1905 = vrot.lane.b32.xlu0 %v210, 72
    %v1906 = vpop.permute.xlu0 %1905
    %v1907 = vsel %vm216, %v1904, 0
    %v1909 = vsel %vm216, %v1906, 0
    %1911 = vmatprep.subr.mxu0 0.0
    %1912 = vmatpush1.xpose.msra.mxu0 %v1909
    %1913 = vmatprep.subr.mxu0 0.0
    %1914 = vmatpush1.xpose.msra.mxu0 0.0
    %1915 = vmatprep.subr.mxu0 0.0
    %1916 = vmatpush1.xpose.msra.mxu0 0.0
    %1917 = vmatprep.subr.mxu0 0.0
    %1918 = vmatpush1.xpose.msra.mxu0 0.0
    %1919 = vmatprep.subr.mxu0 0.0
    %1920 = vmatpush1.xpose.msra.mxu0 0.0
    %1921 = vmatprep.subr.mxu0 0.0
    %1922 = vmatpush1.xpose.msra.mxu0 0.0
    %1923 = vmatprep.subr.mxu0 0.0
    %1924 = vmatpush1.xpose.msra.mxu0 0.0
    %1925 = vmatprep.subr.mxu0 0.0
    %1926 = vmatpush1.xpose.msra.mxu0 0.0
    %1927 = vmatprep.subr.mxu0 0.0
    %1928 = vmatpush1.xpose.msra.mxu0 0.0
    %1929 = vmatprep.subr.mxu0 0.0
    %1930 = vmatpush1.xpose.msra.mxu0 0.0
    %1931 = vmatprep.subr.mxu0 0.0
    %1932 = vmatpush1.xpose.msra.mxu0 0.0
    %1933 = vmatprep.subr.mxu0 0.0
    %1934 = vmatpush1.xpose.msra.mxu0 0.0
    %1935 = vmatprep.subr.mxu0 0.0
    %1936 = vmatpush1.xpose.msra.mxu0 0.0
    %1937 = vmatprep.subr.mxu0 0.0
    %1938 = vmatpush1.xpose.msra.mxu0 0.0
    %1939 = vmatprep.subr.mxu0 0.0
    %1940 = vmatpush1.xpose.msra.mxu0 0.0
    %1941 = vmatprep.subr.mxu0 0.0
    %1942 = vmatpush1.xpose.msra.mxu0 0.0
    %1943 = vmatprep.subr.mxu0 0.0
    %1944 = vmatpush1.xpose.msra.mxu0 0.0
    %1945 = vmatprep.subr.mxu0 0.0
    %1946 = vmatpush1.xpose.msra.mxu0 0.0
    %1947 = vmatprep.subr.mxu0 0.0
    %1948 = vmatpush1.xpose.msra.mxu0 0.0
    %1949 = vmatprep.subr.mxu0 0.0
    %1950 = vmatpush1.xpose.msra.mxu0 0.0
    %1951 = vmatprep.subr.mxu0 0.0
    %1952 = vmatpush1.xpose.msra.mxu0 0.0
    %1953 = vmatprep.subr.mxu0 0.0
    %1954 = vmatpush1.xpose.msra.mxu0 0.0
    %1955 = vmatprep.subr.mxu0 0.0
    %1956 = vmatpush1.xpose.msra.mxu0 0.0
    %1957 = vmatprep.subr.mxu0 0.0
    %1958 = vmatpush1.xpose.msra.mxu0 0.0
    %1959 = vmatprep.subr.mxu0 0.0
    %1960 = vmatpush1.xpose.msra.mxu0 0.0
    %1961 = vmatprep.subr.mxu0 0.0
    %1962 = vmatpush1.xpose.msra.mxu0 0.0
    %1963 = vmatprep.subr.mxu0 0.0
    %1964 = vmatpush1.xpose.msra.mxu0 0.0
    %1965 = vmatprep.subr.mxu0 0.0
    %1966 = vmatpush1.xpose.msra.mxu0 0.0
    %1967 = vmatprep.subr.mxu0 0.0
    %1968 = vmatpush1.xpose.msra.mxu0 0.0
    %1969 = vmatprep.subr.mxu0 0.0
    %1970 = vmatpush1.xpose.msra.mxu0 0.0
    %1971 = vmatprep.subr.mxu0 0.0
    %1972 = vmatpush1.xpose.msra.mxu0 0.0
    %1973 = vmatprep.subr.mxu0 0.0
    %1974 = vmatpush1.xpose.msra.mxu0 0.0
    %1975 = vmatprep.mubr.f32.mxu0 0.0
    %1976 = vmatmul.mubr.f32.gmra.mrb[0].mxu0 %v1907
    %v1977 = vpop.f32.mrb[0].mxu0
    %v1978 = vadd.f32 0.0, %v1977
    %v1979 = vpop.f32.mrb[0].mxu0
    %1980 = vdwg.mxu0
    %v1981 = vmul.f32 %v1978, 0.35355338
    %v1982 = vadd.f32 %v1981, %v1260
    %v1983 = vsel %vm216, %v1982, -inf
    %1984 = vmax.xlane.f32.xlu0 %v1983
    %v1985 = vpop.xlane.xlu0 %1984
    %v1986 = vsub.f32 %v1982, %v1985
    %v1987 = vmul.f32 %v1986, 1.442695
    %v1988 = vpow.pop %v1987
    %v1989 = vsel %vm216, %v1988, 0.0
    %1990 = vadd.xlane.f32.xlu0 %v1989
    %v1991 = vpop.xlane.xlu0 %1990
    %v1992 = vrcp.pop %v1991
    %v1993 = vmul.f32 %v1988, %v1992
    %1994 = vrot.lane.b32.xlu0 %v210, 40
    %v1995 = vpop.permute.xlu0 %1994
    %v1998 = vsel %vm216, %v1993, 0
    %2000 = vmatprep.subr.mxu0 0.0
    %2001 = vmatpush1.msra.mxu0 %v1995
    %2002 = vmatprep.subr.mxu0 0.0
    %2003 = vmatpush1.msra.mxu0 0.0
    %2004 = vmatprep.subr.mxu0 0.0
    %2005 = vmatpush1.msra.mxu0 0.0
    %2006 = vmatprep.subr.mxu0 0.0
    %2007 = vmatpush1.msra.mxu0 0.0
    %2008 = vmatprep.subr.mxu0 0.0
    %2009 = vmatpush1.msra.mxu0 0.0
    %2010 = vmatprep.subr.mxu0 0.0
    %2011 = vmatpush1.msra.mxu0 0.0
    %2012 = vmatprep.subr.mxu0 0.0
    %2013 = vmatpush1.msra.mxu0 0.0
    %2014 = vmatprep.subr.mxu0 0.0
    %2015 = vmatpush1.msra.mxu0 0.0
    %2016 = vmatprep.subr.mxu0 0.0
    %2017 = vmatpush1.msra.mxu0 0.0
    %2018 = vmatprep.subr.mxu0 0.0
    %2019 = vmatpush1.msra.mxu0 0.0
    %2020 = vmatprep.subr.mxu0 0.0
    %2021 = vmatpush1.msra.mxu0 0.0
    %2022 = vmatprep.subr.mxu0 0.0
    %2023 = vmatpush1.msra.mxu0 0.0
    %2024 = vmatprep.subr.mxu0 0.0
    %2025 = vmatpush1.msra.mxu0 0.0
    %2026 = vmatprep.subr.mxu0 0.0
    %2027 = vmatpush1.msra.mxu0 0.0
    %2028 = vmatprep.subr.mxu0 0.0
    %2029 = vmatpush1.msra.mxu0 0.0
    %2030 = vmatprep.subr.mxu0 0.0
    %2031 = vmatpush1.msra.mxu0 0.0
    %2032 = vmatprep.subr.mxu0 0.0
    %2033 = vmatpush1.msra.mxu0 0.0
    %2034 = vmatprep.subr.mxu0 0.0
    %2035 = vmatpush1.msra.mxu0 0.0
    %2036 = vmatprep.subr.mxu0 0.0
    %2037 = vmatpush1.msra.mxu0 0.0
    %2038 = vmatprep.subr.mxu0 0.0
    %2039 = vmatpush1.msra.mxu0 0.0
    %2040 = vmatprep.subr.mxu0 0.0
    %2041 = vmatpush1.msra.mxu0 0.0
    %2042 = vmatprep.subr.mxu0 0.0
    %2043 = vmatpush1.msra.mxu0 0.0
    %2044 = vmatprep.subr.mxu0 0.0
    %2045 = vmatpush1.msra.mxu0 0.0
    %2046 = vmatprep.subr.mxu0 0.0
    %2047 = vmatpush1.msra.mxu0 0.0
    %2048 = vmatprep.subr.mxu0 0.0
    %2049 = vmatpush1.msra.mxu0 0.0
    %2050 = vmatprep.subr.mxu0 0.0
    %2051 = vmatpush1.msra.mxu0 0.0
    %2052 = vmatprep.subr.mxu0 0.0
    %2053 = vmatpush1.msra.mxu0 0.0
    %2054 = vmatprep.subr.mxu0 0.0
    %2055 = vmatpush1.msra.mxu0 0.0
    %2056 = vmatprep.subr.mxu0 0.0
    %2057 = vmatpush1.msra.mxu0 0.0
    %2058 = vmatprep.subr.mxu0 0.0
    %2059 = vmatpush1.msra.mxu0 0.0
    %2060 = vmatprep.subr.mxu0 0.0
    %2061 = vmatpush1.msra.mxu0 0.0
    %2062 = vmatprep.subr.mxu0 0.0
    %2063 = vmatpush1.msra.mxu0 0.0
    %2064 = vmatprep.mubr.f32.mxu0 0.0
    %2065 = vmatmul.mubr.f32.gmra.mrb[0].mxu0 %v1998
    %v2066 = vpop.f32.mrb[0].mxu0
    %v2067 = vadd.f32 0.0, %v2066
    %v2068 = vpop.f32.mrb[0].mxu0
    %2069 = vdwg.mxu0
    %v2071 = vsel %vm216, %v2067, 0
    %2073 = vmatprep.subr.mxu0 0.0
    %2074 = vmatpush1.msra.mxu0 %v125
    %2075 = vmatprep.subr.mxu0 0.0
    %2076 = vmatpush1.msra.mxu0 0.0
    %2077 = vmatprep.subr.mxu0 0.0
    %2078 = vmatpush1.msra.mxu0 0.0
    %2079 = vmatprep.subr.mxu0 0.0
    %2080 = vmatpush1.msra.mxu0 0.0
    %2081 = vmatprep.subr.mxu0 0.0
    %2082 = vmatpush1.msra.mxu0 0.0
    %2083 = vmatprep.subr.mxu0 0.0
    %2084 = vmatpush1.msra.mxu0 0.0
    %2085 = vmatprep.subr.mxu0 0.0
    %2086 = vmatpush1.msra.mxu0 0.0
    %2087 = vmatprep.subr.mxu0 0.0
    %2088 = vmatpush1.msra.mxu0 0.0
    %2089 = vmatprep.subr.mxu0 0.0
    %2090 = vmatpush1.msra.mxu0 0.0
    %2091 = vmatprep.subr.mxu0 0.0
    %2092 = vmatpush1.msra.mxu0 0.0
    %2093 = vmatprep.subr.mxu0 0.0
    %2094 = vmatpush1.msra.mxu0 0.0
    %2095 = vmatprep.subr.mxu0 0.0
    %2096 = vmatpush1.msra.mxu0 0.0
    %2097 = vmatprep.subr.mxu0 0.0
    %2098 = vmatpush1.msra.mxu0 0.0
    %2099 = vmatprep.subr.mxu0 0.0
    %2100 = vmatpush1.msra.mxu0 0.0
    %2101 = vmatprep.subr.mxu0 0.0
    %2102 = vmatpush1.msra.mxu0 0.0
    %2103 = vmatprep.subr.mxu0 0.0
    %2104 = vmatpush1.msra.mxu0 0.0
    %2105 = vmatprep.subr.mxu0 0.0
    %2106 = vmatpush1.msra.mxu0 0.0
    %2107 = vmatprep.subr.mxu0 0.0
    %2108 = vmatpush1.msra.mxu0 0.0
    %2109 = vmatprep.subr.mxu0 0.0
    %2110 = vmatpush1.msra.mxu0 0.0
    %2111 = vmatprep.subr.mxu0 0.0
    %2112 = vmatpush1.msra.mxu0 0.0
    %2113 = vmatprep.subr.mxu0 0.0
    %2114 = vmatpush1.msra.mxu0 0.0
    %2115 = vmatprep.subr.mxu0 0.0
    %2116 = vmatpush1.msra.mxu0 0.0
    %2117 = vmatprep.subr.mxu0 0.0
    %2118 = vmatpush1.msra.mxu0 0.0
    %2119 = vmatprep.subr.mxu0 0.0
    %2120 = vmatpush1.msra.mxu0 0.0
    %2121 = vmatprep.subr.mxu0 0.0
    %2122 = vmatpush1.msra.mxu0 0.0
    %2123 = vmatprep.subr.mxu0 0.0
    %2124 = vmatpush1.msra.mxu0 0.0
    %2125 = vmatprep.subr.mxu0 0.0
    %2126 = vmatpush1.msra.mxu0 0.0
    %2127 = vmatprep.subr.mxu0 0.0
    %2128 = vmatpush1.msra.mxu0 0.0
    %2129 = vmatprep.subr.mxu0 0.0
    %2130 = vmatpush1.msra.mxu0 0.0
    %2131 = vmatprep.subr.mxu0 0.0
    %2132 = vmatpush1.msra.mxu0 0.0
    %2133 = vmatprep.subr.mxu0 0.0
    %2134 = vmatpush1.msra.mxu0 0.0
    %2135 = vmatprep.subr.mxu0 0.0
    %2136 = vmatpush1.msra.mxu0 0.0
    %2137 = vmatprep.mubr.f32.mxu0 0.0
    %2138 = vmatmul.mubr.f32.gmra.mrb[0].mxu0 %v2071
    %v2139 = vpop.f32.mrb[0].mxu0
    %v2140 = vadd.f32 0.0, %v2139
    %v2141 = vpop.f32.mrb[0].mxu0
    %2142 = vdwg.mxu0
    %v2143 = vadd.f32 %v1902, %v2140
    %v2144 = vld [vmem:[%s7] sm:$0x1]
    %v2146 = vlaneseq
    %v2147 = vshrl.u32 %v2146, 7
    %v2148 = vsub.s32 0, %v2147
    %v2149 = vrot.slane %v2144, %v2148
    %v2151 = vadd.f32 %v1178, %v2149
    %v2152 = vadd.f32 %v2143, %v2149
    %v2153 = vadd.f32 %v112, %v2151
    %v2154 = vadd.f32 %v113, %v2152
    %v2155 = vld [vmem:[%s8] sm:$0x1]
    %v2156 = vld [vmem:[%s9] sm:$0x1]
    %v2157 = vsel %vm70, %v2153, 0.0
    %2158 = vadd.xlane.f32.xlu0 %v2157
    %v2159 = vpop.xlane.xlu0 %2158
    %v2160 = vsel %vm70, %v2154, 0.0
    %2161 = vadd.xlane.f32.xlu0 %v2160
    %v2162 = vpop.xlane.xlu0 %2161
    %v2163 = vmul.f32 %v2159, %v77
    %v2164 = vmul.f32 %v2162, %v77
    %v2165 = vsub.f32 %v2153, %v2163
    %v2166 = vsub.f32 %v2154, %v2164
    %v2167 = vmul.f32 %v2165, %v2165
    %v2168 = vmul.f32 %v2166, %v2166
    %v2169 = vsel %vm70, %v2167, 0.0
    %2170 = vadd.xlane.f32.xlu0 %v2169
    %v2171 = vpop.xlane.xlu0 %2170
    %v2172 = vsel %vm70, %v2168, 0.0
    %2173 = vadd.xlane.f32.xlu0 %v2172
    %v2174 = vpop.xlane.xlu0 %2173
    %v2175 = vmul.f32 %v2171, %v77
    %v2176 = vmul.f32 %v2174, %v77
    %v2177 = vadd.f32 %v2175, 1e-12
    %v2178 = vadd.f32 %v2176, 1e-12
    %v2179 = vrsqrt.pop %v2177
    %v2180 = vrsqrt.pop %v2178
    %v2181 = vmul.f32 %v2165, %v2179
    %v2182 = vmul.f32 %v2166, %v2180
    %v2184 = vlaneseq
    %v2185 = vshrl.u32 %v2184, 7
    %v2186 = vsub.s32 0, %v2185
    %v2187 = vrot.slane %v2155, %v2186
    %v2189 = vmul.f32 %v2181, %v2187
    %v2190 = vmul.f32 %v2182, %v2187
    %v2192 = vlaneseq
    %v2193 = vshrl.u32 %v2192, 7
    %v2194 = vsub.s32 0, %v2193
    %v2195 = vrot.slane %v2156, %v2194
    %v2197 = vadd.f32 %v2189, %v2195
    %v2198 = vadd.f32 %v2190, %v2195
    %v2199 = vld [vmem:[%s10] sm:$0xff]
    %v2200 = vld [vmem:[%s10 + $0x8] sm:$0xff]
    %v2201 = vld [vmem:[%s10 + $0x10] sm:$0xff]
    %v2202 = vld [vmem:[%s10 + $0x18] sm:$0xff]
    %v2203 = vld [vmem:[%s11] sm:$0x1]
    %v2205 = vlaneseq
    %v2206 = vshrl.u32 %v2205, 7
    %v2207 = vsub.s32 0, %v2206
    %v2208 = vrot.slane %v2203, %v2207
    %v2211 = vsel %vm70, %v2197, 0
    %v2214 = vsel %vm70, %v2198, 0
    %2216 = vmatprep.subr.mxu0 0.0
    %2217 = vmatpush1.msra.mxu0 %v2199
    %2218 = vmatprep.subr.mxu0 0.0
    %2219 = vmatpush1.msra.mxu0 %v2200
    %2220 = vmatprep.subr.mxu0 0.0
    %2221 = vmatpush1.msra.mxu0 %v2201
    %2222 = vmatprep.subr.mxu0 0.0
    %2223 = vmatpush1.msra.mxu0 %v2202
    %2224 = vmatprep.subr.mxu0 0.0
    %2225 = vmatpush1.msra.mxu0 0.0
    %2226 = vmatprep.subr.mxu0 0.0
    %2227 = vmatpush1.msra.mxu0 0.0
    %2228 = vmatprep.subr.mxu0 0.0
    %2229 = vmatpush1.msra.mxu0 0.0
    %2230 = vmatprep.subr.mxu0 0.0
    %2231 = vmatpush1.msra.mxu0 0.0
    %2232 = vmatprep.subr.mxu0 0.0
    %2233 = vmatpush1.msra.mxu0 0.0
    %2234 = vmatprep.subr.mxu0 0.0
    %2235 = vmatpush1.msra.mxu0 0.0
    %2236 = vmatprep.subr.mxu0 0.0
    %2237 = vmatpush1.msra.mxu0 0.0
    %2238 = vmatprep.subr.mxu0 0.0
    %2239 = vmatpush1.msra.mxu0 0.0
    %2240 = vmatprep.subr.mxu0 0.0
    %2241 = vmatpush1.msra.mxu0 0.0
    %2242 = vmatprep.subr.mxu0 0.0
    %2243 = vmatpush1.msra.mxu0 0.0
    %2244 = vmatprep.subr.mxu0 0.0
    %2245 = vmatpush1.msra.mxu0 0.0
    %2246 = vmatprep.subr.mxu0 0.0
    %2247 = vmatpush1.msra.mxu0 0.0
    %2248 = vmatprep.subr.mxu0 0.0
    %2249 = vmatpush1.msra.mxu0 0.0
    %2250 = vmatprep.subr.mxu0 0.0
    %2251 = vmatpush1.msra.mxu0 0.0
    %2252 = vmatprep.subr.mxu0 0.0
    %2253 = vmatpush1.msra.mxu0 0.0
    %2254 = vmatprep.subr.mxu0 0.0
    %2255 = vmatpush1.msra.mxu0 0.0
    %2256 = vmatprep.subr.mxu0 0.0
    %2257 = vmatpush1.msra.mxu0 0.0
    %2258 = vmatprep.subr.mxu0 0.0
    %2259 = vmatpush1.msra.mxu0 0.0
    %2260 = vmatprep.subr.mxu0 0.0
    %2261 = vmatpush1.msra.mxu0 0.0
    %2262 = vmatprep.subr.mxu0 0.0
    %2263 = vmatpush1.msra.mxu0 0.0
    %2264 = vmatprep.subr.mxu0 0.0
    %2265 = vmatpush1.msra.mxu0 0.0
    %2266 = vmatprep.subr.mxu0 0.0
    %2267 = vmatpush1.msra.mxu0 0.0
    %2268 = vmatprep.subr.mxu0 0.0
    %2269 = vmatpush1.msra.mxu0 0.0
    %2270 = vmatprep.subr.mxu0 0.0
    %2271 = vmatpush1.msra.mxu0 0.0
    %2272 = vmatprep.subr.mxu0 0.0
    %2273 = vmatpush1.msra.mxu0 0.0
    %2274 = vmatprep.subr.mxu0 0.0
    %2275 = vmatpush1.msra.mxu0 0.0
    %2276 = vmatprep.subr.mxu0 0.0
    %2277 = vmatpush1.msra.mxu0 0.0
    %2278 = vmatprep.subr.mxu0 0.0
    %2279 = vmatpush1.msra.mxu0 0.0
    %2280 = vmatprep.mubr.f32.mxu0 0.0
    %2281 = vmatmul.mubr.f32.gmra.mrb[0].mxu0 %v2211
    %v2282 = vpop.f32.mrb[0].mxu0
    %v2283 = vadd.f32 %v2208, %v2282
    %v2284 = vpop.f32.mrb[0].mxu0
    %2285 = vmatprep.mubr.f32.mxu0 0.0
    %2286 = vmatmul.mubr.f32.gmra.mrb[0].mxu0 %v2214
    %v2287 = vpop.f32.mrb[0].mxu0
    %v2288 = vadd.f32 %v2208, %v2287
    %v2289 = vpop.f32.mrb[0].mxu0
    %2290 = vdwg.mxu0
    %v2291 = vmul.f32 %v2283, 0.5
    %v2292 = vmul.f32 %v2288, 0.5
    %v2293 = vmul.f32 %v2283, 0.70710677
    %v2294 = vmul.f32 %v2288, 0.70710677
    %v2295 = verf.f32.pop %v2293
    %v2296 = verf.f32.pop %v2294
    %v2297 = vadd.f32 %v2295, 1.0
    %v2298 = vadd.f32 %v2296, 1.0
    %v2299 = vmul.f32 %v2291, %v2297
    %v2300 = vmul.f32 %v2292, %v2298
    %v2301 = vld [vmem:[%s12] sm:$0xff]
    %v2302 = vld [vmem:[%s12 + $0x8] sm:$0xff]
    %v2303 = vld [vmem:[%s12 + $0x10] sm:$0xff]
    %v2304 = vld [vmem:[%s12 + $0x18] sm:$0xff]
    %v2305 = vld [vmem:[%s12 + $0x20] sm:$0xff]
    %v2306 = vld [vmem:[%s12 + $0x28] sm:$0xff]
    %v2307 = vld [vmem:[%s12 + $0x30] sm:$0xff]
    %v2308 = vld [vmem:[%s12 + $0x38] sm:$0xff]
    %v2309 = vld [vmem:[%s13] sm:$0x1]
    %v2311 = vlaneseq
    %v2312 = vshrl.u32 %v2311, 7
    %v2313 = vsub.s32 0, %v2312
    %v2314 = vrot.slane %v2309, %v2313
    %vm2316 = vcmask 523264
    %v2318 = vsel %vm2316, %v2299, 0
    %v2321 = vsel %vm2316, %v2300, 0
    %2323 = vmatprep.subr.mxu0 0.0
    %2324 = vmatpush1.msra.mxu0 %v2301
    %2325 = vmatprep.subr.mxu0 0.0
    %2326 = vmatpush1.msra.mxu0 %v2302
    %2327 = vmatprep.subr.mxu0 0.0
    %2328 = vmatpush1.msra.mxu0 %v2303
    %2329 = vmatprep.subr.mxu0 0.0
    %2330 = vmatpush1.msra.mxu0 %v2304
    %2331 = vmatprep.subr.mxu0 0.0
    %2332 = vmatpush1.msra.mxu0 %v2305
    %2333 = vmatprep.subr.mxu0 0.0
    %2334 = vmatpush1.msra.mxu0 %v2306
    %2335 = vmatprep.subr.mxu0 0.0
    %2336 = vmatpush1.msra.mxu0 %v2307
    %2337 = vmatprep.subr.mxu0 0.0
    %2338 = vmatpush1.msra.mxu0 %v2308
    %2339 = vmatprep.subr.mxu0 0.0
    %2340 = vmatpush1.msra.mxu0 0.0
    %2341 = vmatprep.subr.mxu0 0.0
    %2342 = vmatpush1.msra.mxu0 0.0
    %2343 = vmatprep.subr.mxu0 0.0
    %2344 = vmatpush1.msra.mxu0 0.0
    %2345 = vmatprep.subr.mxu0 0.0
    %2346 = vmatpush1.msra.mxu0 0.0
    %2347 = vmatprep.subr.mxu0 0.0
    %2348 = vmatpush1.msra.mxu0 0.0
    %2349 = vmatprep.subr.mxu0 0.0
    %2350 = vmatpush1.msra.mxu0 0.0
    %2351 = vmatprep.subr.mxu0 0.0
    %2352 = vmatpush1.msra.mxu0 0.0
    %2353 = vmatprep.subr.mxu0 0.0
    %2354 = vmatpush1.msra.mxu0 0.0
    %2355 = vmatprep.subr.mxu0 0.0
    %2356 = vmatpush1.msra.mxu0 0.0
    %2357 = vmatprep.subr.mxu0 0.0
    %2358 = vmatpush1.msra.mxu0 0.0
    %2359 = vmatprep.subr.mxu0 0.0
    %2360 = vmatpush1.msra.mxu0 0.0
    %2361 = vmatprep.subr.mxu0 0.0
    %2362 = vmatpush1.msra.mxu0 0.0
    %2363 = vmatprep.subr.mxu0 0.0
    %2364 = vmatpush1.msra.mxu0 0.0
    %2365 = vmatprep.subr.mxu0 0.0
    %2366 = vmatpush1.msra.mxu0 0.0
    %2367 = vmatprep.subr.mxu0 0.0
    %2368 = vmatpush1.msra.mxu0 0.0
    %2369 = vmatprep.subr.mxu0 0.0
    %2370 = vmatpush1.msra.mxu0 0.0
    %2371 = vmatprep.subr.mxu0 0.0
    %2372 = vmatpush1.msra.mxu0 0.0
    %2373 = vmatprep.subr.mxu0 0.0
    %2374 = vmatpush1.msra.mxu0 0.0
    %2375 = vmatprep.subr.mxu0 0.0
    %2376 = vmatpush1.msra.mxu0 0.0
    %2377 = vmatprep.subr.mxu0 0.0
    %2378 = vmatpush1.msra.mxu0 0.0
    %2379 = vmatprep.subr.mxu0 0.0
    %2380 = vmatpush1.msra.mxu0 0.0
    %2381 = vmatprep.subr.mxu0 0.0
    %2382 = vmatpush1.msra.mxu0 0.0
    %2383 = vmatprep.subr.mxu0 0.0
    %2384 = vmatpush1.msra.mxu0 0.0
    %2385 = vmatprep.subr.mxu0 0.0
    %2386 = vmatpush1.msra.mxu0 0.0
    %2387 = vmatprep.mubr.f32.mxu0 0.0
    %2388 = vmatmul.mubr.f32.gmra.mrb[0].mxu0 %v2318
    %v2389 = vpop.f32.mrb[0].mxu0
    %v2390 = vadd.f32 %v2314, %v2389
    %v2391 = vpop.f32.mrb[0].mxu0
    %2392 = vmatprep.mubr.f32.mxu0 0.0
    %2393 = vmatmul.mubr.f32.gmra.mrb[0].mxu0 %v2321
    %v2394 = vpop.f32.mrb[0].mxu0
    %v2395 = vadd.f32 %v2314, %v2394
    %v2396 = vpop.f32.mrb[0].mxu0
    %2397 = vdwg.mxu0
    %v2398 = vadd.f32 %v2197, %v2390
    %v2399 = vadd.f32 %v2198, %v2395
    %v2400 = vld [vmem:[%s14] sm:$0x1]
    %v2401 = vld [vmem:[%s15] sm:$0x1]
    %v2402 = vsel %vm70, %v2398, 0.0
    %2403 = vadd.xlane.f32.xlu0 %v2402
    %v2404 = vpop.xlane.xlu0 %2403
    %v2405 = vsel %vm70, %v2399, 0.0
    %2406 = vadd.xlane.f32.xlu0 %v2405
    %v2407 = vpop.xlane.xlu0 %2406
    %v2408 = vmul.f32 %v2404, %v77
    %v2409 = vmul.f32 %v2407, %v77
    %v2410 = vsub.f32 %v2398, %v2408
    %v2411 = vsub.f32 %v2399, %v2409
    %v2412 = vmul.f32 %v2410, %v2410
    %v2413 = vmul.f32 %v2411, %v2411
    %v2414 = vsel %vm70, %v2412, 0.0
    %2415 = vadd.xlane.f32.xlu0 %v2414
    %v2416 = vpop.xlane.xlu0 %2415
    %v2417 = vsel %vm70, %v2413, 0.0
    %2418 = vadd.xlane.f32.xlu0 %v2417
    %v2419 = vpop.xlane.xlu0 %2418
    %v2420 = vmul.f32 %v2416, %v77
    %v2421 = vmul.f32 %v2419, %v77
    %v2422 = vadd.f32 %v2420, 1e-12
    %v2423 = vadd.f32 %v2421, 1e-12
    %v2424 = vrsqrt.pop %v2422
    %v2425 = vrsqrt.pop %v2423
    %v2426 = vmul.f32 %v2410, %v2424
    %v2427 = vmul.f32 %v2411, %v2425
    %v2429 = vlaneseq
    %v2430 = vshrl.u32 %v2429, 7
    %v2431 = vsub.s32 0, %v2430
    %v2432 = vrot.slane %v2400, %v2431
    %v2434 = vmul.f32 %v2426, %v2432
    %v2435 = vmul.f32 %v2427, %v2432
    %v2437 = vlaneseq
    %v2438 = vshrl.u32 %v2437, 7
    %v2439 = vsub.s32 0, %v2438
    %v2440 = vrot.slane %v2401, %v2439
    %v2442 = vadd.f32 %v2434, %v2440
    %v2443 = vadd.f32 %v2435, %v2440
    %s2444 = scalar_lea.vmem %s4, 32
    %v2445 = vld [vmem:[%s2444] sm:$0xff]
    %v2446 = vld [vmem:[%s2444 + $0x8] sm:$0xff]
    %v2447 = vld [vmem:[%s2444 + $0x10] sm:$0xff]
    %v2448 = vld [vmem:[%s2444 + $0x18] sm:$0xff]
    %s2449 = scalar_lea.vmem %s5, 1
    %v2450 = vld [vmem:[%s2449] sm:$0x1]
    %s2451 = scalar_lea.vmem %s6, 32
    %v2452 = vld [vmem:[%s2451] sm:$0xff]
    %v2453 = vld [vmem:[%s2451 + $0x8] sm:$0xff]
    %v2454 = vld [vmem:[%s2451 + $0x10] sm:$0xff]
    %v2455 = vld [vmem:[%s2451 + $0x18] sm:$0xff]
    %v2457 = vlaneseq
    %v2458 = vshrl.u32 %v2457, 7
    %v2459 = vsub.s32 0, %v2458
    %v2460 = vrot.slane %v2450, %v2459
    %v2463 = vsel %vm70, %v2442, 0
    %v2466 = vsel %vm70, %v2443, 0
    %2468 = vmatprep.subr.mxu0 0.0
    %2469 = vmatpush1.msra.mxu0 %v2445
    %2470 = vmatprep.subr.mxu0 0.0
    %2471 = vmatpush1.msra.mxu0 %v2446
    %2472 = vmatprep.subr.mxu0 0.0
    %2473 = vmatpush1.msra.mxu0 %v2447
    %2474 = vmatprep.subr.mxu0 0.0
    %2475 = vmatpush1.msra.mxu0 %v2448
    %2476 = vmatprep.subr.mxu0 0.0
    %2477 = vmatpush1.msra.mxu0 0.0
    %2478 = vmatprep.subr.mxu0 0.0
    %2479 = vmatpush1.msra.mxu0 0.0
    %2480 = vmatprep.subr.mxu0 0.0
    %2481 = vmatpush1.msra.mxu0 0.0
    %2482 = vmatprep.subr.mxu0 0.0
    %2483 = vmatpush1.msra.mxu0 0.0
    %2484 = vmatprep.subr.mxu0 0.0
    %2485 = vmatpush1.msra.mxu0 0.0
    %2486 = vmatprep.subr.mxu0 0.0
    %2487 = vmatpush1.msra.mxu0 0.0
    %2488 = vmatprep.subr.mxu0 0.0
    %2489 = vmatpush1.msra.mxu0 0.0
    %2490 = vmatprep.subr.mxu0 0.0
    %2491 = vmatpush1.msra.mxu0 0.0
    %2492 = vmatprep.subr.mxu0 0.0
    %2493 = vmatpush1.msra.mxu0 0.0
    %2494 = vmatprep.subr.mxu0 0.0
    %2495 = vmatpush1.msra.mxu0 0.0
    %2496 = vmatprep.subr.mxu0 0.0
    %2497 = vmatpush1.msra.mxu0 0.0
    %2498 = vmatprep.subr.mxu0 0.0
    %2499 = vmatpush1.msra.mxu0 0.0
    %2500 = vmatprep.subr.mxu0 0.0
    %2501 = vmatpush1.msra.mxu0 0.0
    %2502 = vmatprep.subr.mxu0 0.0
    %2503 = vmatpush1.msra.mxu0 0.0
    %2504 = vmatprep.subr.mxu0 0.0
    %2505 = vmatpush1.msra.mxu0 0.0
    %2506 = vmatprep.subr.mxu0 0.0
    %2507 = vmatpush1.msra.mxu0 0.0
    %2508 = vmatprep.subr.mxu0 0.0
    %2509 = vmatpush1.msra.mxu0 0.0
    %2510 = vmatprep.subr.mxu0 0.0
    %2511 = vmatpush1.msra.mxu0 0.0
    %2512 = vmatprep.subr.mxu0 0.0
    %2513 = vmatpush1.msra.mxu0 0.0
    %2514 = vmatprep.subr.mxu0 0.0
    %2515 = vmatpush1.msra.mxu0 0.0
    %2516 = vmatprep.subr.mxu0 0.0
    %2517 = vmatpush1.msra.mxu0 0.0
    %2518 = vmatprep.subr.mxu0 0.0
    %2519 = vmatpush1.msra.mxu0 0.0
    %2520 = vmatprep.subr.mxu0 0.0
    %2521 = vmatpush1.msra.mxu0 0.0
    %2522 = vmatprep.subr.mxu0 0.0
    %2523 = vmatpush1.msra.mxu0 0.0
    %2524 = vmatprep.subr.mxu0 0.0
    %2525 = vmatpush1.msra.mxu0 0.0
    %2526 = vmatprep.subr.mxu0 0.0
    %2527 = vmatpush1.msra.mxu0 0.0
    %2528 = vmatprep.subr.mxu0 0.0
    %2529 = vmatpush1.msra.mxu0 0.0
    %2530 = vmatprep.subr.mxu0 0.0
    %2531 = vmatpush1.msra.mxu0 0.0
    %2532 = vmatprep.mubr.f32.mxu0 0.0
    %2533 = vmatmul.mubr.f32.gmra.mrb[0].mxu0 %v2463
    %v2534 = vpop.f32.mrb[0].mxu0
    %v2535 = vadd.f32 %v2460, %v2534
    %v2536 = vpop.f32.mrb[0].mxu0
    %2537 = vmatprep.mubr.f32.mxu0 0.0
    %2538 = vmatmul.mubr.f32.gmra.mrb[0].mxu0 %v2466
    %v2539 = vpop.f32.mrb[0].mxu0
    %v2540 = vadd.f32 %v2460, %v2539
    %v2541 = vpop.f32.mrb[0].mxu0
    %2542 = vdwg.mxu0
    %2544 = vrot.lane.b32.xlu0 %v2535, 96
    %v2545 = vpop.permute.xlu0 %2544
    %v2546 = vsel %vm216, %v2535, 0
    %v2548 = vsel %vm216, %v2545, 0
    %2550 = vmatprep.subr.mxu0 0.0
    %2551 = vmatpush1.xpose.msra.mxu0 %v2548
    %2552 = vmatprep.subr.mxu0 0.0
    %2553 = vmatpush1.xpose.msra.mxu0 0.0
    %2554 = vmatprep.subr.mxu0 0.0
    %2555 = vmatpush1.xpose.msra.mxu0 0.0
    %2556 = vmatprep.subr.mxu0 0.0
    %2557 = vmatpush1.xpose.msra.mxu0 0.0
    %2558 = vmatprep.subr.mxu0 0.0
    %2559 = vmatpush1.xpose.msra.mxu0 0.0
    %2560 = vmatprep.subr.mxu0 0.0
    %2561 = vmatpush1.xpose.msra.mxu0 0.0
    %2562 = vmatprep.subr.mxu0 0.0
    %2563 = vmatpush1.xpose.msra.mxu0 0.0
    %2564 = vmatprep.subr.mxu0 0.0
    %2565 = vmatpush1.xpose.msra.mxu0 0.0
    %2566 = vmatprep.subr.mxu0 0.0
    %2567 = vmatpush1.xpose.msra.mxu0 0.0
    %2568 = vmatprep.subr.mxu0 0.0
    %2569 = vmatpush1.xpose.msra.mxu0 0.0
    %2570 = vmatprep.subr.mxu0 0.0
    %2571 = vmatpush1.xpose.msra.mxu0 0.0
    %2572 = vmatprep.subr.mxu0 0.0
    %2573 = vmatpush1.xpose.msra.mxu0 0.0
    %2574 = vmatprep.subr.mxu0 0.0
    %2575 = vmatpush1.xpose.msra.mxu0 0.0
    %2576 = vmatprep.subr.mxu0 0.0
    %2577 = vmatpush1.xpose.msra.mxu0 0.0
    %2578 = vmatprep.subr.mxu0 0.0
    %2579 = vmatpush1.xpose.msra.mxu0 0.0
    %2580 = vmatprep.subr.mxu0 0.0
    %2581 = vmatpush1.xpose.msra.mxu0 0.0
    %2582 = vmatprep.subr.mxu0 0.0
    %2583 = vmatpush1.xpose.msra.mxu0 0.0
    %2584 = vmatprep.subr.mxu0 0.0
    %2585 = vmatpush1.xpose.msra.mxu0 0.0
    %2586 = vmatprep.subr.mxu0 0.0
    %2587 = vmatpush1.xpose.msra.mxu0 0.0
    %2588 = vmatprep.subr.mxu0 0.0
    %2589 = vmatpush1.xpose.msra.mxu0 0.0
    %2590 = vmatprep.subr.mxu0 0.0
    %2591 = vmatpush1.xpose.msra.mxu0 0.0
    %2592 = vmatprep.subr.mxu0 0.0
    %2593 = vmatpush1.xpose.msra.mxu0 0.0
    %2594 = vmatprep.subr.mxu0 0.0
    %2595 = vmatpush1.xpose.msra.mxu0 0.0
    %2596 = vmatprep.subr.mxu0 0.0
    %2597 = vmatpush1.xpose.msra.mxu0 0.0
    %2598 = vmatprep.subr.mxu0 0.0
    %2599 = vmatpush1.xpose.msra.mxu0 0.0
    %2600 = vmatprep.subr.mxu0 0.0
    %2601 = vmatpush1.xpose.msra.mxu0 0.0
    %2602 = vmatprep.subr.mxu0 0.0
    %2603 = vmatpush1.xpose.msra.mxu0 0.0
    %2604 = vmatprep.subr.mxu0 0.0
    %2605 = vmatpush1.xpose.msra.mxu0 0.0
    %2606 = vmatprep.subr.mxu0 0.0
    %2607 = vmatpush1.xpose.msra.mxu0 0.0
    %2608 = vmatprep.subr.mxu0 0.0
    %2609 = vmatpush1.xpose.msra.mxu0 0.0
    %2610 = vmatprep.subr.mxu0 0.0
    %2611 = vmatpush1.xpose.msra.mxu0 0.0
    %2612 = vmatprep.subr.mxu0 0.0
    %2613 = vmatpush1.xpose.msra.mxu0 0.0
    %2614 = vmatprep.mubr.f32.mxu0 0.0
    %2615 = vmatmul.mubr.f32.gmra.mrb[0].mxu0 %v2546
    %v2616 = vpop.f32.mrb[0].mxu0
    %v2617 = vadd.f32 0.0, %v2616
    %v2618 = vpop.f32.mrb[0].mxu0
    %2619 = vdwg.mxu0
    %v2620 = vmul.f32 %v2617, 0.35355338
    %v2621 = vadd.f32 %v2620, %v295
    %v2622 = vsel %vm216, %v2621, -inf
    %2623 = vmax.xlane.f32.xlu0 %v2622
    %v2624 = vpop.xlane.xlu0 %2623
    %v2625 = vsub.f32 %v2621, %v2624
    %v2626 = vmul.f32 %v2625, 1.442695
    %v2627 = vpow.pop %v2626
    %v2628 = vsel %vm216, %v2627, 0.0
    %2629 = vadd.xlane.f32.xlu0 %v2628
    %v2630 = vpop.xlane.xlu0 %2629
    %v2631 = vrcp.pop %v2630
    %v2632 = vmul.f32 %v2627, %v2631
    %2633 = vrot.lane.b32.xlu0 %v2535, 64
    %v2634 = vpop.permute.xlu0 %2633
    %v2637 = vsel %vm216, %v2632, 0
    %2639 = vmatprep.subr.mxu0 0.0
    %2640 = vmatpush1.msra.mxu0 %v2634
    %2641 = vmatprep.subr.mxu0 0.0
    %2642 = vmatpush1.msra.mxu0 0.0
    %2643 = vmatprep.subr.mxu0 0.0
    %2644 = vmatpush1.msra.mxu0 0.0
    %2645 = vmatprep.subr.mxu0 0.0
    %2646 = vmatpush1.msra.mxu0 0.0
    %2647 = vmatprep.subr.mxu0 0.0
    %2648 = vmatpush1.msra.mxu0 0.0
    %2649 = vmatprep.subr.mxu0 0.0
    %2650 = vmatpush1.msra.mxu0 0.0
    %2651 = vmatprep.subr.mxu0 0.0
    %2652 = vmatpush1.msra.mxu0 0.0
    %2653 = vmatprep.subr.mxu0 0.0
    %2654 = vmatpush1.msra.mxu0 0.0
    %2655 = vmatprep.subr.mxu0 0.0
    %2656 = vmatpush1.msra.mxu0 0.0
    %2657 = vmatprep.subr.mxu0 0.0
    %2658 = vmatpush1.msra.mxu0 0.0
    %2659 = vmatprep.subr.mxu0 0.0
    %2660 = vmatpush1.msra.mxu0 0.0
    %2661 = vmatprep.subr.mxu0 0.0
    %2662 = vmatpush1.msra.mxu0 0.0
    %2663 = vmatprep.subr.mxu0 0.0
    %2664 = vmatpush1.msra.mxu0 0.0
    %2665 = vmatprep.subr.mxu0 0.0
    %2666 = vmatpush1.msra.mxu0 0.0
    %2667 = vmatprep.subr.mxu0 0.0
    %2668 = vmatpush1.msra.mxu0 0.0
    %2669 = vmatprep.subr.mxu0 0.0
    %2670 = vmatpush1.msra.mxu0 0.0
    %2671 = vmatprep.subr.mxu0 0.0
    %2672 = vmatpush1.msra.mxu0 0.0
    %2673 = vmatprep.subr.mxu0 0.0
    %2674 = vmatpush1.msra.mxu0 0.0
    %2675 = vmatprep.subr.mxu0 0.0
    %2676 = vmatpush1.msra.mxu0 0.0
    %2677 = vmatprep.subr.mxu0 0.0
    %2678 = vmatpush1.msra.mxu0 0.0
    %2679 = vmatprep.subr.mxu0 0.0
    %2680 = vmatpush1.msra.mxu0 0.0
    %2681 = vmatprep.subr.mxu0 0.0
    %2682 = vmatpush1.msra.mxu0 0.0
    %2683 = vmatprep.subr.mxu0 0.0
    %2684 = vmatpush1.msra.mxu0 0.0
    %2685 = vmatprep.subr.mxu0 0.0
    %2686 = vmatpush1.msra.mxu0 0.0
    %2687 = vmatprep.subr.mxu0 0.0
    %2688 = vmatpush1.msra.mxu0 0.0
    %2689 = vmatprep.subr.mxu0 0.0
    %2690 = vmatpush1.msra.mxu0 0.0
    %2691 = vmatprep.subr.mxu0 0.0
    %2692 = vmatpush1.msra.mxu0 0.0
    %2693 = vmatprep.subr.mxu0 0.0
    %2694 = vmatpush1.msra.mxu0 0.0
    %2695 = vmatprep.subr.mxu0 0.0
    %2696 = vmatpush1.msra.mxu0 0.0
    %2697 = vmatprep.subr.mxu0 0.0
    %2698 = vmatpush1.msra.mxu0 0.0
    %2699 = vmatprep.subr.mxu0 0.0
    %2700 = vmatpush1.msra.mxu0 0.0
    %2701 = vmatprep.subr.mxu0 0.0
    %2702 = vmatpush1.msra.mxu0 0.0
    %2703 = vmatprep.mubr.f32.mxu0 0.0
    %2704 = vmatmul.mubr.f32.gmra.mrb[0].mxu0 %v2637
    %v2705 = vpop.f32.mrb[0].mxu0
    %v2706 = vadd.f32 0.0, %v2705
    %v2707 = vpop.f32.mrb[0].mxu0
    %2708 = vdwg.mxu0
    %2709 = vrot.lane.b32.xlu0 %v2535, 120
    %v2710 = vpop.permute.xlu0 %2709
    %2711 = vrot.lane.b32.xlu0 %v2535, 88
    %v2712 = vpop.permute.xlu0 %2711
    %v2713 = vsel %vm216, %v2710, 0
    %v2715 = vsel %vm216, %v2712, 0
    %2717 = vmatprep.subr.mxu0 0.0
    %2718 = vmatpush1.xpose.msra.mxu0 %v2715
    %2719 = vmatprep.subr.mxu0 0.0
    %2720 = vmatpush1.xpose.msra.mxu0 0.0
    %2721 = vmatprep.subr.mxu0 0.0
    %2722 = vmatpush1.xpose.msra.mxu0 0.0
    %2723 = vmatprep.subr.mxu0 0.0
    %2724 = vmatpush1.xpose.msra.mxu0 0.0
    %2725 = vmatprep.subr.mxu0 0.0
    %2726 = vmatpush1.xpose.msra.mxu0 0.0
    %2727 = vmatprep.subr.mxu0 0.0
    %2728 = vmatpush1.xpose.msra.mxu0 0.0
    %2729 = vmatprep.subr.mxu0 0.0
    %2730 = vmatpush1.xpose.msra.mxu0 0.0
    %2731 = vmatprep.subr.mxu0 0.0
    %2732 = vmatpush1.xpose.msra.mxu0 0.0
    %2733 = vmatprep.subr.mxu0 0.0
    %2734 = vmatpush1.xpose.msra.mxu0 0.0
    %2735 = vmatprep.subr.mxu0 0.0
    %2736 = vmatpush1.xpose.msra.mxu0 0.0
    %2737 = vmatprep.subr.mxu0 0.0
    %2738 = vmatpush1.xpose.msra.mxu0 0.0
    %2739 = vmatprep.subr.mxu0 0.0
    %2740 = vmatpush1.xpose.msra.mxu0 0.0
    %2741 = vmatprep.subr.mxu0 0.0
    %2742 = vmatpush1.xpose.msra.mxu0 0.0
    %2743 = vmatprep.subr.mxu0 0.0
    %2744 = vmatpush1.xpose.msra.mxu0 0.0
    %2745 = vmatprep.subr.mxu0 0.0
    %2746 = vmatpush1.xpose.msra.mxu0 0.0
    %2747 = vmatprep.subr.mxu0 0.0
    %2748 = vmatpush1.xpose.msra.mxu0 0.0
    %2749 = vmatprep.subr.mxu0 0.0
    %2750 = vmatpush1.xpose.msra.mxu0 0.0
    %2751 = vmatprep.subr.mxu0 0.0
    %2752 = vmatpush1.xpose.msra.mxu0 0.0
    %2753 = vmatprep.subr.mxu0 0.0
    %2754 = vmatpush1.xpose.msra.mxu0 0.0
    %2755 = vmatprep.subr.mxu0 0.0
    %2756 = vmatpush1.xpose.msra.mxu0 0.0
    %2757 = vmatprep.subr.mxu0 0.0
    %2758 = vmatpush1.xpose.msra.mxu0 0.0
    %2759 = vmatprep.subr.mxu0 0.0
    %2760 = vmatpush1.xpose.msra.mxu0 0.0
    %2761 = vmatprep.subr.mxu0 0.0
    %2762 = vmatpush1.xpose.msra.mxu0 0.0
    %2763 = vmatprep.subr.mxu0 0.0
    %2764 = vmatpush1.xpose.msra.mxu0 0.0
    %2765 = vmatprep.subr.mxu0 0.0
    %2766 = vmatpush1.xpose.msra.mxu0 0.0
    %2767 = vmatprep.subr.mxu0 0.0
    %2768 = vmatpush1.xpose.msra.mxu0 0.0
    %2769 = vmatprep.subr.mxu0 0.0
    %2770 = vmatpush1.xpose.msra.mxu0 0.0
    %2771 = vmatprep.subr.mxu0 0.0
    %2772 = vmatpush1.xpose.msra.mxu0 0.0
    %2773 = vmatprep.subr.mxu0 0.0
    %2774 = vmatpush1.xpose.msra.mxu0 0.0
    %2775 = vmatprep.subr.mxu0 0.0
    %2776 = vmatpush1.xpose.msra.mxu0 0.0
    %2777 = vmatprep.subr.mxu0 0.0
    %2778 = vmatpush1.xpose.msra.mxu0 0.0
    %2779 = vmatprep.subr.mxu0 0.0
    %2780 = vmatpush1.xpose.msra.mxu0 0.0
    %2781 = vmatprep.mubr.f32.mxu0 0.0
    %2782 = vmatmul.mubr.f32.gmra.mrb[0].mxu0 %v2713
    %v2783 = vpop.f32.mrb[0].mxu0
    %v2784 = vadd.f32 0.0, %v2783
    %v2785 = vpop.f32.mrb[0].mxu0
    %2786 = vdwg.mxu0
    %v2787 = vmul.f32 %v2784, 0.35355338
    %v2788 = vadd.f32 %v2787, %v295
    %v2789 = vsel %vm216, %v2788, -inf
    %2790 = vmax.xlane.f32.xlu0 %v2789
    %v2791 = vpop.xlane.xlu0 %2790
    %v2792 = vsub.f32 %v2788, %v2791
    %v2793 = vmul.f32 %v2792, 1.442695
    %v2794 = vpow.pop %v2793
    %v2795 = vsel %vm216, %v2794, 0.0
    %2796 = vadd.xlane.f32.xlu0 %v2795
    %v2797 = vpop.xlane.xlu0 %2796
    %v2798 = vrcp.pop %v2797
    %v2799 = vmul.f32 %v2794, %v2798
    %2800 = vrot.lane.b32.xlu0 %v2535, 56
    %v2801 = vpop.permute.xlu0 %2800
    %v2804 = vsel %vm216, %v2799, 0
    %2806 = vmatprep.subr.mxu0 0.0
    %2807 = vmatpush1.msra.mxu0 %v2801
    %2808 = vmatprep.subr.mxu0 0.0
    %2809 = vmatpush1.msra.mxu0 0.0
    %2810 = vmatprep.subr.mxu0 0.0
    %2811 = vmatpush1.msra.mxu0 0.0
    %2812 = vmatprep.subr.mxu0 0.0
    %2813 = vmatpush1.msra.mxu0 0.0
    %2814 = vmatprep.subr.mxu0 0.0
    %2815 = vmatpush1.msra.mxu0 0.0
    %2816 = vmatprep.subr.mxu0 0.0
    %2817 = vmatpush1.msra.mxu0 0.0
    %2818 = vmatprep.subr.mxu0 0.0
    %2819 = vmatpush1.msra.mxu0 0.0
    %2820 = vmatprep.subr.mxu0 0.0
    %2821 = vmatpush1.msra.mxu0 0.0
    %2822 = vmatprep.subr.mxu0 0.0
    %2823 = vmatpush1.msra.mxu0 0.0
    %2824 = vmatprep.subr.mxu0 0.0
    %2825 = vmatpush1.msra.mxu0 0.0
    %2826 = vmatprep.subr.mxu0 0.0
    %2827 = vmatpush1.msra.mxu0 0.0
    %2828 = vmatprep.subr.mxu0 0.0
    %2829 = vmatpush1.msra.mxu0 0.0
    %2830 = vmatprep.subr.mxu0 0.0
    %2831 = vmatpush1.msra.mxu0 0.0
    %2832 = vmatprep.subr.mxu0 0.0
    %2833 = vmatpush1.msra.mxu0 0.0
    %2834 = vmatprep.subr.mxu0 0.0
    %2835 = vmatpush1.msra.mxu0 0.0
    %2836 = vmatprep.subr.mxu0 0.0
    %2837 = vmatpush1.msra.mxu0 0.0
    %2838 = vmatprep.subr.mxu0 0.0
    %2839 = vmatpush1.msra.mxu0 0.0
    %2840 = vmatprep.subr.mxu0 0.0
    %2841 = vmatpush1.msra.mxu0 0.0
    %2842 = vmatprep.subr.mxu0 0.0
    %2843 = vmatpush1.msra.mxu0 0.0
    %2844 = vmatprep.subr.mxu0 0.0
    %2845 = vmatpush1.msra.mxu0 0.0
    %2846 = vmatprep.subr.mxu0 0.0
    %2847 = vmatpush1.msra.mxu0 0.0
    %2848 = vmatprep.subr.mxu0 0.0
    %2849 = vmatpush1.msra.mxu0 0.0
    %2850 = vmatprep.subr.mxu0 0.0
    %2851 = vmatpush1.msra.mxu0 0.0
    %2852 = vmatprep.subr.mxu0 0.0
    %2853 = vmatpush1.msra.mxu0 0.0
    %2854 = vmatprep.subr.mxu0 0.0
    %2855 = vmatpush1.msra.mxu0 0.0
    %2856 = vmatprep.subr.mxu0 0.0
    %2857 = vmatpush1.msra.mxu0 0.0
    %2858 = vmatprep.subr.mxu0 0.0
    %2859 = vmatpush1.msra.mxu0 0.0
    %2860 = vmatprep.subr.mxu0 0.0
    %2861 = vmatpush1.msra.mxu0 0.0
    %2862 = vmatprep.subr.mxu0 0.0
    %2863 = vmatpush1.msra.mxu0 0.0
    %2864 = vmatprep.subr.mxu0 0.0
    %2865 = vmatpush1.msra.mxu0 0.0
    %2866 = vmatprep.subr.mxu0 0.0
    %2867 = vmatpush1.msra.mxu0 0.0
    %2868 = vmatprep.subr.mxu0 0.0
    %2869 = vmatpush1.msra.mxu0 0.0
    %2870 = vmatprep.mubr.f32.mxu0 0.0
    %2871 = vmatmul.mubr.f32.gmra.mrb[0].mxu0 %v2804
    %v2872 = vpop.f32.mrb[0].mxu0
    %v2873 = vadd.f32 0.0, %v2872
    %v2874 = vpop.f32.mrb[0].mxu0
    %2875 = vdwg.mxu0
    %v2877 = vsel %vm216, %v2873, 0
    %2879 = vmatprep.subr.mxu0 0.0
    %2880 = vmatpush1.msra.mxu0 %v2453
    %2881 = vmatprep.subr.mxu0 0.0
    %2882 = vmatpush1.msra.mxu0 0.0
    %2883 = vmatprep.subr.mxu0 0.0
    %2884 = vmatpush1.msra.mxu0 0.0
    %2885 = vmatprep.subr.mxu0 0.0
    %2886 = vmatpush1.msra.mxu0 0.0
    %2887 = vmatprep.subr.mxu0 0.0
    %2888 = vmatpush1.msra.mxu0 0.0
    %2889 = vmatprep.subr.mxu0 0.0
    %2890 = vmatpush1.msra.mxu0 0.0
    %2891 = vmatprep.subr.mxu0 0.0
    %2892 = vmatpush1.msra.mxu0 0.0
    %2893 = vmatprep.subr.mxu0 0.0
    %2894 = vmatpush1.msra.mxu0 0.0
    %2895 = vmatprep.subr.mxu0 0.0
    %2896 = vmatpush1.msra.mxu0 0.0
    %2897 = vmatprep.subr.mxu0 0.0
    %2898 = vmatpush1.msra.mxu0 0.0
    %2899 = vmatprep.subr.mxu0 0.0
    %2900 = vmatpush1.msra.mxu0 0.0
    %2901 = vmatprep.subr.mxu0 0.0
    %2902 = vmatpush1.msra.mxu0 0.0
    %2903 = vmatprep.subr.mxu0 0.0
    %2904 = vmatpush1.msra.mxu0 0.0
    %2905 = vmatprep.subr.mxu0 0.0
    %2906 = vmatpush1.msra.mxu0 0.0
    %2907 = vmatprep.subr.mxu0 0.0
    %2908 = vmatpush1.msra.mxu0 0.0
    %2909 = vmatprep.subr.mxu0 0.0
    %2910 = vmatpush1.msra.mxu0 0.0
    %2911 = vmatprep.subr.mxu0 0.0
    %2912 = vmatpush1.msra.mxu0 0.0
    %2913 = vmatprep.subr.mxu0 0.0
    %2914 = vmatpush1.msra.mxu0 0.0
    %2915 = vmatprep.subr.mxu0 0.0
    %2916 = vmatpush1.msra.mxu0 0.0
    %2917 = vmatprep.subr.mxu0 0.0
    %2918 = vmatpush1.msra.mxu0 0.0
    %2919 = vmatprep.subr.mxu0 0.0
    %2920 = vmatpush1.msra.mxu0 0.0
    %2921 = vmatprep.subr.mxu0 0.0
    %2922 = vmatpush1.msra.mxu0 0.0
    %2923 = vmatprep.subr.mxu0 0.0
    %2924 = vmatpush1.msra.mxu0 0.0
    %2925 = vmatprep.subr.mxu0 0.0
    %2926 = vmatpush1.msra.mxu0 0.0
    %2927 = vmatprep.subr.mxu0 0.0
    %2928 = vmatpush1.msra.mxu0 0.0
    %2929 = vmatprep.subr.mxu0 0.0
    %2930 = vmatpush1.msra.mxu0 0.0
    %2931 = vmatprep.subr.mxu0 0.0
    %2932 = vmatpush1.msra.mxu0 0.0
    %2933 = vmatprep.subr.mxu0 0.0
    %2934 = vmatpush1.msra.mxu0 0.0
    %2935 = vmatprep.subr.mxu0 0.0
    %2936 = vmatpush1.msra.mxu0 0.0
    %2937 = vmatprep.subr.mxu0 0.0
    %2938 = vmatpush1.msra.mxu0 0.0
    %2939 = vmatprep.subr.mxu0 0.0
    %2940 = vmatpush1.msra.mxu0 0.0
    %2941 = vmatprep.subr.mxu0 0.0
    %2942 = vmatpush1.msra.mxu0 0.0
    %2943 = vmatprep.mubr.f32.mxu0 0.0
    %2944 = vmatmul.mubr.f32.gmra.mrb[0].mxu0 %v2877
    %v2945 = vpop.f32.mrb[0].mxu0
    %v2946 = vadd.f32 0.0, %v2945
    %v2947 = vpop.f32.mrb[0].mxu0
    %2948 = vdwg.mxu0
    %v2950 = vsel %vm216, %v2706, 0
    %2952 = vmatprep.subr.mxu0 0.0
    %2953 = vmatpush1.msra.mxu0 %v2452
    %2954 = vmatprep.subr.mxu0 0.0
    %2955 = vmatpush1.msra.mxu0 0.0
    %2956 = vmatprep.subr.mxu0 0.0
    %2957 = vmatpush1.msra.mxu0 0.0
    %2958 = vmatprep.subr.mxu0 0.0
    %2959 = vmatpush1.msra.mxu0 0.0
    %2960 = vmatprep.subr.mxu0 0.0
    %2961 = vmatpush1.msra.mxu0 0.0
    %2962 = vmatprep.subr.mxu0 0.0
    %2963 = vmatpush1.msra.mxu0 0.0
    %2964 = vmatprep.subr.mxu0 0.0
    %2965 = vmatpush1.msra.mxu0 0.0
    %2966 = vmatprep.subr.mxu0 0.0
    %2967 = vmatpush1.msra.mxu0 0.0
    %2968 = vmatprep.subr.mxu0 0.0
    %2969 = vmatpush1.msra.mxu0 0.0
    %2970 = vmatprep.subr.mxu0 0.0
    %2971 = vmatpush1.msra.mxu0 0.0
    %2972 = vmatprep.subr.mxu0 0.0
    %2973 = vmatpush1.msra.mxu0 0.0
    %2974 = vmatprep.subr.mxu0 0.0
    %2975 = vmatpush1.msra.mxu0 0.0
    %2976 = vmatprep.subr.mxu0 0.0
    %2977 = vmatpush1.msra.mxu0 0.0
    %2978 = vmatprep.subr.mxu0 0.0
    %2979 = vmatpush1.msra.mxu0 0.0
    %2980 = vmatprep.subr.mxu0 0.0
    %2981 = vmatpush1.msra.mxu0 0.0
    %2982 = vmatprep.subr.mxu0 0.0
    %2983 = vmatpush1.msra.mxu0 0.0
    %2984 = vmatprep.subr.mxu0 0.0
    %2985 = vmatpush1.msra.mxu0 0.0
    %2986 = vmatprep.subr.mxu0 0.0
    %2987 = vmatpush1.msra.mxu0 0.0
    %2988 = vmatprep.subr.mxu0 0.0
    %2989 = vmatpush1.msra.mxu0 0.0
    %2990 = vmatprep.subr.mxu0 0.0
    %2991 = vmatpush1.msra.mxu0 0.0
    %2992 = vmatprep.subr.mxu0 0.0
    %2993 = vmatpush1.msra.mxu0 0.0
    %2994 = vmatprep.subr.mxu0 0.0
    %2995 = vmatpush1.msra.mxu0 0.0
    %2996 = vmatprep.subr.mxu0 0.0
    %2997 = vmatpush1.msra.mxu0 0.0
    %2998 = vmatprep.subr.mxu0 0.0
    %2999 = vmatpush1.msra.mxu0 0.0
    %3000 = vmatprep.subr.mxu0 0.0
    %3001 = vmatpush1.msra.mxu0 0.0
    %3002 = vmatprep.subr.mxu0 0.0
    %3003 = vmatpush1.msra.mxu0 0.0
    %3004 = vmatprep.subr.mxu0 0.0
    %3005 = vmatpush1.msra.mxu0 0.0
    %3006 = vmatprep.subr.mxu0 0.0
    %3007 = vmatpush1.msra.mxu0 0.0
    %3008 = vmatprep.subr.mxu0 0.0
    %3009 = vmatpush1.msra.mxu0 0.0
    %3010 = vmatprep.subr.mxu0 0.0
    %3011 = vmatpush1.msra.mxu0 0.0
    %3012 = vmatprep.subr.mxu0 0.0
    %3013 = vmatpush1.msra.mxu0 0.0
    %3014 = vmatprep.subr.mxu0 0.0
    %3015 = vmatpush1.msra.mxu0 0.0
    %3016 = vmatprep.mubr.f32.mxu0 0.0
    %3017 = vmatmul.mubr.f32.gmra.mrb[0].mxu0 %v2950
    %v3018 = vpop.f32.mrb[0].mxu0
    %v3019 = vadd.f32 %v2946, %v3018
    %v3020 = vpop.f32.mrb[0].mxu0
    %3021 = vdwg.mxu0
    %3022 = vrot.lane.b32.xlu0 %v2535, 112
    %v3023 = vpop.permute.xlu0 %3022
    %3024 = vrot.lane.b32.xlu0 %v2535, 80
    %v3025 = vpop.permute.xlu0 %3024
    %v3026 = vsel %vm216, %v3023, 0
    %v3028 = vsel %vm216, %v3025, 0
    %3030 = vmatprep.subr.mxu0 0.0
    %3031 = vmatpush1.xpose.msra.mxu0 %v3028
    %3032 = vmatprep.subr.mxu0 0.0
    %3033 = vmatpush1.xpose.msra.mxu0 0.0
    %3034 = vmatprep.subr.mxu0 0.0
    %3035 = vmatpush1.xpose.msra.mxu0 0.0
    %3036 = vmatprep.subr.mxu0 0.0
    %3037 = vmatpush1.xpose.msra.mxu0 0.0
    %3038 = vmatprep.subr.mxu0 0.0
    %3039 = vmatpush1.xpose.msra.mxu0 0.0
    %3040 = vmatprep.subr.mxu0 0.0
    %3041 = vmatpush1.xpose.msra.mxu0 0.0
    %3042 = vmatprep.subr.mxu0 0.0
    %3043 = vmatpush1.xpose.msra.mxu0 0.0
    %3044 = vmatprep.subr.mxu0 0.0
    %3045 = vmatpush1.xpose.msra.mxu0 0.0
    %3046 = vmatprep.subr.mxu0 0.0
    %3047 = vmatpush1.xpose.msra.mxu0 0.0
    %3048 = vmatprep.subr.mxu0 0.0
    %3049 = vmatpush1.xpose.msra.mxu0 0.0
    %3050 = vmatprep.subr.mxu0 0.0
    %3051 = vmatpush1.xpose.msra.mxu0 0.0
    %3052 = vmatprep.subr.mxu0 0.0
    %3053 = vmatpush1.xpose.msra.mxu0 0.0
    %3054 = vmatprep.subr.mxu0 0.0
    %3055 = vmatpush1.xpose.msra.mxu0 0.0
    %3056 = vmatprep.subr.mxu0 0.0
    %3057 = vmatpush1.xpose.msra.mxu0 0.0
    %3058 = vmatprep.subr.mxu0 0.0
    %3059 = vmatpush1.xpose.msra.mxu0 0.0
    %3060 = vmatprep.subr.mxu0 0.0
    %3061 = vmatpush1.xpose.msra.mxu0 0.0
    %3062 = vmatprep.subr.mxu0 0.0
    %3063 = vmatpush1.xpose.msra.mxu0 0.0
    %3064 = vmatprep.subr.mxu0 0.0
    %3065 = vmatpush1.xpose.msra.mxu0 0.0
    %3066 = vmatprep.subr.mxu0 0.0
    %3067 = vmatpush1.xpose.msra.mxu0 0.0
    %3068 = vmatprep.subr.mxu0 0.0
    %3069 = vmatpush1.xpose.msra.mxu0 0.0
    %3070 = vmatprep.subr.mxu0 0.0
    %3071 = vmatpush1.xpose.msra.mxu0 0.0
    %3072 = vmatprep.subr.mxu0 0.0
    %3073 = vmatpush1.xpose.msra.mxu0 0.0
    %3074 = vmatprep.subr.mxu0 0.0
    %3075 = vmatpush1.xpose.msra.mxu0 0.0
    %3076 = vmatprep.subr.mxu0 0.0
    %3077 = vmatpush1.xpose.msra.mxu0 0.0
    %3078 = vmatprep.subr.mxu0 0.0
    %3079 = vmatpush1.xpose.msra.mxu0 0.0
    %3080 = vmatprep.subr.mxu0 0.0
    %3081 = vmatpush1.xpose.msra.mxu0 0.0
    %3082 = vmatprep.subr.mxu0 0.0
    %3083 = vmatpush1.xpose.msra.mxu0 0.0
    %3084 = vmatprep.subr.mxu0 0.0
    %3085 = vmatpush1.xpose.msra.mxu0 0.0
    %3086 = vmatprep.subr.mxu0 0.0
    %3087 = vmatpush1.xpose.msra.mxu0 0.0
    %3088 = vmatprep.subr.mxu0 0.0
    %3089 = vmatpush1.xpose.msra.mxu0 0.0
    %3090 = vmatprep.subr.mxu0 0.0
    %3091 = vmatpush1.xpose.msra.mxu0 0.0
    %3092 = vmatprep.subr.mxu0 0.0
    %3093 = vmatpush1.xpose.msra.mxu0 0.0
    %3094 = vmatprep.mubr.f32.mxu0 0.0
    %3095 = vmatmul.mubr.f32.gmra.mrb[0].mxu0 %v3026
    %v3096 = vpop.f32.mrb[0].mxu0
    %v3097 = vadd.f32 0.0, %v3096
    %v3098 = vpop.f32.mrb[0].mxu0
    %3099 = vdwg.mxu0
    %v3100 = vmul.f32 %v3097, 0.35355338
    %v3101 = vadd.f32 %v3100, %v295
    %v3102 = vsel %vm216, %v3101, -inf
    %3103 = vmax.xlane.f32.xlu0 %v3102
    %v3104 = vpop.xlane.xlu0 %3103
    %v3105 = vsub.f32 %v3101, %v3104
    %v3106 = vmul.f32 %v3105, 1.442695
    %v3107 = vpow.pop %v3106
    %v3108 = vsel %vm216, %v3107, 0.0
    %3109 = vadd.xlane.f32.xlu0 %v3108
    %v3110 = vpop.xlane.xlu0 %3109
    %v3111 = vrcp.pop %v3110
    %v3112 = vmul.f32 %v3107, %v3111
    %3113 = vrot.lane.b32.xlu0 %v2535, 48
    %v3114 = vpop.permute.xlu0 %3113
    %v3117 = vsel %vm216, %v3112, 0
    %3119 = vmatprep.subr.mxu0 0.0
    %3120 = vmatpush1.msra.mxu0 %v3114
    %3121 = vmatprep.subr.mxu0 0.0
    %3122 = vmatpush1.msra.mxu0 0.0
    %3123 = vmatprep.subr.mxu0 0.0
    %3124 = vmatpush1.msra.mxu0 0.0
    %3125 = vmatprep.subr.mxu0 0.0
    %3126 = vmatpush1.msra.mxu0 0.0
    %3127 = vmatprep.subr.mxu0 0.0
    %3128 = vmatpush1.msra.mxu0 0.0
    %3129 = vmatprep.subr.mxu0 0.0
    %3130 = vmatpush1.msra.mxu0 0.0
    %3131 = vmatprep.subr.mxu0 0.0
    %3132 = vmatpush1.msra.mxu0 0.0
    %3133 = vmatprep.subr.mxu0 0.0
    %3134 = vmatpush1.msra.mxu0 0.0
    %3135 = vmatprep.subr.mxu0 0.0
    %3136 = vmatpush1.msra.mxu0 0.0
    %3137 = vmatprep.subr.mxu0 0.0
    %3138 = vmatpush1.msra.mxu0 0.0
    %3139 = vmatprep.subr.mxu0 0.0
    %3140 = vmatpush1.msra.mxu0 0.0
    %3141 = vmatprep.subr.mxu0 0.0
    %3142 = vmatpush1.msra.mxu0 0.0
    %3143 = vmatprep.subr.mxu0 0.0
    %3144 = vmatpush1.msra.mxu0 0.0
    %3145 = vmatprep.subr.mxu0 0.0
    %3146 = vmatpush1.msra.mxu0 0.0
    %3147 = vmatprep.subr.mxu0 0.0
    %3148 = vmatpush1.msra.mxu0 0.0
    %3149 = vmatprep.subr.mxu0 0.0
    %3150 = vmatpush1.msra.mxu0 0.0
    %3151 = vmatprep.subr.mxu0 0.0
    %3152 = vmatpush1.msra.mxu0 0.0
    %3153 = vmatprep.subr.mxu0 0.0
    %3154 = vmatpush1.msra.mxu0 0.0
    %3155 = vmatprep.subr.mxu0 0.0
    %3156 = vmatpush1.msra.mxu0 0.0
    %3157 = vmatprep.subr.mxu0 0.0
    %3158 = vmatpush1.msra.mxu0 0.0
    %3159 = vmatprep.subr.mxu0 0.0
    %3160 = vmatpush1.msra.mxu0 0.0
    %3161 = vmatprep.subr.mxu0 0.0
    %3162 = vmatpush1.msra.mxu0 0.0
    %3163 = vmatprep.subr.mxu0 0.0
    %3164 = vmatpush1.msra.mxu0 0.0
    %3165 = vmatprep.subr.mxu0 0.0
    %3166 = vmatpush1.msra.mxu0 0.0
    %3167 = vmatprep.subr.mxu0 0.0
    %3168 = vmatpush1.msra.mxu0 0.0
    %3169 = vmatprep.subr.mxu0 0.0
    %3170 = vmatpush1.msra.mxu0 0.0
    %3171 = vmatprep.subr.mxu0 0.0
    %3172 = vmatpush1.msra.mxu0 0.0
    %3173 = vmatprep.subr.mxu0 0.0
    %3174 = vmatpush1.msra.mxu0 0.0
    %3175 = vmatprep.subr.mxu0 0.0
    %3176 = vmatpush1.msra.mxu0 0.0
    %3177 = vmatprep.subr.mxu0 0.0
    %3178 = vmatpush1.msra.mxu0 0.0
    %3179 = vmatprep.subr.mxu0 0.0
    %3180 = vmatpush1.msra.mxu0 0.0
    %3181 = vmatprep.subr.mxu0 0.0
    %3182 = vmatpush1.msra.mxu0 0.0
    %3183 = vmatprep.mubr.f32.mxu0 0.0
    %3184 = vmatmul.mubr.f32.gmra.mrb[0].mxu0 %v3117
    %v3185 = vpop.f32.mrb[0].mxu0
    %v3186 = vadd.f32 0.0, %v3185
    %v3187 = vpop.f32.mrb[0].mxu0
    %3188 = vdwg.mxu0
    %v3190 = vsel %vm216, %v3186, 0
    %3192 = vmatprep.subr.mxu0 0.0
    %3193 = vmatpush1.msra.mxu0 %v2454
    %3194 = vmatprep.subr.mxu0 0.0
    %3195 = vmatpush1.msra.mxu0 0.0
    %3196 = vmatprep.subr.mxu0 0.0
    %3197 = vmatpush1.msra.mxu0 0.0
    %3198 = vmatprep.subr.mxu0 0.0
    %3199 = vmatpush1.msra.mxu0 0.0
    %3200 = vmatprep.subr.mxu0 0.0
    %3201 = vmatpush1.msra.mxu0 0.0
    %3202 = vmatprep.subr.mxu0 0.0
    %3203 = vmatpush1.msra.mxu0 0.0
    %3204 = vmatprep.subr.mxu0 0.0
    %3205 = vmatpush1.msra.mxu0 0.0
    %3206 = vmatprep.subr.mxu0 0.0
    %3207 = vmatpush1.msra.mxu0 0.0
    %3208 = vmatprep.subr.mxu0 0.0
    %3209 = vmatpush1.msra.mxu0 0.0
    %3210 = vmatprep.subr.mxu0 0.0
    %3211 = vmatpush1.msra.mxu0 0.0
    %3212 = vmatprep.subr.mxu0 0.0
    %3213 = vmatpush1.msra.mxu0 0.0
    %3214 = vmatprep.subr.mxu0 0.0
    %3215 = vmatpush1.msra.mxu0 0.0
    %3216 = vmatprep.subr.mxu0 0.0
    %3217 = vmatpush1.msra.mxu0 0.0
    %3218 = vmatprep.subr.mxu0 0.0
    %3219 = vmatpush1.msra.mxu0 0.0
    %3220 = vmatprep.subr.mxu0 0.0
    %3221 = vmatpush1.msra.mxu0 0.0
    %3222 = vmatprep.subr.mxu0 0.0
    %3223 = vmatpush1.msra.mxu0 0.0
    %3224 = vmatprep.subr.mxu0 0.0
    %3225 = vmatpush1.msra.mxu0 0.0
    %3226 = vmatprep.subr.mxu0 0.0
    %3227 = vmatpush1.msra.mxu0 0.0
    %3228 = vmatprep.subr.mxu0 0.0
    %3229 = vmatpush1.msra.mxu0 0.0
    %3230 = vmatprep.subr.mxu0 0.0
    %3231 = vmatpush1.msra.mxu0 0.0
    %3232 = vmatprep.subr.mxu0 0.0
    %3233 = vmatpush1.msra.mxu0 0.0
    %3234 = vmatprep.subr.mxu0 0.0
    %3235 = vmatpush1.msra.mxu0 0.0
    %3236 = vmatprep.subr.mxu0 0.0
    %3237 = vmatpush1.msra.mxu0 0.0
    %3238 = vmatprep.subr.mxu0 0.0
    %3239 = vmatpush1.msra.mxu0 0.0
    %3240 = vmatprep.subr.mxu0 0.0
    %3241 = vmatpush1.msra.mxu0 0.0
    %3242 = vmatprep.subr.mxu0 0.0
    %3243 = vmatpush1.msra.mxu0 0.0
    %3244 = vmatprep.subr.mxu0 0.0
    %3245 = vmatpush1.msra.mxu0 0.0
    %3246 = vmatprep.subr.mxu0 0.0
    %3247 = vmatpush1.msra.mxu0 0.0
    %3248 = vmatprep.subr.mxu0 0.0
    %3249 = vmatpush1.msra.mxu0 0.0
    %3250 = vmatprep.subr.mxu0 0.0
    %3251 = vmatpush1.msra.mxu0 0.0
    %3252 = vmatprep.subr.mxu0 0.0
    %3253 = vmatpush1.msra.mxu0 0.0
    %3254 = vmatprep.subr.mxu0 0.0
    %3255 = vmatpush1.msra.mxu0 0.0
    %3256 = vmatprep.mubr.f32.mxu0 0.0
    %3257 = vmatmul.mubr.f32.gmra.mrb[0].mxu0 %v3190
    %v3258 = vpop.f32.mrb[0].mxu0
    %v3259 = vadd.f32 0.0, %v3258
    %v3260 = vpop.f32.mrb[0].mxu0
    %3261 = vdwg.mxu0
    %v3262 = vadd.f32 %v3019, %v3259
    %3263 = vrot.lane.b32.xlu0 %v2535, 104
    %v3264 = vpop.permute.xlu0 %3263
    %3265 = vrot.lane.b32.xlu0 %v2535, 72
    %v3266 = vpop.permute.xlu0 %3265
    %v3267 = vsel %vm216, %v3264, 0
    %v3269 = vsel %vm216, %v3266, 0
    %3271 = vmatprep.subr.mxu0 0.0
    %3272 = vmatpush1.xpose.msra.mxu0 %v3269
    %3273 = vmatprep.subr.mxu0 0.0
    %3274 = vmatpush1.xpose.msra.mxu0 0.0
    %3275 = vmatprep.subr.mxu0 0.0
    %3276 = vmatpush1.xpose.msra.mxu0 0.0
    %3277 = vmatprep.subr.mxu0 0.0
    %3278 = vmatpush1.xpose.msra.mxu0 0.0
    %3279 = vmatprep.subr.mxu0 0.0
    %3280 = vmatpush1.xpose.msra.mxu0 0.0
    %3281 = vmatprep.subr.mxu0 0.0
    %3282 = vmatpush1.xpose.msra.mxu0 0.0
    %3283 = vmatprep.subr.mxu0 0.0
    %3284 = vmatpush1.xpose.msra.mxu0 0.0
    %3285 = vmatprep.subr.mxu0 0.0
    %3286 = vmatpush1.xpose.msra.mxu0 0.0
    %3287 = vmatprep.subr.mxu0 0.0
    %3288 = vmatpush1.xpose.msra.mxu0 0.0
    %3289 = vmatprep.subr.mxu0 0.0
    %3290 = vmatpush1.xpose.msra.mxu0 0.0
    %3291 = vmatprep.subr.mxu0 0.0
    %3292 = vmatpush1.xpose.msra.mxu0 0.0
    %3293 = vmatprep.subr.mxu0 0.0
    %3294 = vmatpush1.xpose.msra.mxu0 0.0
    %3295 = vmatprep.subr.mxu0 0.0
    %3296 = vmatpush1.xpose.msra.mxu0 0.0
    %3297 = vmatprep.subr.mxu0 0.0
    %3298 = vmatpush1.xpose.msra.mxu0 0.0
    %3299 = vmatprep.subr.mxu0 0.0
    %3300 = vmatpush1.xpose.msra.mxu0 0.0
    %3301 = vmatprep.subr.mxu0 0.0
    %3302 = vmatpush1.xpose.msra.mxu0 0.0
    %3303 = vmatprep.subr.mxu0 0.0
    %3304 = vmatpush1.xpose.msra.mxu0 0.0
    %3305 = vmatprep.subr.mxu0 0.0
    %3306 = vmatpush1.xpose.msra.mxu0 0.0
    %3307 = vmatprep.subr.mxu0 0.0
    %3308 = vmatpush1.xpose.msra.mxu0 0.0
    %3309 = vmatprep.subr.mxu0 0.0
    %3310 = vmatpush1.xpose.msra.mxu0 0.0
    %3311 = vmatprep.subr.mxu0 0.0
    %3312 = vmatpush1.xpose.msra.mxu0 0.0
    %3313 = vmatprep.subr.mxu0 0.0
    %3314 = vmatpush1.xpose.msra.mxu0 0.0
    %3315 = vmatprep.subr.mxu0 0.0
    %3316 = vmatpush1.xpose.msra.mxu0 0.0
    %3317 = vmatprep.subr.mxu0 0.0
    %3318 = vmatpush1.xpose.msra.mxu0 0.0
    %3319 = vmatprep.subr.mxu0 0.0
    %3320 = vmatpush1.xpose.msra.mxu0 0.0
    %3321 = vmatprep.subr.mxu0 0.0
    %3322 = vmatpush1.xpose.msra.mxu0 0.0
    %3323 = vmatprep.subr.mxu0 0.0
    %3324 = vmatpush1.xpose.msra.mxu0 0.0
    %3325 = vmatprep.subr.mxu0 0.0
    %3326 = vmatpush1.xpose.msra.mxu0 0.0
    %3327 = vmatprep.subr.mxu0 0.0
    %3328 = vmatpush1.xpose.msra.mxu0 0.0
    %3329 = vmatprep.subr.mxu0 0.0
    %3330 = vmatpush1.xpose.msra.mxu0 0.0
    %3331 = vmatprep.subr.mxu0 0.0
    %3332 = vmatpush1.xpose.msra.mxu0 0.0
    %3333 = vmatprep.subr.mxu0 0.0
    %3334 = vmatpush1.xpose.msra.mxu0 0.0
    %3335 = vmatprep.mubr.f32.mxu0 0.0
    %3336 = vmatmul.mubr.f32.gmra.mrb[0].mxu0 %v3267
    %v3337 = vpop.f32.mrb[0].mxu0
    %v3338 = vadd.f32 0.0, %v3337
    %v3339 = vpop.f32.mrb[0].mxu0
    %3340 = vdwg.mxu0
    %v3341 = vmul.f32 %v3338, 0.35355338
    %v3342 = vadd.f32 %v3341, %v295
    %v3343 = vsel %vm216, %v3342, -inf
    %3344 = vmax.xlane.f32.xlu0 %v3343
    %v3345 = vpop.xlane.xlu0 %3344
    %v3346 = vsub.f32 %v3342, %v3345
    %v3347 = vmul.f32 %v3346, 1.442695
    %v3348 = vpow.pop %v3347
    %v3349 = vsel %vm216, %v3348, 0.0
    %3350 = vadd.xlane.f32.xlu0 %v3349
    %v3351 = vpop.xlane.xlu0 %3350
    %v3352 = vrcp.pop %v3351
    %v3353 = vmul.f32 %v3348, %v3352
    %3354 = vrot.lane.b32.xlu0 %v2535, 40
    %v3355 = vpop.permute.xlu0 %3354
    %v3358 = vsel %vm216, %v3353, 0
    %3360 = vmatprep.subr.mxu0 0.0
    %3361 = vmatpush1.msra.mxu0 %v3355
    %3362 = vmatprep.subr.mxu0 0.0
    %3363 = vmatpush1.msra.mxu0 0.0
    %3364 = vmatprep.subr.mxu0 0.0
    %3365 = vmatpush1.msra.mxu0 0.0
    %3366 = vmatprep.subr.mxu0 0.0
    %3367 = vmatpush1.msra.mxu0 0.0
    %3368 = vmatprep.subr.mxu0 0.0
    %3369 = vmatpush1.msra.mxu0 0.0
    %3370 = vmatprep.subr.mxu0 0.0
    %3371 = vmatpush1.msra.mxu0 0.0
    %3372 = vmatprep.subr.mxu0 0.0
    %3373 = vmatpush1.msra.mxu0 0.0
    %3374 = vmatprep.subr.mxu0 0.0
    %3375 = vmatpush1.msra.mxu0 0.0
    %3376 = vmatprep.subr.mxu0 0.0
    %3377 = vmatpush1.msra.mxu0 0.0
    %3378 = vmatprep.subr.mxu0 0.0
    %3379 = vmatpush1.msra.mxu0 0.0
    %3380 = vmatprep.subr.mxu0 0.0
    %3381 = vmatpush1.msra.mxu0 0.0
    %3382 = vmatprep.subr.mxu0 0.0
    %3383 = vmatpush1.msra.mxu0 0.0
    %3384 = vmatprep.subr.mxu0 0.0
    %3385 = vmatpush1.msra.mxu0 0.0
    %3386 = vmatprep.subr.mxu0 0.0
    %3387 = vmatpush1.msra.mxu0 0.0
    %3388 = vmatprep.subr.mxu0 0.0
    %3389 = vmatpush1.msra.mxu0 0.0
    %3390 = vmatprep.subr.mxu0 0.0
    %3391 = vmatpush1.msra.mxu0 0.0
    %3392 = vmatprep.subr.mxu0 0.0
    %3393 = vmatpush1.msra.mxu0 0.0
    %3394 = vmatprep.subr.mxu0 0.0
    %3395 = vmatpush1.msra.mxu0 0.0
    %3396 = vmatprep.subr.mxu0 0.0
    %3397 = vmatpush1.msra.mxu0 0.0
    %3398 = vmatprep.subr.mxu0 0.0
    %3399 = vmatpush1.msra.mxu0 0.0
    %3400 = vmatprep.subr.mxu0 0.0
    %3401 = vmatpush1.msra.mxu0 0.0
    %3402 = vmatprep.subr.mxu0 0.0
    %3403 = vmatpush1.msra.mxu0 0.0
    %3404 = vmatprep.subr.mxu0 0.0
    %3405 = vmatpush1.msra.mxu0 0.0
    %3406 = vmatprep.subr.mxu0 0.0
    %3407 = vmatpush1.msra.mxu0 0.0
    %3408 = vmatprep.subr.mxu0 0.0
    %3409 = vmatpush1.msra.mxu0 0.0
    %3410 = vmatprep.subr.mxu0 0.0
    %3411 = vmatpush1.msra.mxu0 0.0
    %3412 = vmatprep.subr.mxu0 0.0
    %3413 = vmatpush1.msra.mxu0 0.0
    %3414 = vmatprep.subr.mxu0 0.0
    %3415 = vmatpush1.msra.mxu0 0.0
    %3416 = vmatprep.subr.mxu0 0.0
    %3417 = vmatpush1.msra.mxu0 0.0
    %3418 = vmatprep.subr.mxu0 0.0
    %3419 = vmatpush1.msra.mxu0 0.0
    %3420 = vmatprep.subr.mxu0 0.0
    %3421 = vmatpush1.msra.mxu0 0.0
    %3422 = vmatprep.subr.mxu0 0.0
    %3423 = vmatpush1.msra.mxu0 0.0
    %3424 = vmatprep.mubr.f32.mxu0 0.0
    %3425 = vmatmul.mubr.f32.gmra.mrb[0].mxu0 %v3358
    %v3426 = vpop.f32.mrb[0].mxu0
    %v3427 = vadd.f32 0.0, %v3426
    %v3428 = vpop.f32.mrb[0].mxu0
    %3429 = vdwg.mxu0
    %v3431 = vsel %vm216, %v3427, 0
    %3433 = vmatprep.subr.mxu0 0.0
    %3434 = vmatpush1.msra.mxu0 %v2455
    %3435 = vmatprep.subr.mxu0 0.0
    %3436 = vmatpush1.msra.mxu0 0.0
    %3437 = vmatprep.subr.mxu0 0.0
    %3438 = vmatpush1.msra.mxu0 0.0
    %3439 = vmatprep.subr.mxu0 0.0
    %3440 = vmatpush1.msra.mxu0 0.0
    %3441 = vmatprep.subr.mxu0 0.0
    %3442 = vmatpush1.msra.mxu0 0.0
    %3443 = vmatprep.subr.mxu0 0.0
    %3444 = vmatpush1.msra.mxu0 0.0
    %3445 = vmatprep.subr.mxu0 0.0
    %3446 = vmatpush1.msra.mxu0 0.0
    %3447 = vmatprep.subr.mxu0 0.0
    %3448 = vmatpush1.msra.mxu0 0.0
    %3449 = vmatprep.subr.mxu0 0.0
    %3450 = vmatpush1.msra.mxu0 0.0
    %3451 = vmatprep.subr.mxu0 0.0
    %3452 = vmatpush1.msra.mxu0 0.0
    %3453 = vmatprep.subr.mxu0 0.0
    %3454 = vmatpush1.msra.mxu0 0.0
    %3455 = vmatprep.subr.mxu0 0.0
    %3456 = vmatpush1.msra.mxu0 0.0
    %3457 = vmatprep.subr.mxu0 0.0
    %3458 = vmatpush1.msra.mxu0 0.0
    %3459 = vmatprep.subr.mxu0 0.0
    %3460 = vmatpush1.msra.mxu0 0.0
    %3461 = vmatprep.subr.mxu0 0.0
    %3462 = vmatpush1.msra.mxu0 0.0
    %3463 = vmatprep.subr.mxu0 0.0
    %3464 = vmatpush1.msra.mxu0 0.0
    %3465 = vmatprep.subr.mxu0 0.0
    %3466 = vmatpush1.msra.mxu0 0.0
    %3467 = vmatprep.subr.mxu0 0.0
    %3468 = vmatpush1.msra.mxu0 0.0
    %3469 = vmatprep.subr.mxu0 0.0
    %3470 = vmatpush1.msra.mxu0 0.0
    %3471 = vmatprep.subr.mxu0 0.0
    %3472 = vmatpush1.msra.mxu0 0.0
    %3473 = vmatprep.subr.mxu0 0.0
    %3474 = vmatpush1.msra.mxu0 0.0
    %3475 = vmatprep.subr.mxu0 0.0
    %3476 = vmatpush1.msra.mxu0 0.0
    %3477 = vmatprep.subr.mxu0 0.0
    %3478 = vmatpush1.msra.mxu0 0.0
    %3479 = vmatprep.subr.mxu0 0.0
    %3480 = vmatpush1.msra.mxu0 0.0
    %3481 = vmatprep.subr.mxu0 0.0
    %3482 = vmatpush1.msra.mxu0 0.0
    %3483 = vmatprep.subr.mxu0 0.0
    %3484 = vmatpush1.msra.mxu0 0.0
    %3485 = vmatprep.subr.mxu0 0.0
    %3486 = vmatpush1.msra.mxu0 0.0
    %3487 = vmatprep.subr.mxu0 0.0
    %3488 = vmatpush1.msra.mxu0 0.0
    %3489 = vmatprep.subr.mxu0 0.0
    %3490 = vmatpush1.msra.mxu0 0.0
    %3491 = vmatprep.subr.mxu0 0.0
    %3492 = vmatpush1.msra.mxu0 0.0
    %3493 = vmatprep.subr.mxu0 0.0
    %3494 = vmatpush1.msra.mxu0 0.0
    %3495 = vmatprep.subr.mxu0 0.0
    %3496 = vmatpush1.msra.mxu0 0.0
    %3497 = vmatprep.mubr.f32.mxu0 0.0
    %3498 = vmatmul.mubr.f32.gmra.mrb[0].mxu0 %v3431
    %v3499 = vpop.f32.mrb[0].mxu0
    %v3500 = vadd.f32 0.0, %v3499
    %v3501 = vpop.f32.mrb[0].mxu0
    %3502 = vdwg.mxu0
    %v3503 = vadd.f32 %v3262, %v3500
    %3505 = vrot.lane.b32.xlu0 %v2540, 96
    %v3506 = vpop.permute.xlu0 %3505
    %v3507 = vsel %vm216, %v2540, 0
    %v3509 = vsel %vm216, %v3506, 0
    %3511 = vmatprep.subr.mxu0 0.0
    %3512 = vmatpush1.xpose.msra.mxu0 %v3509
    %3513 = vmatprep.subr.mxu0 0.0
    %3514 = vmatpush1.xpose.msra.mxu0 0.0
    %3515 = vmatprep.subr.mxu0 0.0
    %3516 = vmatpush1.xpose.msra.mxu0 0.0
    %3517 = vmatprep.subr.mxu0 0.0
    %3518 = vmatpush1.xpose.msra.mxu0 0.0
    %3519 = vmatprep.subr.mxu0 0.0
    %3520 = vmatpush1.xpose.msra.mxu0 0.0
    %3521 = vmatprep.subr.mxu0 0.0
    %3522 = vmatpush1.xpose.msra.mxu0 0.0
    %3523 = vmatprep.subr.mxu0 0.0
    %3524 = vmatpush1.xpose.msra.mxu0 0.0
    %3525 = vmatprep.subr.mxu0 0.0
    %3526 = vmatpush1.xpose.msra.mxu0 0.0
    %3527 = vmatprep.subr.mxu0 0.0
    %3528 = vmatpush1.xpose.msra.mxu0 0.0
    %3529 = vmatprep.subr.mxu0 0.0
    %3530 = vmatpush1.xpose.msra.mxu0 0.0
    %3531 = vmatprep.subr.mxu0 0.0
    %3532 = vmatpush1.xpose.msra.mxu0 0.0
    %3533 = vmatprep.subr.mxu0 0.0
    %3534 = vmatpush1.xpose.msra.mxu0 0.0
    %3535 = vmatprep.subr.mxu0 0.0
    %3536 = vmatpush1.xpose.msra.mxu0 0.0
    %3537 = vmatprep.subr.mxu0 0.0
    %3538 = vmatpush1.xpose.msra.mxu0 0.0
    %3539 = vmatprep.subr.mxu0 0.0
    %3540 = vmatpush1.xpose.msra.mxu0 0.0
    %3541 = vmatprep.subr.mxu0 0.0
    %3542 = vmatpush1.xpose.msra.mxu0 0.0
    %3543 = vmatprep.subr.mxu0 0.0
    %3544 = vmatpush1.xpose.msra.mxu0 0.0
    %3545 = vmatprep.subr.mxu0 0.0
    %3546 = vmatpush1.xpose.msra.mxu0 0.0
    %3547 = vmatprep.subr.mxu0 0.0
    %3548 = vmatpush1.xpose.msra.mxu0 0.0
    %3549 = vmatprep.subr.mxu0 0.0
    %3550 = vmatpush1.xpose.msra.mxu0 0.0
    %3551 = vmatprep.subr.mxu0 0.0
    %3552 = vmatpush1.xpose.msra.mxu0 0.0
    %3553 = vmatprep.subr.mxu0 0.0
    %3554 = vmatpush1.xpose.msra.mxu0 0.0
    %3555 = vmatprep.subr.mxu0 0.0
    %3556 = vmatpush1.xpose.msra.mxu0 0.0
    %3557 = vmatprep.subr.mxu0 0.0
    %3558 = vmatpush1.xpose.msra.mxu0 0.0
    %3559 = vmatprep.subr.mxu0 0.0
    %3560 = vmatpush1.xpose.msra.mxu0 0.0
    %3561 = vmatprep.subr.mxu0 0.0
    %3562 = vmatpush1.xpose.msra.mxu0 0.0
    %3563 = vmatprep.subr.mxu0 0.0
    %3564 = vmatpush1.xpose.msra.mxu0 0.0
    %3565 = vmatprep.subr.mxu0 0.0
    %3566 = vmatpush1.xpose.msra.mxu0 0.0
    %3567 = vmatprep.subr.mxu0 0.0
    %3568 = vmatpush1.xpose.msra.mxu0 0.0
    %3569 = vmatprep.subr.mxu0 0.0
    %3570 = vmatpush1.xpose.msra.mxu0 0.0
    %3571 = vmatprep.subr.mxu0 0.0
    %3572 = vmatpush1.xpose.msra.mxu0 0.0
    %3573 = vmatprep.subr.mxu0 0.0
    %3574 = vmatpush1.xpose.msra.mxu0 0.0
    %3575 = vmatprep.mubr.f32.mxu0 0.0
    %3576 = vmatmul.mubr.f32.gmra.mrb[0].mxu0 %v3507
    %v3577 = vpop.f32.mrb[0].mxu0
    %v3578 = vadd.f32 0.0, %v3577
    %v3579 = vpop.f32.mrb[0].mxu0
    %3580 = vdwg.mxu0
    %v3581 = vmul.f32 %v3578, 0.35355338
    %v3582 = vadd.f32 %v3581, %v1260
    %v3583 = vsel %vm216, %v3582, -inf
    %3584 = vmax.xlane.f32.xlu0 %v3583
    %v3585 = vpop.xlane.xlu0 %3584
    %v3586 = vsub.f32 %v3582, %v3585
    %v3587 = vmul.f32 %v3586, 1.442695
    %v3588 = vpow.pop %v3587
    %v3589 = vsel %vm216, %v3588, 0.0
    %3590 = vadd.xlane.f32.xlu0 %v3589
    %v3591 = vpop.xlane.xlu0 %3590
    %v3592 = vrcp.pop %v3591
    %v3593 = vmul.f32 %v3588, %v3592
    %3594 = vrot.lane.b32.xlu0 %v2540, 64
    %v3595 = vpop.permute.xlu0 %3594
    %v3598 = vsel %vm216, %v3593, 0
    %3600 = vmatprep.subr.mxu0 0.0
    %3601 = vmatpush1.msra.mxu0 %v3595
    %3602 = vmatprep.subr.mxu0 0.0
    %3603 = vmatpush1.msra.mxu0 0.0
    %3604 = vmatprep.subr.mxu0 0.0
    %3605 = vmatpush1.msra.mxu0 0.0
    %3606 = vmatprep.subr.mxu0 0.0
    %3607 = vmatpush1.msra.mxu0 0.0
    %3608 = vmatprep.subr.mxu0 0.0
    %3609 = vmatpush1.msra.mxu0 0.0
    %3610 = vmatprep.subr.mxu0 0.0
    %3611 = vmatpush1.msra.mxu0 0.0
    %3612 = vmatprep.subr.mxu0 0.0
    %3613 = vmatpush1.msra.mxu0 0.0
    %3614 = vmatprep.subr.mxu0 0.0
    %3615 = vmatpush1.msra.mxu0 0.0
    %3616 = vmatprep.subr.mxu0 0.0
    %3617 = vmatpush1.msra.mxu0 0.0
    %3618 = vmatprep.subr.mxu0 0.0
    %3619 = vmatpush1.msra.mxu0 0.0
    %3620 = vmatprep.subr.mxu0 0.0
    %3621 = vmatpush1.msra.mxu0 0.0
    %3622 = vmatprep.subr.mxu0 0.0
    %3623 = vmatpush1.msra.mxu0 0.0
    %3624 = vmatprep.subr.mxu0 0.0
    %3625 = vmatpush1.msra.mxu0 0.0
    %3626 = vmatprep.subr.mxu0 0.0
    %3627 = vmatpush1.msra.mxu0 0.0
    %3628 = vmatprep.subr.mxu0 0.0
    %3629 = vmatpush1.msra.mxu0 0.0
    %3630 = vmatprep.subr.mxu0 0.0
    %3631 = vmatpush1.msra.mxu0 0.0
    %3632 = vmatprep.subr.mxu0 0.0
    %3633 = vmatpush1.msra.mxu0 0.0
    %3634 = vmatprep.subr.mxu0 0.0
    %3635 = vmatpush1.msra.mxu0 0.0
    %3636 = vmatprep.subr.mxu0 0.0
    %3637 = vmatpush1.msra.mxu0 0.0
    %3638 = vmatprep.subr.mxu0 0.0
    %3639 = vmatpush1.msra.mxu0 0.0
    %3640 = vmatprep.subr.mxu0 0.0
    %3641 = vmatpush1.msra.mxu0 0.0
    %3642 = vmatprep.subr.mxu0 0.0
    %3643 = vmatpush1.msra.mxu0 0.0
    %3644 = vmatprep.subr.mxu0 0.0
    %3645 = vmatpush1.msra.mxu0 0.0
    %3646 = vmatprep.subr.mxu0 0.0
    %3647 = vmatpush1.msra.mxu0 0.0
    %3648 = vmatprep.subr.mxu0 0.0
    %3649 = vmatpush1.msra.mxu0 0.0
    %3650 = vmatprep.subr.mxu0 0.0
    %3651 = vmatpush1.msra.mxu0 0.0
    %3652 = vmatprep.subr.mxu0 0.0
    %3653 = vmatpush1.msra.mxu0 0.0
    %3654 = vmatprep.subr.mxu0 0.0
    %3655 = vmatpush1.msra.mxu0 0.0
    %3656 = vmatprep.subr.mxu0 0.0
    %3657 = vmatpush1.msra.mxu0 0.0
    %3658 = vmatprep.subr.mxu0 0.0
    %3659 = vmatpush1.msra.mxu0 0.0
    %3660 = vmatprep.subr.mxu0 0.0
    %3661 = vmatpush1.msra.mxu0 0.0
    %3662 = vmatprep.subr.mxu0 0.0
    %3663 = vmatpush1.msra.mxu0 0.0
    %3664 = vmatprep.mubr.f32.mxu0 0.0
    %3665 = vmatmul.mubr.f32.gmra.mrb[0].mxu0 %v3598
    %v3666 = vpop.f32.mrb[0].mxu0
    %v3667 = vadd.f32 0.0, %v3666
    %v3668 = vpop.f32.mrb[0].mxu0
    %3669 = vdwg.mxu0
    %3670 = vrot.lane.b32.xlu0 %v2540, 120
    %v3671 = vpop.permute.xlu0 %3670
    %3672 = vrot.lane.b32.xlu0 %v2540, 88
    %v3673 = vpop.permute.xlu0 %3672
    %v3674 = vsel %vm216, %v3671, 0
    %v3676 = vsel %vm216, %v3673, 0
    %3678 = vmatprep.subr.mxu0 0.0
    %3679 = vmatpush1.xpose.msra.mxu0 %v3676
    %3680 = vmatprep.subr.mxu0 0.0
    %3681 = vmatpush1.xpose.msra.mxu0 0.0
    %3682 = vmatprep.subr.mxu0 0.0
    %3683 = vmatpush1.xpose.msra.mxu0 0.0
    %3684 = vmatprep.subr.mxu0 0.0
    %3685 = vmatpush1.xpose.msra.mxu0 0.0
    %3686 = vmatprep.subr.mxu0 0.0
    %3687 = vmatpush1.xpose.msra.mxu0 0.0
    %3688 = vmatprep.subr.mxu0 0.0
    %3689 = vmatpush1.xpose.msra.mxu0 0.0
    %3690 = vmatprep.subr.mxu0 0.0
    %3691 = vmatpush1.xpose.msra.mxu0 0.0
    %3692 = vmatprep.subr.mxu0 0.0
    %3693 = vmatpush1.xpose.msra.mxu0 0.0
    %3694 = vmatprep.subr.mxu0 0.0
    %3695 = vmatpush1.xpose.msra.mxu0 0.0
    %3696 = vmatprep.subr.mxu0 0.0
    %3697 = vmatpush1.xpose.msra.mxu0 0.0
    %3698 = vmatprep.subr.mxu0 0.0
    %3699 = vmatpush1.xpose.msra.mxu0 0.0
    %3700 = vmatprep.subr.mxu0 0.0
    %3701 = vmatpush1.xpose.msra.mxu0 0.0
    %3702 = vmatprep.subr.mxu0 0.0
    %3703 = vmatpush1.xpose.msra.mxu0 0.0
    %3704 = vmatprep.subr.mxu0 0.0
    %3705 = vmatpush1.xpose.msra.mxu0 0.0
    %3706 = vmatprep.subr.mxu0 0.0
    %3707 = vmatpush1.xpose.msra.mxu0 0.0
    %3708 = vmatprep.subr.mxu0 0.0
    %3709 = vmatpush1.xpose.msra.mxu0 0.0
    %3710 = vmatprep.subr.mxu0 0.0
    %3711 = vmatpush1.xpose.msra.mxu0 0.0
    %3712 = vmatprep.subr.mxu0 0.0
    %3713 = vmatpush1.xpose.msra.mxu0 0.0
    %3714 = vmatprep.subr.mxu0 0.0
    %3715 = vmatpush1.xpose.msra.mxu0 0.0
    %3716 = vmatprep.subr.mxu0 0.0
    %3717 = vmatpush1.xpose.msra.mxu0 0.0
    %3718 = vmatprep.subr.mxu0 0.0
    %3719 = vmatpush1.xpose.msra.mxu0 0.0
    %3720 = vmatprep.subr.mxu0 0.0
    %3721 = vmatpush1.xpose.msra.mxu0 0.0
    %3722 = vmatprep.subr.mxu0 0.0
    %3723 = vmatpush1.xpose.msra.mxu0 0.0
    %3724 = vmatprep.subr.mxu0 0.0
    %3725 = vmatpush1.xpose.msra.mxu0 0.0
    %3726 = vmatprep.subr.mxu0 0.0
    %3727 = vmatpush1.xpose.msra.mxu0 0.0
    %3728 = vmatprep.subr.mxu0 0.0
    %3729 = vmatpush1.xpose.msra.mxu0 0.0
    %3730 = vmatprep.subr.mxu0 0.0
    %3731 = vmatpush1.xpose.msra.mxu0 0.0
    %3732 = vmatprep.subr.mxu0 0.0
    %3733 = vmatpush1.xpose.msra.mxu0 0.0
    %3734 = vmatprep.subr.mxu0 0.0
    %3735 = vmatpush1.xpose.msra.mxu0 0.0
    %3736 = vmatprep.subr.mxu0 0.0
    %3737 = vmatpush1.xpose.msra.mxu0 0.0
    %3738 = vmatprep.subr.mxu0 0.0
    %3739 = vmatpush1.xpose.msra.mxu0 0.0
    %3740 = vmatprep.subr.mxu0 0.0
    %3741 = vmatpush1.xpose.msra.mxu0 0.0
    %3742 = vmatprep.mubr.f32.mxu0 0.0
    %3743 = vmatmul.mubr.f32.gmra.mrb[0].mxu0 %v3674
    %v3744 = vpop.f32.mrb[0].mxu0
    %v3745 = vadd.f32 0.0, %v3744
    %v3746 = vpop.f32.mrb[0].mxu0
    %3747 = vdwg.mxu0
    %v3748 = vmul.f32 %v3745, 0.35355338
    %v3749 = vadd.f32 %v3748, %v1260
    %v3750 = vsel %vm216, %v3749, -inf
    %3751 = vmax.xlane.f32.xlu0 %v3750
    %v3752 = vpop.xlane.xlu0 %3751
    %v3753 = vsub.f32 %v3749, %v3752
    %v3754 = vmul.f32 %v3753, 1.442695
    %v3755 = vpow.pop %v3754
    %v3756 = vsel %vm216, %v3755, 0.0
    %3757 = vadd.xlane.f32.xlu0 %v3756
    %v3758 = vpop.xlane.xlu0 %3757
    %v3759 = vrcp.pop %v3758
    %v3760 = vmul.f32 %v3755, %v3759
    %3761 = vrot.lane.b32.xlu0 %v2540, 56
    %v3762 = vpop.permute.xlu0 %3761
    %v3765 = vsel %vm216, %v3760, 0
    %3767 = vmatprep.subr.mxu0 0.0
    %3768 = vmatpush1.msra.mxu0 %v3762
    %3769 = vmatprep.subr.mxu0 0.0
    %3770 = vmatpush1.msra.mxu0 0.0
    %3771 = vmatprep.subr.mxu0 0.0
    %3772 = vmatpush1.msra.mxu0 0.0
    %3773 = vmatprep.subr.mxu0 0.0
    %3774 = vmatpush1.msra.mxu0 0.0
    %3775 = vmatprep.subr.mxu0 0.0
    %3776 = vmatpush1.msra.mxu0 0.0
    %3777 = vmatprep.subr.mxu0 0.0
    %3778 = vmatpush1.msra.mxu0 0.0
    %3779 = vmatprep.subr.mxu0 0.0
    %3780 = vmatpush1.msra.mxu0 0.0
    %3781 = vmatprep.subr.mxu0 0.0
    %3782 = vmatpush1.msra.mxu0 0.0
    %3783 = vmatprep.subr.mxu0 0.0
    %3784 = vmatpush1.msra.mxu0 0.0
    %3785 = vmatprep.subr.mxu0 0.0
    %3786 = vmatpush1.msra.mxu0 0.0
    %3787 = vmatprep.subr.mxu0 0.0
    %3788 = vmatpush1.msra.mxu0 0.0
    %3789 = vmatprep.subr.mxu0 0.0
    %3790 = vmatpush1.msra.mxu0 0.0
    %3791 = vmatprep.subr.mxu0 0.0
    %3792 = vmatpush1.msra.mxu0 0.0
    %3793 = vmatprep.subr.mxu0 0.0
    %3794 = vmatpush1.msra.mxu0 0.0
    %3795 = vmatprep.subr.mxu0 0.0
    %3796 = vmatpush1.msra.mxu0 0.0
    %3797 = vmatprep.subr.mxu0 0.0
    %3798 = vmatpush1.msra.mxu0 0.0
    %3799 = vmatprep.subr.mxu0 0.0
    %3800 = vmatpush1.msra.mxu0 0.0
    %3801 = vmatprep.subr.mxu0 0.0
    %3802 = vmatpush1.msra.mxu0 0.0
    %3803 = vmatprep.subr.mxu0 0.0
    %3804 = vmatpush1.msra.mxu0 0.0
    %3805 = vmatprep.subr.mxu0 0.0
    %3806 = vmatpush1.msra.mxu0 0.0
    %3807 = vmatprep.subr.mxu0 0.0
    %3808 = vmatpush1.msra.mxu0 0.0
    %3809 = vmatprep.subr.mxu0 0.0
    %3810 = vmatpush1.msra.mxu0 0.0
    %3811 = vmatprep.subr.mxu0 0.0
    %3812 = vmatpush1.msra.mxu0 0.0
    %3813 = vmatprep.subr.mxu0 0.0
    %3814 = vmatpush1.msra.mxu0 0.0
    %3815 = vmatprep.subr.mxu0 0.0
    %3816 = vmatpush1.msra.mxu0 0.0
    %3817 = vmatprep.subr.mxu0 0.0
    %3818 = vmatpush1.msra.mxu0 0.0
    %3819 = vmatprep.subr.mxu0 0.0
    %3820 = vmatpush1.msra.mxu0 0.0
    %3821 = vmatprep.subr.mxu0 0.0
    %3822 = vmatpush1.msra.mxu0 0.0
    %3823 = vmatprep.subr.mxu0 0.0
    %3824 = vmatpush1.msra.mxu0 0.0
    %3825 = vmatprep.subr.mxu0 0.0
    %3826 = vmatpush1.msra.mxu0 0.0
    %3827 = vmatprep.subr.mxu0 0.0
    %3828 = vmatpush1.msra.mxu0 0.0
    %3829 = vmatprep.subr.mxu0 0.0
    %3830 = vmatpush1.msra.mxu0 0.0
    %3831 = vmatprep.mubr.f32.mxu0 0.0
    %3832 = vmatmul.mubr.f32.gmra.mrb[0].mxu0 %v3765
    %v3833 = vpop.f32.mrb[0].mxu0
    %v3834 = vadd.f32 0.0, %v3833
    %v3835 = vpop.f32.mrb[0].mxu0
    %3836 = vdwg.mxu0
    %v3838 = vsel %vm216, %v3834, 0
    %3840 = vmatprep.subr.mxu0 0.0
    %3841 = vmatpush1.msra.mxu0 %v2453
    %3842 = vmatprep.subr.mxu0 0.0
    %3843 = vmatpush1.msra.mxu0 0.0
    %3844 = vmatprep.subr.mxu0 0.0
    %3845 = vmatpush1.msra.mxu0 0.0
    %3846 = vmatprep.subr.mxu0 0.0
    %3847 = vmatpush1.msra.mxu0 0.0
    %3848 = vmatprep.subr.mxu0 0.0
    %3849 = vmatpush1.msra.mxu0 0.0
    %3850 = vmatprep.subr.mxu0 0.0
    %3851 = vmatpush1.msra.mxu0 0.0
    %3852 = vmatprep.subr.mxu0 0.0
    %3853 = vmatpush1.msra.mxu0 0.0
    %3854 = vmatprep.subr.mxu0 0.0
    %3855 = vmatpush1.msra.mxu0 0.0
    %3856 = vmatprep.subr.mxu0 0.0
    %3857 = vmatpush1.msra.mxu0 0.0
    %3858 = vmatprep.subr.mxu0 0.0
    %3859 = vmatpush1.msra.mxu0 0.0
    %3860 = vmatprep.subr.mxu0 0.0
    %3861 = vmatpush1.msra.mxu0 0.0
    %3862 = vmatprep.subr.mxu0 0.0
    %3863 = vmatpush1.msra.mxu0 0.0
    %3864 = vmatprep.subr.mxu0 0.0
    %3865 = vmatpush1.msra.mxu0 0.0
    %3866 = vmatprep.subr.mxu0 0.0
    %3867 = vmatpush1.msra.mxu0 0.0
    %3868 = vmatprep.subr.mxu0 0.0
    %3869 = vmatpush1.msra.mxu0 0.0
    %3870 = vmatprep.subr.mxu0 0.0
    %3871 = vmatpush1.msra.mxu0 0.0
    %3872 = vmatprep.subr.mxu0 0.0
    %3873 = vmatpush1.msra.mxu0 0.0
    %3874 = vmatprep.subr.mxu0 0.0
    %3875 = vmatpush1.msra.mxu0 0.0
    %3876 = vmatprep.subr.mxu0 0.0
    %3877 = vmatpush1.msra.mxu0 0.0
    %3878 = vmatprep.subr.mxu0 0.0
    %3879 = vmatpush1.msra.mxu0 0.0
    %3880 = vmatprep.subr.mxu0 0.0
    %3881 = vmatpush1.msra.mxu0 0.0
    %3882 = vmatprep.subr.mxu0 0.0
    %3883 = vmatpush1.msra.mxu0 0.0
    %3884 = vmatprep.subr.mxu0 0.0
    %3885 = vmatpush1.msra.mxu0 0.0
    %3886 = vmatprep.subr.mxu0 0.0
    %3887 = vmatpush1.msra.mxu0 0.0
    %3888 = vmatprep.subr.mxu0 0.0
    %3889 = vmatpush1.msra.mxu0 0.0
    %3890 = vmatprep.subr.mxu0 0.0
    %3891 = vmatpush1.msra.mxu0 0.0
    %3892 = vmatprep.subr.mxu0 0.0
    %3893 = vmatpush1.msra.mxu0 0.0
    %3894 = vmatprep.subr.mxu0 0.0
    %3895 = vmatpush1.msra.mxu0 0.0
    %3896 = vmatprep.subr.mxu0 0.0
    %3897 = vmatpush1.msra.mxu0 0.0
    %3898 = vmatprep.subr.mxu0 0.0
    %3899 = vmatpush1.msra.mxu0 0.0
    %3900 = vmatprep.subr.mxu0 0.0
    %3901 = vmatpush1.msra.mxu0 0.0
    %3902 = vmatprep.subr.mxu0 0.0
    %3903 = vmatpush1.msra.mxu0 0.0
    %3904 = vmatprep.mubr.f32.mxu0 0.0
    %3905 = vmatmul.mubr.f32.gmra.mrb[0].mxu0 %v3838
    %v3906 = vpop.f32.mrb[0].mxu0
    %v3907 = vadd.f32 0.0, %v3906
    %v3908 = vpop.f32.mrb[0].mxu0
    %3909 = vdwg.mxu0
    %v3911 = vsel %vm216, %v3667, 0
    %3913 = vmatprep.subr.mxu0 0.0
    %3914 = vmatpush1.msra.mxu0 %v2452
    %3915 = vmatprep.subr.mxu0 0.0
    %3916 = vmatpush1.msra.mxu0 0.0
    %3917 = vmatprep.subr.mxu0 0.0
    %3918 = vmatpush1.msra.mxu0 0.0
    %3919 = vmatprep.subr.mxu0 0.0
    %3920 = vmatpush1.msra.mxu0 0.0
    %3921 = vmatprep.subr.mxu0 0.0
    %3922 = vmatpush1.msra.mxu0 0.0
    %3923 = vmatprep.subr.mxu0 0.0
    %3924 = vmatpush1.msra.mxu0 0.0
    %3925 = vmatprep.subr.mxu0 0.0
    %3926 = vmatpush1.msra.mxu0 0.0
    %3927 = vmatprep.subr.mxu0 0.0
    %3928 = vmatpush1.msra.mxu0 0.0
    %3929 = vmatprep.subr.mxu0 0.0
    %3930 = vmatpush1.msra.mxu0 0.0
    %3931 = vmatprep.subr.mxu0 0.0
    %3932 = vmatpush1.msra.mxu0 0.0
    %3933 = vmatprep.subr.mxu0 0.0
    %3934 = vmatpush1.msra.mxu0 0.0
    %3935 = vmatprep.subr.mxu0 0.0
    %3936 = vmatpush1.msra.mxu0 0.0
    %3937 = vmatprep.subr.mxu0 0.0
    %3938 = vmatpush1.msra.mxu0 0.0
    %3939 = vmatprep.subr.mxu0 0.0
    %3940 = vmatpush1.msra.mxu0 0.0
    %3941 = vmatprep.subr.mxu0 0.0
    %3942 = vmatpush1.msra.mxu0 0.0
    %3943 = vmatprep.subr.mxu0 0.0
    %3944 = vmatpush1.msra.mxu0 0.0
    %3945 = vmatprep.subr.mxu0 0.0
    %3946 = vmatpush1.msra.mxu0 0.0
    %3947 = vmatprep.subr.mxu0 0.0
    %3948 = vmatpush1.msra.mxu0 0.0
    %3949 = vmatprep.subr.mxu0 0.0
    %3950 = vmatpush1.msra.mxu0 0.0
    %3951 = vmatprep.subr.mxu0 0.0
    %3952 = vmatpush1.msra.mxu0 0.0
    %3953 = vmatprep.subr.mxu0 0.0
    %3954 = vmatpush1.msra.mxu0 0.0
    %3955 = vmatprep.subr.mxu0 0.0
    %3956 = vmatpush1.msra.mxu0 0.0
    %3957 = vmatprep.subr.mxu0 0.0
    %3958 = vmatpush1.msra.mxu0 0.0
    %3959 = vmatprep.subr.mxu0 0.0
    %3960 = vmatpush1.msra.mxu0 0.0
    %3961 = vmatprep.subr.mxu0 0.0
    %3962 = vmatpush1.msra.mxu0 0.0
    %3963 = vmatprep.subr.mxu0 0.0
    %3964 = vmatpush1.msra.mxu0 0.0
    %3965 = vmatprep.subr.mxu0 0.0
    %3966 = vmatpush1.msra.mxu0 0.0
    %3967 = vmatprep.subr.mxu0 0.0
    %3968 = vmatpush1.msra.mxu0 0.0
    %3969 = vmatprep.subr.mxu0 0.0
    %3970 = vmatpush1.msra.mxu0 0.0
    %3971 = vmatprep.subr.mxu0 0.0
    %3972 = vmatpush1.msra.mxu0 0.0
    %3973 = vmatprep.subr.mxu0 0.0
    %3974 = vmatpush1.msra.mxu0 0.0
    %3975 = vmatprep.subr.mxu0 0.0
    %3976 = vmatpush1.msra.mxu0 0.0
    %3977 = vmatprep.mubr.f32.mxu0 0.0
    %3978 = vmatmul.mubr.f32.gmra.mrb[0].mxu0 %v3911
    %v3979 = vpop.f32.mrb[0].mxu0
    %v3980 = vadd.f32 %v3907, %v3979
    %v3981 = vpop.f32.mrb[0].mxu0
    %3982 = vdwg.mxu0
    %3983 = vrot.lane.b32.xlu0 %v2540, 112
    %v3984 = vpop.permute.xlu0 %3983
    %3985 = vrot.lane.b32.xlu0 %v2540, 80
    %v3986 = vpop.permute.xlu0 %3985
    %v3987 = vsel %vm216, %v3984, 0
    %v3989 = vsel %vm216, %v3986, 0
    %3991 = vmatprep.subr.mxu0 0.0
    %3992 = vmatpush1.xpose.msra.mxu0 %v3989
    %3993 = vmatprep.subr.mxu0 0.0
    %3994 = vmatpush1.xpose.msra.mxu0 0.0
    %3995 = vmatprep.subr.mxu0 0.0
    %3996 = vmatpush1.xpose.msra.mxu0 0.0
    %3997 = vmatprep.subr.mxu0 0.0
    %3998 = vmatpush1.xpose.msra.mxu0 0.0
    %3999 = vmatprep.subr.mxu0 0.0
    %4000 = vmatpush1.xpose.msra.mxu0 0.0
    %4001 = vmatprep.subr.mxu0 0.0
    %4002 = vmatpush1.xpose.msra.mxu0 0.0
    %4003 = vmatprep.subr.mxu0 0.0
    %4004 = vmatpush1.xpose.msra.mxu0 0.0
    %4005 = vmatprep.subr.mxu0 0.0
    %4006 = vmatpush1.xpose.msra.mxu0 0.0
    %4007 = vmatprep.subr.mxu0 0.0
    %4008 = vmatpush1.xpose.msra.mxu0 0.0
    %4009 = vmatprep.subr.mxu0 0.0
    %4010 = vmatpush1.xpose.msra.mxu0 0.0
    %4011 = vmatprep.subr.mxu0 0.0
    %4012 = vmatpush1.xpose.msra.mxu0 0.0
    %4013 = vmatprep.subr.mxu0 0.0
    %4014 = vmatpush1.xpose.msra.mxu0 0.0
    %4015 = vmatprep.subr.mxu0 0.0
    %4016 = vmatpush1.xpose.msra.mxu0 0.0
    %4017 = vmatprep.subr.mxu0 0.0
    %4018 = vmatpush1.xpose.msra.mxu0 0.0
    %4019 = vmatprep.subr.mxu0 0.0
    %4020 = vmatpush1.xpose.msra.mxu0 0.0
    %4021 = vmatprep.subr.mxu0 0.0
    %4022 = vmatpush1.xpose.msra.mxu0 0.0
    %4023 = vmatprep.subr.mxu0 0.0
    %4024 = vmatpush1.xpose.msra.mxu0 0.0
    %4025 = vmatprep.subr.mxu0 0.0
    %4026 = vmatpush1.xpose.msra.mxu0 0.0
    %4027 = vmatprep.subr.mxu0 0.0
    %4028 = vmatpush1.xpose.msra.mxu0 0.0
    %4029 = vmatprep.subr.mxu0 0.0
    %4030 = vmatpush1.xpose.msra.mxu0 0.0
    %4031 = vmatprep.subr.mxu0 0.0
    %4032 = vmatpush1.xpose.msra.mxu0 0.0
    %4033 = vmatprep.subr.mxu0 0.0
    %4034 = vmatpush1.xpose.msra.mxu0 0.0
    %4035 = vmatprep.subr.mxu0 0.0
    %4036 = vmatpush1.xpose.msra.mxu0 0.0
    %4037 = vmatprep.subr.mxu0 0.0
    %4038 = vmatpush1.xpose.msra.mxu0 0.0
    %4039 = vmatprep.subr.mxu0 0.0
    %4040 = vmatpush1.xpose.msra.mxu0 0.0
    %4041 = vmatprep.subr.mxu0 0.0
    %4042 = vmatpush1.xpose.msra.mxu0 0.0
    %4043 = vmatprep.subr.mxu0 0.0
    %4044 = vmatpush1.xpose.msra.mxu0 0.0
    %4045 = vmatprep.subr.mxu0 0.0
    %4046 = vmatpush1.xpose.msra.mxu0 0.0
    %4047 = vmatprep.subr.mxu0 0.0
    %4048 = vmatpush1.xpose.msra.mxu0 0.0
    %4049 = vmatprep.subr.mxu0 0.0
    %4050 = vmatpush1.xpose.msra.mxu0 0.0
    %4051 = vmatprep.subr.mxu0 0.0
    %4052 = vmatpush1.xpose.msra.mxu0 0.0
    %4053 = vmatprep.subr.mxu0 0.0
    %4054 = vmatpush1.xpose.msra.mxu0 0.0
    %4055 = vmatprep.mubr.f32.mxu0 0.0
    %4056 = vmatmul.mubr.f32.gmra.mrb[0].mxu0 %v3987
    %v4057 = vpop.f32.mrb[0].mxu0
    %v4058 = vadd.f32 0.0, %v4057
    %v4059 = vpop.f32.mrb[0].mxu0
    %4060 = vdwg.mxu0
    %v4061 = vmul.f32 %v4058, 0.35355338
    %v4062 = vadd.f32 %v4061, %v1260
    %v4063 = vsel %vm216, %v4062, -inf
    %4064 = vmax.xlane.f32.xlu0 %v4063
    %v4065 = vpop.xlane.xlu0 %4064
    %v4066 = vsub.f32 %v4062, %v4065
    %v4067 = vmul.f32 %v4066, 1.442695
    %v4068 = vpow.pop %v4067
    %v4069 = vsel %vm216, %v4068, 0.0
    %4070 = vadd.xlane.f32.xlu0 %v4069
    %v4071 = vpop.xlane.xlu0 %4070
    %v4072 = vrcp.pop %v4071
    %v4073 = vmul.f32 %v4068, %v4072
    %4074 = vrot.lane.b32.xlu0 %v2540, 48
    %v4075 = vpop.permute.xlu0 %4074
    %v4078 = vsel %vm216, %v4073, 0
    %4080 = vmatprep.subr.mxu0 0.0
    %4081 = vmatpush1.msra.mxu0 %v4075
    %4082 = vmatprep.subr.mxu0 0.0
    %4083 = vmatpush1.msra.mxu0 0.0
    %4084 = vmatprep.subr.mxu0 0.0
    %4085 = vmatpush1.msra.mxu0 0.0
    %4086 = vmatprep.subr.mxu0 0.0
    %4087 = vmatpush1.msra.mxu0 0.0
    %4088 = vmatprep.subr.mxu0 0.0
    %4089 = vmatpush1.msra.mxu0 0.0
    %4090 = vmatprep.subr.mxu0 0.0
    %4091 = vmatpush1.msra.mxu0 0.0
    %4092 = vmatprep.subr.mxu0 0.0
    %4093 = vmatpush1.msra.mxu0 0.0
    %4094 = vmatprep.subr.mxu0 0.0
    %4095 = vmatpush1.msra.mxu0 0.0
    %4096 = vmatprep.subr.mxu0 0.0
    %4097 = vmatpush1.msra.mxu0 0.0
    %4098 = vmatprep.subr.mxu0 0.0
    %4099 = vmatpush1.msra.mxu0 0.0
    %4100 = vmatprep.subr.mxu0 0.0
    %4101 = vmatpush1.msra.mxu0 0.0
    %4102 = vmatprep.subr.mxu0 0.0
    %4103 = vmatpush1.msra.mxu0 0.0
    %4104 = vmatprep.subr.mxu0 0.0
    %4105 = vmatpush1.msra.mxu0 0.0
    %4106 = vmatprep.subr.mxu0 0.0
    %4107 = vmatpush1.msra.mxu0 0.0
    %4108 = vmatprep.subr.mxu0 0.0
    %4109 = vmatpush1.msra.mxu0 0.0
    %4110 = vmatprep.subr.mxu0 0.0
    %4111 = vmatpush1.msra.mxu0 0.0
    %4112 = vmatprep.subr.mxu0 0.0
    %4113 = vmatpush1.msra.mxu0 0.0
    %4114 = vmatprep.subr.mxu0 0.0
    %4115 = vmatpush1.msra.mxu0 0.0
    %4116 = vmatprep.subr.mxu0 0.0
    %4117 = vmatpush1.msra.mxu0 0.0
    %4118 = vmatprep.subr.mxu0 0.0
    %4119 = vmatpush1.msra.mxu0 0.0
    %4120 = vmatprep.subr.mxu0 0.0
    %4121 = vmatpush1.msra.mxu0 0.0
    %4122 = vmatprep.subr.mxu0 0.0
    %4123 = vmatpush1.msra.mxu0 0.0
    %4124 = vmatprep.subr.mxu0 0.0
    %4125 = vmatpush1.msra.mxu0 0.0
    %4126 = vmatprep.subr.mxu0 0.0
    %4127 = vmatpush1.msra.mxu0 0.0
    %4128 = vmatprep.subr.mxu0 0.0
    %4129 = vmatpush1.msra.mxu0 0.0
    %4130 = vmatprep.subr.mxu0 0.0
    %4131 = vmatpush1.msra.mxu0 0.0
    %4132 = vmatprep.subr.mxu0 0.0
    %4133 = vmatpush1.msra.mxu0 0.0
    %4134 = vmatprep.subr.mxu0 0.0
    %4135 = vmatpush1.msra.mxu0 0.0
    %4136 = vmatprep.subr.mxu0 0.0
    %4137 = vmatpush1.msra.mxu0 0.0
    %4138 = vmatprep.subr.mxu0 0.0
    %4139 = vmatpush1.msra.mxu0 0.0
    %4140 = vmatprep.subr.mxu0 0.0
    %4141 = vmatpush1.msra.mxu0 0.0
    %4142 = vmatprep.subr.mxu0 0.0
    %4143 = vmatpush1.msra.mxu0 0.0
    %4144 = vmatprep.mubr.f32.mxu0 0.0
    %4145 = vmatmul.mubr.f32.gmra.mrb[0].mxu0 %v4078
    %v4146 = vpop.f32.mrb[0].mxu0
    %v4147 = vadd.f32 0.0, %v4146
    %v4148 = vpop.f32.mrb[0].mxu0
    %4149 = vdwg.mxu0
    %v4151 = vsel %vm216, %v4147, 0
    %4153 = vmatprep.subr.mxu0 0.0
    %4154 = vmatpush1.msra.mxu0 %v2454
    %4155 = vmatprep.subr.mxu0 0.0
    %4156 = vmatpush1.msra.mxu0 0.0
    %4157 = vmatprep.subr.mxu0 0.0
    %4158 = vmatpush1.msra.mxu0 0.0
    %4159 = vmatprep.subr.mxu0 0.0
    %4160 = vmatpush1.msra.mxu0 0.0
    %4161 = vmatprep.subr.mxu0 0.0
    %4162 = vmatpush1.msra.mxu0 0.0
    %4163 = vmatprep.subr.mxu0 0.0
    %4164 = vmatpush1.msra.mxu0 0.0
    %4165 = vmatprep.subr.mxu0 0.0
    %4166 = vmatpush1.msra.mxu0 0.0
    %4167 = vmatprep.subr.mxu0 0.0
    %4168 = vmatpush1.msra.mxu0 0.0
    %4169 = vmatprep.subr.mxu0 0.0
    %4170 = vmatpush1.msra.mxu0 0.0
    %4171 = vmatprep.subr.mxu0 0.0
    %4172 = vmatpush1.msra.mxu0 0.0
    %4173 = vmatprep.subr.mxu0 0.0
    %4174 = vmatpush1.msra.mxu0 0.0
    %4175 = vmatprep.subr.mxu0 0.0
    %4176 = vmatpush1.msra.mxu0 0.0
    %4177 = vmatprep.subr.mxu0 0.0
    %4178 = vmatpush1.msra.mxu0 0.0
    %4179 = vmatprep.subr.mxu0 0.0
    %4180 = vmatpush1.msra.mxu0 0.0
    %4181 = vmatprep.subr.mxu0 0.0
    %4182 = vmatpush1.msra.mxu0 0.0
    %4183 = vmatprep.subr.mxu0 0.0
    %4184 = vmatpush1.msra.mxu0 0.0
    %4185 = vmatprep.subr.mxu0 0.0
    %4186 = vmatpush1.msra.mxu0 0.0
    %4187 = vmatprep.subr.mxu0 0.0
    %4188 = vmatpush1.msra.mxu0 0.0
    %4189 = vmatprep.subr.mxu0 0.0
    %4190 = vmatpush1.msra.mxu0 0.0
    %4191 = vmatprep.subr.mxu0 0.0
    %4192 = vmatpush1.msra.mxu0 0.0
    %4193 = vmatprep.subr.mxu0 0.0
    %4194 = vmatpush1.msra.mxu0 0.0
    %4195 = vmatprep.subr.mxu0 0.0
    %4196 = vmatpush1.msra.mxu0 0.0
    %4197 = vmatprep.subr.mxu0 0.0
    %4198 = vmatpush1.msra.mxu0 0.0
    %4199 = vmatprep.subr.mxu0 0.0
    %4200 = vmatpush1.msra.mxu0 0.0
    %4201 = vmatprep.subr.mxu0 0.0
    %4202 = vmatpush1.msra.mxu0 0.0
    %4203 = vmatprep.subr.mxu0 0.0
    %4204 = vmatpush1.msra.mxu0 0.0
    %4205 = vmatprep.subr.mxu0 0.0
    %4206 = vmatpush1.msra.mxu0 0.0
    %4207 = vmatprep.subr.mxu0 0.0
    %4208 = vmatpush1.msra.mxu0 0.0
    %4209 = vmatprep.subr.mxu0 0.0
    %4210 = vmatpush1.msra.mxu0 0.0
    %4211 = vmatprep.subr.mxu0 0.0
    %4212 = vmatpush1.msra.mxu0 0.0
    %4213 = vmatprep.subr.mxu0 0.0
    %4214 = vmatpush1.msra.mxu0 0.0
    %4215 = vmatprep.subr.mxu0 0.0
    %4216 = vmatpush1.msra.mxu0 0.0
    %4217 = vmatprep.mubr.f32.mxu0 0.0
    %4218 = vmatmul.mubr.f32.gmra.mrb[0].mxu0 %v4151
    %v4219 = vpop.f32.mrb[0].mxu0
    %v4220 = vadd.f32 0.0, %v4219
    %v4221 = vpop.f32.mrb[0].mxu0
    %4222 = vdwg.mxu0
    %v4223 = vadd.f32 %v3980, %v4220
    %4224 = vrot.lane.b32.xlu0 %v2540, 104
    %v4225 = vpop.permute.xlu0 %4224
    %4226 = vrot.lane.b32.xlu0 %v2540, 72
    %v4227 = vpop.permute.xlu0 %4226
    %v4228 = vsel %vm216, %v4225, 0
    %v4230 = vsel %vm216, %v4227, 0
    %4232 = vmatprep.subr.mxu0 0.0
    %4233 = vmatpush1.xpose.msra.mxu0 %v4230
    %4234 = vmatprep.subr.mxu0 0.0
    %4235 = vmatpush1.xpose.msra.mxu0 0.0
    %4236 = vmatprep.subr.mxu0 0.0
    %4237 = vmatpush1.xpose.msra.mxu0 0.0
    %4238 = vmatprep.subr.mxu0 0.0
    %4239 = vmatpush1.xpose.msra.mxu0 0.0
    %4240 = vmatprep.subr.mxu0 0.0
    %4241 = vmatpush1.xpose.msra.mxu0 0.0
    %4242 = vmatprep.subr.mxu0 0.0
    %4243 = vmatpush1.xpose.msra.mxu0 0.0
    %4244 = vmatprep.subr.mxu0 0.0
    %4245 = vmatpush1.xpose.msra.mxu0 0.0
    %4246 = vmatprep.subr.mxu0 0.0
    %4247 = vmatpush1.xpose.msra.mxu0 0.0
    %4248 = vmatprep.subr.mxu0 0.0
    %4249 = vmatpush1.xpose.msra.mxu0 0.0
    %4250 = vmatprep.subr.mxu0 0.0
    %4251 = vmatpush1.xpose.msra.mxu0 0.0
    %4252 = vmatprep.subr.mxu0 0.0
    %4253 = vmatpush1.xpose.msra.mxu0 0.0
    %4254 = vmatprep.subr.mxu0 0.0
    %4255 = vmatpush1.xpose.msra.mxu0 0.0
    %4256 = vmatprep.subr.mxu0 0.0
    %4257 = vmatpush1.xpose.msra.mxu0 0.0
    %4258 = vmatprep.subr.mxu0 0.0
    %4259 = vmatpush1.xpose.msra.mxu0 0.0
    %4260 = vmatprep.subr.mxu0 0.0
    %4261 = vmatpush1.xpose.msra.mxu0 0.0
    %4262 = vmatprep.subr.mxu0 0.0
    %4263 = vmatpush1.xpose.msra.mxu0 0.0
    %4264 = vmatprep.subr.mxu0 0.0
    %4265 = vmatpush1.xpose.msra.mxu0 0.0
    %4266 = vmatprep.subr.mxu0 0.0
    %4267 = vmatpush1.xpose.msra.mxu0 0.0
    %4268 = vmatprep.subr.mxu0 0.0
    %4269 = vmatpush1.xpose.msra.mxu0 0.0
    %4270 = vmatprep.subr.mxu0 0.0
    %4271 = vmatpush1.xpose.msra.mxu0 0.0
    %4272 = vmatprep.subr.mxu0 0.0
    %4273 = vmatpush1.xpose.msra.mxu0 0.0
    %4274 = vmatprep.subr.mxu0 0.0
    %4275 = vmatpush1.xpose.msra.mxu0 0.0
    %4276 = vmatprep.subr.mxu0 0.0
    %4277 = vmatpush1.xpose.msra.mxu0 0.0
    %4278 = vmatprep.subr.mxu0 0.0
    %4279 = vmatpush1.xpose.msra.mxu0 0.0
    %4280 = vmatprep.subr.mxu0 0.0
    %4281 = vmatpush1.xpose.msra.mxu0 0.0
    %4282 = vmatprep.subr.mxu0 0.0
    %4283 = vmatpush1.xpose.msra.mxu0 0.0
    %4284 = vmatprep.subr.mxu0 0.0
    %4285 = vmatpush1.xpose.msra.mxu0 0.0
    %4286 = vmatprep.subr.mxu0 0.0
    %4287 = vmatpush1.xpose.msra.mxu0 0.0
    %4288 = vmatprep.subr.mxu0 0.0
    %4289 = vmatpush1.xpose.msra.mxu0 0.0
    %4290 = vmatprep.subr.mxu0 0.0
    %4291 = vmatpush1.xpose.msra.mxu0 0.0
    %4292 = vmatprep.subr.mxu0 0.0
    %4293 = vmatpush1.xpose.msra.mxu0 0.0
    %4294 = vmatprep.subr.mxu0 0.0
    %4295 = vmatpush1.xpose.msra.mxu0 0.0
    %4296 = vmatprep.mubr.f32.mxu0 0.0
    %4297 = vmatmul.mubr.f32.gmra.mrb[0].mxu0 %v4228
    %v4298 = vpop.f32.mrb[0].mxu0
    %v4299 = vadd.f32 0.0, %v4298
    %v4300 = vpop.f32.mrb[0].mxu0
    %4301 = vdwg.mxu0
    %v4302 = vmul.f32 %v4299, 0.35355338
    %v4303 = vadd.f32 %v4302, %v1260
    %v4304 = vsel %vm216, %v4303, -inf
    %4305 = vmax.xlane.f32.xlu0 %v4304
    %v4306 = vpop.xlane.xlu0 %4305
    %v4307 = vsub.f32 %v4303, %v4306
    %v4308 = vmul.f32 %v4307, 1.442695
    %v4309 = vpow.pop %v4308
    %v4310 = vsel %vm216, %v4309, 0.0
    %4311 = vadd.xlane.f32.xlu0 %v4310
    %v4312 = vpop.xlane.xlu0 %4311
    %v4313 = vrcp.pop %v4312
    %v4314 = vmul.f32 %v4309, %v4313
    %4315 = vrot.lane.b32.xlu0 %v2540, 40
    %v4316 = vpop.permute.xlu0 %4315
    %v4319 = vsel %vm216, %v4314, 0
    %4321 = vmatprep.subr.mxu0 0.0
    %4322 = vmatpush1.msra.mxu0 %v4316
    %4323 = vmatprep.subr.mxu0 0.0
    %4324 = vmatpush1.msra.mxu0 0.0
    %4325 = vmatprep.subr.mxu0 0.0
    %4326 = vmatpush1.msra.mxu0 0.0
    %4327 = vmatprep.subr.mxu0 0.0
    %4328 = vmatpush1.msra.mxu0 0.0
    %4329 = vmatprep.subr.mxu0 0.0
    %4330 = vmatpush1.msra.mxu0 0.0
    %4331 = vmatprep.subr.mxu0 0.0
    %4332 = vmatpush1.msra.mxu0 0.0
    %4333 = vmatprep.subr.mxu0 0.0
    %4334 = vmatpush1.msra.mxu0 0.0
    %4335 = vmatprep.subr.mxu0 0.0
    %4336 = vmatpush1.msra.mxu0 0.0
    %4337 = vmatprep.subr.mxu0 0.0
    %4338 = vmatpush1.msra.mxu0 0.0
    %4339 = vmatprep.subr.mxu0 0.0
    %4340 = vmatpush1.msra.mxu0 0.0
    %4341 = vmatprep.subr.mxu0 0.0
    %4342 = vmatpush1.msra.mxu0 0.0
    %4343 = vmatprep.subr.mxu0 0.0
    %4344 = vmatpush1.msra.mxu0 0.0
    %4345 = vmatprep.subr.mxu0 0.0
    %4346 = vmatpush1.msra.mxu0 0.0
    %4347 = vmatprep.subr.mxu0 0.0
    %4348 = vmatpush1.msra.mxu0 0.0
    %4349 = vmatprep.subr.mxu0 0.0
    %4350 = vmatpush1.msra.mxu0 0.0
    %4351 = vmatprep.subr.mxu0 0.0
    %4352 = vmatpush1.msra.mxu0 0.0
    %4353 = vmatprep.subr.mxu0 0.0
    %4354 = vmatpush1.msra.mxu0 0.0
    %4355 = vmatprep.subr.mxu0 0.0
    %4356 = vmatpush1.msra.mxu0 0.0
    %4357 = vmatprep.subr.mxu0 0.0
    %4358 = vmatpush1.msra.mxu0 0.0
    %4359 = vmatprep.subr.mxu0 0.0
    %4360 = vmatpush1.msra.mxu0 0.0
    %4361 = vmatprep.subr.mxu0 0.0
    %4362 = vmatpush1.msra.mxu0 0.0
    %4363 = vmatprep.subr.mxu0 0.0
    %4364 = vmatpush1.msra.mxu0 0.0
    %4365 = vmatprep.subr.mxu0 0.0
    %4366 = vmatpush1.msra.mxu0 0.0
    %4367 = vmatprep.subr.mxu0 0.0
    %4368 = vmatpush1.msra.mxu0 0.0
    %4369 = vmatprep.subr.mxu0 0.0
    %4370 = vmatpush1.msra.mxu0 0.0
    %4371 = vmatprep.subr.mxu0 0.0
    %4372 = vmatpush1.msra.mxu0 0.0
    %4373 = vmatprep.subr.mxu0 0.0
    %4374 = vmatpush1.msra.mxu0 0.0
    %4375 = vmatprep.subr.mxu0 0.0
    %4376 = vmatpush1.msra.mxu0 0.0
    %4377 = vmatprep.subr.mxu0 0.0
    %4378 = vmatpush1.msra.mxu0 0.0
    %4379 = vmatprep.subr.mxu0 0.0
    %4380 = vmatpush1.msra.mxu0 0.0
    %4381 = vmatprep.subr.mxu0 0.0
    %4382 = vmatpush1.msra.mxu0 0.0
    %4383 = vmatprep.subr.mxu0 0.0
    %4384 = vmatpush1.msra.mxu0 0.0
    %4385 = vmatprep.mubr.f32.mxu0 0.0
    %4386 = vmatmul.mubr.f32.gmra.mrb[0].mxu0 %v4319
    %v4387 = vpop.f32.mrb[0].mxu0
    %v4388 = vadd.f32 0.0, %v4387
    %v4389 = vpop.f32.mrb[0].mxu0
    %4390 = vdwg.mxu0
    %v4392 = vsel %vm216, %v4388, 0
    %4394 = vmatprep.subr.mxu0 0.0
    %4395 = vmatpush1.msra.mxu0 %v2455
    %4396 = vmatprep.subr.mxu0 0.0
    %4397 = vmatpush1.msra.mxu0 0.0
    %4398 = vmatprep.subr.mxu0 0.0
    %4399 = vmatpush1.msra.mxu0 0.0
    %4400 = vmatprep.subr.mxu0 0.0
    %4401 = vmatpush1.msra.mxu0 0.0
    %4402 = vmatprep.subr.mxu0 0.0
    %4403 = vmatpush1.msra.mxu0 0.0
    %4404 = vmatprep.subr.mxu0 0.0
    %4405 = vmatpush1.msra.mxu0 0.0
    %4406 = vmatprep.subr.mxu0 0.0
    %4407 = vmatpush1.msra.mxu0 0.0
    %4408 = vmatprep.subr.mxu0 0.0
    %4409 = vmatpush1.msra.mxu0 0.0
    %4410 = vmatprep.subr.mxu0 0.0
    %4411 = vmatpush1.msra.mxu0 0.0
    %4412 = vmatprep.subr.mxu0 0.0
    %4413 = vmatpush1.msra.mxu0 0.0
    %4414 = vmatprep.subr.mxu0 0.0
    %4415 = vmatpush1.msra.mxu0 0.0
    %4416 = vmatprep.subr.mxu0 0.0
    %4417 = vmatpush1.msra.mxu0 0.0
    %4418 = vmatprep.subr.mxu0 0.0
    %4419 = vmatpush1.msra.mxu0 0.0
    %4420 = vmatprep.subr.mxu0 0.0
    %4421 = vmatpush1.msra.mxu0 0.0
    %4422 = vmatprep.subr.mxu0 0.0
    %4423 = vmatpush1.msra.mxu0 0.0
    %4424 = vmatprep.subr.mxu0 0.0
    %4425 = vmatpush1.msra.mxu0 0.0
    %4426 = vmatprep.subr.mxu0 0.0
    %4427 = vmatpush1.msra.mxu0 0.0
    %4428 = vmatprep.subr.mxu0 0.0
    %4429 = vmatpush1.msra.mxu0 0.0
    %4430 = vmatprep.subr.mxu0 0.0
    %4431 = vmatpush1.msra.mxu0 0.0
    %4432 = vmatprep.subr.mxu0 0.0
    %4433 = vmatpush1.msra.mxu0 0.0
    %4434 = vmatprep.subr.mxu0 0.0
    %4435 = vmatpush1.msra.mxu0 0.0
    %4436 = vmatprep.subr.mxu0 0.0
    %4437 = vmatpush1.msra.mxu0 0.0
    %4438 = vmatprep.subr.mxu0 0.0
    %4439 = vmatpush1.msra.mxu0 0.0
    %4440 = vmatprep.subr.mxu0 0.0
    %4441 = vmatpush1.msra.mxu0 0.0
    %4442 = vmatprep.subr.mxu0 0.0
    %4443 = vmatpush1.msra.mxu0 0.0
    %4444 = vmatprep.subr.mxu0 0.0
    %4445 = vmatpush1.msra.mxu0 0.0
    %4446 = vmatprep.subr.mxu0 0.0
    %4447 = vmatpush1.msra.mxu0 0.0
    %4448 = vmatprep.subr.mxu0 0.0
    %4449 = vmatpush1.msra.mxu0 0.0
    %4450 = vmatprep.subr.mxu0 0.0
    %4451 = vmatpush1.msra.mxu0 0.0
    %4452 = vmatprep.subr.mxu0 0.0
    %4453 = vmatpush1.msra.mxu0 0.0
    %4454 = vmatprep.subr.mxu0 0.0
    %4455 = vmatpush1.msra.mxu0 0.0
    %4456 = vmatprep.subr.mxu0 0.0
    %4457 = vmatpush1.msra.mxu0 0.0
    %4458 = vmatprep.mubr.f32.mxu0 0.0
    %4459 = vmatmul.mubr.f32.gmra.mrb[0].mxu0 %v4392
    %v4460 = vpop.f32.mrb[0].mxu0
    %v4461 = vadd.f32 0.0, %v4460
    %v4462 = vpop.f32.mrb[0].mxu0
    %4463 = vdwg.mxu0
    %v4464 = vadd.f32 %v4223, %v4461
    %s4465 = scalar_lea.vmem %s7, 1
    %v4466 = vld [vmem:[%s4465] sm:$0x1]
    %v4468 = vlaneseq
    %v4469 = vshrl.u32 %v4468, 7
    %v4470 = vsub.s32 0, %v4469
    %v4471 = vrot.slane %v4466, %v4470
    %v4473 = vadd.f32 %v3503, %v4471
    %v4474 = vadd.f32 %v4464, %v4471
    %v4475 = vadd.f32 %v2442, %v4473
    %v4476 = vadd.f32 %v2443, %v4474
    %s4477 = scalar_lea.vmem %s8, 1
    %v4478 = vld [vmem:[%s4477] sm:$0x1]
    %s4479 = scalar_lea.vmem %s9, 1
    %v4480 = vld [vmem:[%s4479] sm:$0x1]
    %v4481 = vsel %vm70, %v4475, 0.0
    %4482 = vadd.xlane.f32.xlu0 %v4481
    %v4483 = vpop.xlane.xlu0 %4482
    %v4484 = vsel %vm70, %v4476, 0.0
    %4485 = vadd.xlane.f32.xlu0 %v4484
    %v4486 = vpop.xlane.xlu0 %4485
    %v4487 = vmul.f32 %v4483, %v77
    %v4488 = vmul.f32 %v4486, %v77
    %v4489 = vsub.f32 %v4475, %v4487
    %v4490 = vsub.f32 %v4476, %v4488
    %v4491 = vmul.f32 %v4489, %v4489
    %v4492 = vmul.f32 %v4490, %v4490
    %v4493 = vsel %vm70, %v4491, 0.0
    %4494 = vadd.xlane.f32.xlu0 %v4493
    %v4495 = vpop.xlane.xlu0 %4494
    %v4496 = vsel %vm70, %v4492, 0.0
    %4497 = vadd.xlane.f32.xlu0 %v4496
    %v4498 = vpop.xlane.xlu0 %4497
    %v4499 = vmul.f32 %v4495, %v77
    %v4500 = vmul.f32 %v4498, %v77
    %v4501 = vadd.f32 %v4499, 1e-12
    %v4502 = vadd.f32 %v4500, 1e-12
    %v4503 = vrsqrt.pop %v4501
    %v4504 = vrsqrt.pop %v4502
    %v4505 = vmul.f32 %v4489, %v4503
    %v4506 = vmul.f32 %v4490, %v4504
    %v4508 = vlaneseq
    %v4509 = vshrl.u32 %v4508, 7
    %v4510 = vsub.s32 0, %v4509
    %v4511 = vrot.slane %v4478, %v4510
    %v4513 = vmul.f32 %v4505, %v4511
    %v4514 = vmul.f32 %v4506, %v4511
    %v4516 = vlaneseq
    %v4517 = vshrl.u32 %v4516, 7
    %v4518 = vsub.s32 0, %v4517
    %v4519 = vrot.slane %v4480, %v4518
    %v4521 = vadd.f32 %v4513, %v4519
    %v4522 = vadd.f32 %v4514, %v4519
    %s4523 = scalar_lea.vmem %s10, 32
    %v4524 = vld [vmem:[%s4523] sm:$0xff]
    %v4525 = vld [vmem:[%s4523 + $0x8] sm:$0xff]
    %v4526 = vld [vmem:[%s4523 + $0x10] sm:$0xff]
    %v4527 = vld [vmem:[%s4523 + $0x18] sm:$0xff]
    %s4528 = scalar_lea.vmem %s11, 1
    %v4529 = vld [vmem:[%s4528] sm:$0x1]
    %v4531 = vlaneseq
    %v4532 = vshrl.u32 %v4531, 7
    %v4533 = vsub.s32 0, %v4532
    %v4534 = vrot.slane %v4529, %v4533
    %v4537 = vsel %vm70, %v4521, 0
    %v4540 = vsel %vm70, %v4522, 0
    %4542 = vmatprep.subr.mxu0 0.0
    %4543 = vmatpush1.msra.mxu0 %v4524
    %4544 = vmatprep.subr.mxu0 0.0
    %4545 = vmatpush1.msra.mxu0 %v4525
    %4546 = vmatprep.subr.mxu0 0.0
    %4547 = vmatpush1.msra.mxu0 %v4526
    %4548 = vmatprep.subr.mxu0 0.0
    %4549 = vmatpush1.msra.mxu0 %v4527
    %4550 = vmatprep.subr.mxu0 0.0
    %4551 = vmatpush1.msra.mxu0 0.0
    %4552 = vmatprep.subr.mxu0 0.0
    %4553 = vmatpush1.msra.mxu0 0.0
    %4554 = vmatprep.subr.mxu0 0.0
    %4555 = vmatpush1.msra.mxu0 0.0
    %4556 = vmatprep.subr.mxu0 0.0
    %4557 = vmatpush1.msra.mxu0 0.0
    %4558 = vmatprep.subr.mxu0 0.0
    %4559 = vmatpush1.msra.mxu0 0.0
    %4560 = vmatprep.subr.mxu0 0.0
    %4561 = vmatpush1.msra.mxu0 0.0
    %4562 = vmatprep.subr.mxu0 0.0
    %4563 = vmatpush1.msra.mxu0 0.0
    %4564 = vmatprep.subr.mxu0 0.0
    %4565 = vmatpush1.msra.mxu0 0.0
    %4566 = vmatprep.subr.mxu0 0.0
    %4567 = vmatpush1.msra.mxu0 0.0
    %4568 = vmatprep.subr.mxu0 0.0
    %4569 = vmatpush1.msra.mxu0 0.0
    %4570 = vmatprep.subr.mxu0 0.0
    %4571 = vmatpush1.msra.mxu0 0.0
    %4572 = vmatprep.subr.mxu0 0.0
    %4573 = vmatpush1.msra.mxu0 0.0
    %4574 = vmatprep.subr.mxu0 0.0
    %4575 = vmatpush1.msra.mxu0 0.0
    %4576 = vmatprep.subr.mxu0 0.0
    %4577 = vmatpush1.msra.mxu0 0.0
    %4578 = vmatprep.subr.mxu0 0.0
    %4579 = vmatpush1.msra.mxu0 0.0
    %4580 = vmatprep.subr.mxu0 0.0
    %4581 = vmatpush1.msra.mxu0 0.0
    %4582 = vmatprep.subr.mxu0 0.0
    %4583 = vmatpush1.msra.mxu0 0.0
    %4584 = vmatprep.subr.mxu0 0.0
    %4585 = vmatpush1.msra.mxu0 0.0
    %4586 = vmatprep.subr.mxu0 0.0
    %4587 = vmatpush1.msra.mxu0 0.0
    %4588 = vmatprep.subr.mxu0 0.0
    %4589 = vmatpush1.msra.mxu0 0.0
    %4590 = vmatprep.subr.mxu0 0.0
    %4591 = vmatpush1.msra.mxu0 0.0
    %4592 = vmatprep.subr.mxu0 0.0
    %4593 = vmatpush1.msra.mxu0 0.0
    %4594 = vmatprep.subr.mxu0 0.0
    %4595 = vmatpush1.msra.mxu0 0.0
    %4596 = vmatprep.subr.mxu0 0.0
    %4597 = vmatpush1.msra.mxu0 0.0
    %4598 = vmatprep.subr.mxu0 0.0
    %4599 = vmatpush1.msra.mxu0 0.0
    %4600 = vmatprep.subr.mxu0 0.0
    %4601 = vmatpush1.msra.mxu0 0.0
    %4602 = vmatprep.subr.mxu0 0.0
    %4603 = vmatpush1.msra.mxu0 0.0
    %4604 = vmatprep.subr.mxu0 0.0
    %4605 = vmatpush1.msra.mxu0 0.0
    %4606 = vmatprep.mubr.f32.mxu0 0.0
    %4607 = vmatmul.mubr.f32.gmra.mrb[0].mxu0 %v4537
    %v4608 = vpop.f32.mrb[0].mxu0
    %v4609 = vadd.f32 %v4534, %v4608
    %v4610 = vpop.f32.mrb[0].mxu0
    %4611 = vmatprep.mubr.f32.mxu0 0.0
    %4612 = vmatmul.mubr.f32.gmra.mrb[0].mxu0 %v4540
    %v4613 = vpop.f32.mrb[0].mxu0
    %v4614 = vadd.f32 %v4534, %v4613
    %v4615 = vpop.f32.mrb[0].mxu0
    %4616 = vdwg.mxu0
    %v4617 = vmul.f32 %v4609, 0.5
    %v4618 = vmul.f32 %v4614, 0.5
    %v4619 = vmul.f32 %v4609, 0.70710677
    %v4620 = vmul.f32 %v4614, 0.70710677
    %v4621 = verf.f32.pop %v4619
    %v4622 = verf.f32.pop %v4620
    %v4623 = vadd.f32 %v4621, 1.0
    %v4624 = vadd.f32 %v4622, 1.0
    %v4625 = vmul.f32 %v4617, %v4623
    %v4626 = vmul.f32 %v4618, %v4624
    %s4627 = scalar_lea.vmem %s12, 64
    %v4628 = vld [vmem:[%s4627] sm:$0xff]
    %v4629 = vld [vmem:[%s4627 + $0x8] sm:$0xff]
    %v4630 = vld [vmem:[%s4627 + $0x10] sm:$0xff]
    %v4631 = vld [vmem:[%s4627 + $0x18] sm:$0xff]
    %v4632 = vld [vmem:[%s4627 + $0x20] sm:$0xff]
    %v4633 = vld [vmem:[%s4627 + $0x28] sm:$0xff]
    %v4634 = vld [vmem:[%s4627 + $0x30] sm:$0xff]
    %v4635 = vld [vmem:[%s4627 + $0x38] sm:$0xff]
    %s4636 = scalar_lea.vmem %s13, 1
    %v4637 = vld [vmem:[%s4636] sm:$0x1]
    %v4639 = vlaneseq
    %v4640 = vshrl.u32 %v4639, 7
    %v4641 = vsub.s32 0, %v4640
    %v4642 = vrot.slane %v4637, %v4641
    %v4645 = vsel %vm2316, %v4625, 0
    %v4648 = vsel %vm2316, %v4626, 0
    %4650 = vmatprep.subr.mxu0 0.0
    %4651 = vmatpush1.msra.mxu0 %v4628
    %4652 = vmatprep.subr.mxu0 0.0
    %4653 = vmatpush1.msra.mxu0 %v4629
    %4654 = vmatprep.subr.mxu0 0.0
    %4655 = vmatpush1.msra.mxu0 %v4630
    %4656 = vmatprep.subr.mxu0 0.0
    %4657 = vmatpush1.msra.mxu0 %v4631
    %4658 = vmatprep.subr.mxu0 0.0
    %4659 = vmatpush1.msra.mxu0 %v4632
    %4660 = vmatprep.subr.mxu0 0.0
    %4661 = vmatpush1.msra.mxu0 %v4633
    %4662 = vmatprep.subr.mxu0 0.0
    %4663 = vmatpush1.msra.mxu0 %v4634
    %4664 = vmatprep.subr.mxu0 0.0
    %4665 = vmatpush1.msra.mxu0 %v4635
    %4666 = vmatprep.subr.mxu0 0.0
    %4667 = vmatpush1.msra.mxu0 0.0
    %4668 = vmatprep.subr.mxu0 0.0
    %4669 = vmatpush1.msra.mxu0 0.0
    %4670 = vmatprep.subr.mxu0 0.0
    %4671 = vmatpush1.msra.mxu0 0.0
    %4672 = vmatprep.subr.mxu0 0.0
    %4673 = vmatpush1.msra.mxu0 0.0
    %4674 = vmatprep.subr.mxu0 0.0
    %4675 = vmatpush1.msra.mxu0 0.0
    %4676 = vmatprep.subr.mxu0 0.0
    %4677 = vmatpush1.msra.mxu0 0.0
    %4678 = vmatprep.subr.mxu0 0.0
    %4679 = vmatpush1.msra.mxu0 0.0
    %4680 = vmatprep.subr.mxu0 0.0
    %4681 = vmatpush1.msra.mxu0 0.0
    %4682 = vmatprep.subr.mxu0 0.0
    %4683 = vmatpush1.msra.mxu0 0.0
    %4684 = vmatprep.subr.mxu0 0.0
    %4685 = vmatpush1.msra.mxu0 0.0
    %4686 = vmatprep.subr.mxu0 0.0
    %4687 = vmatpush1.msra.mxu0 0.0
    %4688 = vmatprep.subr.mxu0 0.0
    %4689 = vmatpush1.msra.mxu0 0.0
    %4690 = vmatprep.subr.mxu0 0.0
    %4691 = vmatpush1.msra.mxu0 0.0
    %4692 = vmatprep.subr.mxu0 0.0
    %4693 = vmatpush1.msra.mxu0 0.0
    %4694 = vmatprep.subr.mxu0 0.0
    %4695 = vmatpush1.msra.mxu0 0.0
    %4696 = vmatprep.subr.mxu0 0.0
    %4697 = vmatpush1.msra.mxu0 0.0
    %4698 = vmatprep.subr.mxu0 0.0
    %4699 = vmatpush1.msra.mxu0 0.0
    %4700 = vmatprep.subr.mxu0 0.0
    %4701 = vmatpush1.msra.mxu0 0.0
    %4702 = vmatprep.subr.mxu0 0.0
    %4703 = vmatpush1.msra.mxu0 0.0
    %4704 = vmatprep.subr.mxu0 0.0
    %4705 = vmatpush1.msra.mxu0 0.0
    %4706 = vmatprep.subr.mxu0 0.0
    %4707 = vmatpush1.msra.mxu0 0.0
    %4708 = vmatprep.subr.mxu0 0.0
    %4709 = vmatpush1.msra.mxu0 0.0
    %4710 = vmatprep.subr.mxu0 0.0
    %4711 = vmatpush1.msra.mxu0 0.0
    %4712 = vmatprep.subr.mxu0 0.0
    %4713 = vmatpush1.msra.mxu0 0.0
    %4714 = vmatprep.mubr.f32.mxu0 0.0
    %4715 = vmatmul.mubr.f32.gmra.mrb[0].mxu0 %v4645
    %v4716 = vpop.f32.mrb[0].mxu0
    %v4717 = vadd.f32 %v4642, %v4716
    %v4718 = vpop.f32.mrb[0].mxu0
    %4719 = vmatprep.mubr.f32.mxu0 0.0
    %4720 = vmatmul.mubr.f32.gmra.mrb[0].mxu0 %v4648
    %v4721 = vpop.f32.mrb[0].mxu0
    %v4722 = vadd.f32 %v4642, %v4721
    %v4723 = vpop.f32.mrb[0].mxu0
    %4724 = vdwg.mxu0
    %v4725 = vadd.f32 %v4521, %v4717
    %v4726 = vadd.f32 %v4522, %v4722
    %s4727 = scalar_lea.vmem %s14, 1
    %v4728 = vld [vmem:[%s4727] sm:$0x1]
    %s4729 = scalar_lea.vmem %s15, 1
    %v4730 = vld [vmem:[%s4729] sm:$0x1]
    %v4731 = vsel %vm70, %v4725, 0.0
    %4732 = vadd.xlane.f32.xlu0 %v4731
    %v4733 = vpop.xlane.xlu0 %4732
    %v4734 = vsel %vm70, %v4726, 0.0
    %4735 = vadd.xlane.f32.xlu0 %v4734
    %v4736 = vpop.xlane.xlu0 %4735
    %v4737 = vmul.f32 %v4733, %v77
    %v4738 = vmul.f32 %v4736, %v77
    %v4739 = vsub.f32 %v4725, %v4737
    %v4740 = vsub.f32 %v4726, %v4738
    %v4741 = vmul.f32 %v4739, %v4739
    %v4742 = vmul.f32 %v4740, %v4740
    %v4743 = vsel %vm70, %v4741, 0.0
    %4744 = vadd.xlane.f32.xlu0 %v4743
    %v4745 = vpop.xlane.xlu0 %4744
    %v4746 = vsel %vm70, %v4742, 0.0
    %4747 = vadd.xlane.f32.xlu0 %v4746
    %v4748 = vpop.xlane.xlu0 %4747
    %v4749 = vmul.f32 %v4745, %v77
    %v4750 = vmul.f32 %v4748, %v77
    %v4751 = vadd.f32 %v4749, 1e-12
    %v4752 = vadd.f32 %v4750, 1e-12
    %v4753 = vrsqrt.pop %v4751
    %v4754 = vrsqrt.pop %v4752
    %v4755 = vmul.f32 %v4739, %v4753
    %v4756 = vmul.f32 %v4740, %v4754
    %v4758 = vlaneseq
    %v4759 = vshrl.u32 %v4758, 7
    %v4760 = vsub.s32 0, %v4759
    %v4761 = vrot.slane %v4728, %v4760
    %v4763 = vmul.f32 %v4755, %v4761
    %v4764 = vmul.f32 %v4756, %v4761
    %v4766 = vlaneseq
    %v4767 = vshrl.u32 %v4766, 7
    %v4768 = vsub.s32 0, %v4767
    %v4769 = vrot.slane %v4730, %v4768
    %v4771 = vadd.f32 %v4763, %v4769
    %v4772 = vadd.f32 %v4764, %v4769
    %v4773 = vlaneseq
    %v4774 = vand.u32 %v4773, 127
    %v4775 = vlaneseq
    %v4776 = vshrl.u32 %v4775, 7
    %v4777 = vmul.u32 %v4776, 8
    %vm4778 = vcmp.eq.s32.totalorder %v4774, %v4777
    %v4779 = vsel %vm4778, 1.0, 0.0
    %vm4780 = vcmask 130048
    %v4782 = vsel %vm4780, %v4779, 0
    %4784 = vmatprep.subr.mxu0 0.0
    %4785 = vmatpush1.msra.mxu0 %v4771
    %4786 = vmatprep.subr.mxu0 0.0
    %4787 = vmatpush1.msra.mxu0 %v4772
    %4788 = vmatprep.subr.mxu0 0.0
    %4789 = vmatpush1.msra.mxu0 0.0
    %4790 = vmatprep.subr.mxu0 0.0
    %4791 = vmatpush1.msra.mxu0 0.0
    %4792 = vmatprep.subr.mxu0 0.0
    %4793 = vmatpush1.msra.mxu0 0.0
    %4794 = vmatprep.subr.mxu0 0.0
    %4795 = vmatpush1.msra.mxu0 0.0
    %4796 = vmatprep.subr.mxu0 0.0
    %4797 = vmatpush1.msra.mxu0 0.0
    %4798 = vmatprep.subr.mxu0 0.0
    %4799 = vmatpush1.msra.mxu0 0.0
    %4800 = vmatprep.subr.mxu0 0.0
    %4801 = vmatpush1.msra.mxu0 0.0
    %4802 = vmatprep.subr.mxu0 0.0
    %4803 = vmatpush1.msra.mxu0 0.0
    %4804 = vmatprep.subr.mxu0 0.0
    %4805 = vmatpush1.msra.mxu0 0.0
    %4806 = vmatprep.subr.mxu0 0.0
    %4807 = vmatpush1.msra.mxu0 0.0
    %4808 = vmatprep.subr.mxu0 0.0
    %4809 = vmatpush1.msra.mxu0 0.0
    %4810 = vmatprep.subr.mxu0 0.0
    %4811 = vmatpush1.msra.mxu0 0.0
    %4812 = vmatprep.subr.mxu0 0.0
    %4813 = vmatpush1.msra.mxu0 0.0
    %4814 = vmatprep.subr.mxu0 0.0
    %4815 = vmatpush1.msra.mxu0 0.0
    %4816 = vmatprep.subr.mxu0 0.0
    %4817 = vmatpush1.msra.mxu0 0.0
    %4818 = vmatprep.subr.mxu0 0.0
    %4819 = vmatpush1.msra.mxu0 0.0
    %4820 = vmatprep.subr.mxu0 0.0
    %4821 = vmatpush1.msra.mxu0 0.0
    %4822 = vmatprep.subr.mxu0 0.0
    %4823 = vmatpush1.msra.mxu0 0.0
    %4824 = vmatprep.subr.mxu0 0.0
    %4825 = vmatpush1.msra.mxu0 0.0
    %4826 = vmatprep.subr.mxu0 0.0
    %4827 = vmatpush1.msra.mxu0 0.0
    %4828 = vmatprep.subr.mxu0 0.0
    %4829 = vmatpush1.msra.mxu0 0.0
    %4830 = vmatprep.subr.mxu0 0.0
    %4831 = vmatpush1.msra.mxu0 0.0
    %4832 = vmatprep.subr.mxu0 0.0
    %4833 = vmatpush1.msra.mxu0 0.0
    %4834 = vmatprep.subr.mxu0 0.0
    %4835 = vmatpush1.msra.mxu0 0.0
    %4836 = vmatprep.subr.mxu0 0.0
    %4837 = vmatpush1.msra.mxu0 0.0
    %4838 = vmatprep.subr.mxu0 0.0
    %4839 = vmatpush1.msra.mxu0 0.0
    %4840 = vmatprep.subr.mxu0 0.0
    %4841 = vmatpush1.msra.mxu0 0.0
    %4842 = vmatprep.subr.mxu0 0.0
    %4843 = vmatpush1.msra.mxu0 0.0
    %4844 = vmatprep.subr.mxu0 0.0
    %4845 = vmatpush1.msra.mxu0 0.0
    %4846 = vmatprep.subr.mxu0 0.0
    %4847 = vmatpush1.msra.mxu0 0.0
    %4848 = vmatprep.mubr.f32.mxu0 0.0
    %4849 = vmatmul.mubr.f32.gmra.mrb[0].mxu0 %v4782
    %v4850 = vpop.f32.mrb[0].mxu0
    %v4851 = vadd.f32 0.0, %v4850
    %v4852 = vpop.f32.mrb[0].mxu0
    %4853 = vdwg.mxu0
    %v4854 = vld [vmem:[%s16] sm:$0xff]
    %v4855 = vld [vmem:[%s16 + $0x8] sm:$0xff]
    %v4856 = vld [vmem:[%s16 + $0x10] sm:$0xff]
    %v4857 = vld [vmem:[%s16 + $0x18] sm:$0xff]
    %v4858 = vld [vmem:[%s17] sm:$0x1]
    %v4860 = vlaneseq
    %v4861 = vshrl.u32 %v4860, 7
    %v4862 = vsub.s32 0, %v4861
    %v4863 = vrot.slane %v4858, %v4862
    %v4866 = vsel %vm70, %v4851, 0
    %4868 = vmatprep.subr.mxu0 0.0
    %4869 = vmatpush1.msra.mxu0 %v4854
    %4870 = vmatprep.subr.mxu0 0.0
    %4871 = vmatpush1.msra.mxu0 %v4855
    %4872 = vmatprep.subr.mxu0 0.0
    %4873 = vmatpush1.msra.mxu0 %v4856
    %4874 = vmatprep.subr.mxu0 0.0
    %4875 = vmatpush1.msra.mxu0 %v4857
    %4876 = vmatprep.subr.mxu0 0.0
    %4877 = vmatpush1.msra.mxu0 0.0
    %4878 = vmatprep.subr.mxu0 0.0
    %4879 = vmatpush1.msra.mxu0 0.0
    %4880 = vmatprep.subr.mxu0 0.0
    %4881 = vmatpush1.msra.mxu0 0.0
    %4882 = vmatprep.subr.mxu0 0.0
    %4883 = vmatpush1.msra.mxu0 0.0
    %4884 = vmatprep.subr.mxu0 0.0
    %4885 = vmatpush1.msra.mxu0 0.0
    %4886 = vmatprep.subr.mxu0 0.0
    %4887 = vmatpush1.msra.mxu0 0.0
    %4888 = vmatprep.subr.mxu0 0.0
    %4889 = vmatpush1.msra.mxu0 0.0
    %4890 = vmatprep.subr.mxu0 0.0
    %4891 = vmatpush1.msra.mxu0 0.0
    %4892 = vmatprep.subr.mxu0 0.0
    %4893 = vmatpush1.msra.mxu0 0.0
    %4894 = vmatprep.subr.mxu0 0.0
    %4895 = vmatpush1.msra.mxu0 0.0
    %4896 = vmatprep.subr.mxu0 0.0
    %4897 = vmatpush1.msra.mxu0 0.0
    %4898 = vmatprep.subr.mxu0 0.0
    %4899 = vmatpush1.msra.mxu0 0.0
    %4900 = vmatprep.subr.mxu0 0.0
    %4901 = vmatpush1.msra.mxu0 0.0
    %4902 = vmatprep.subr.mxu0 0.0
    %4903 = vmatpush1.msra.mxu0 0.0
    %4904 = vmatprep.subr.mxu0 0.0
    %4905 = vmatpush1.msra.mxu0 0.0
    %4906 = vmatprep.subr.mxu0 0.0
    %4907 = vmatpush1.msra.mxu0 0.0
    %4908 = vmatprep.subr.mxu0 0.0
    %4909 = vmatpush1.msra.mxu0 0.0
    %4910 = vmatprep.subr.mxu0 0.0
    %4911 = vmatpush1.msra.mxu0 0.0
    %4912 = vmatprep.subr.mxu0 0.0
    %4913 = vmatpush1.msra.mxu0 0.0
    %4914 = vmatprep.subr.mxu0 0.0
    %4915 = vmatpush1.msra.mxu0 0.0
    %4916 = vmatprep.subr.mxu0 0.0
    %4917 = vmatpush1.msra.mxu0 0.0
    %4918 = vmatprep.subr.mxu0 0.0
    %4919 = vmatpush1.msra.mxu0 0.0
    %4920 = vmatprep.subr.mxu0 0.0
    %4921 = vmatpush1.msra.mxu0 0.0
    %4922 = vmatprep.subr.mxu0 0.0
    %4923 = vmatpush1.msra.mxu0 0.0
    %4924 = vmatprep.subr.mxu0 0.0
    %4925 = vmatpush1.msra.mxu0 0.0
    %4926 = vmatprep.subr.mxu0 0.0
    %4927 = vmatpush1.msra.mxu0 0.0
    %4928 = vmatprep.subr.mxu0 0.0
    %4929 = vmatpush1.msra.mxu0 0.0
    %4930 = vmatprep.subr.mxu0 0.0
    %4931 = vmatpush1.msra.mxu0 0.0
    %4932 = vmatprep.mubr.f32.mxu0 0.0
    %4933 = vmatmul.mubr.f32.gmra.mrb[0].mxu0 %v4866
    %v4934 = vpop.f32.mrb[0].mxu0
    %v4935 = vadd.f32 %v4863, %v4934
    %v4936 = vpop.f32.mrb[0].mxu0
    %4937 = vdwg.mxu0
    %v4938 = vtanh.pop %v4935
    %v4939 = vld [vmem:[%s18] sm:$0xff]
    %v4940 = vld [vmem:[%s18 + $0x8] sm:$0xff]
    %v4941 = vld [vmem:[%s18 + $0x10] sm:$0xff]
    %v4942 = vld [vmem:[%s18 + $0x18] sm:$0xff]
    %v4943 = vld [vmem:[%s19] sm:$0x1]
    %v4945 = vlaneseq
    %v4946 = vshrl.u32 %v4945, 7
    %v4947 = vsub.s32 0, %v4946
    %v4948 = vrot.slane %v4943, %v4947
    %v4951 = vsel %vm70, %v4938, 0
    %4953 = vmatprep.subr.mxu0 0.0
    %4954 = vmatpush1.msra.mxu0 %v4939
    %4955 = vmatprep.subr.mxu0 0.0
    %4956 = vmatpush1.msra.mxu0 %v4940
    %4957 = vmatprep.subr.mxu0 0.0
    %4958 = vmatpush1.msra.mxu0 %v4941
    %4959 = vmatprep.subr.mxu0 0.0
    %4960 = vmatpush1.msra.mxu0 %v4942
    %4961 = vmatprep.subr.mxu0 0.0
    %4962 = vmatpush1.msra.mxu0 0.0
    %4963 = vmatprep.subr.mxu0 0.0
    %4964 = vmatpush1.msra.mxu0 0.0
    %4965 = vmatprep.subr.mxu0 0.0
    %4966 = vmatpush1.msra.mxu0 0.0
    %4967 = vmatprep.subr.mxu0 0.0
    %4968 = vmatpush1.msra.mxu0 0.0
    %4969 = vmatprep.subr.mxu0 0.0
    %4970 = vmatpush1.msra.mxu0 0.0
    %4971 = vmatprep.subr.mxu0 0.0
    %4972 = vmatpush1.msra.mxu0 0.0
    %4973 = vmatprep.subr.mxu0 0.0
    %4974 = vmatpush1.msra.mxu0 0.0
    %4975 = vmatprep.subr.mxu0 0.0
    %4976 = vmatpush1.msra.mxu0 0.0
    %4977 = vmatprep.subr.mxu0 0.0
    %4978 = vmatpush1.msra.mxu0 0.0
    %4979 = vmatprep.subr.mxu0 0.0
    %4980 = vmatpush1.msra.mxu0 0.0
    %4981 = vmatprep.subr.mxu0 0.0
    %4982 = vmatpush1.msra.mxu0 0.0
    %4983 = vmatprep.subr.mxu0 0.0
    %4984 = vmatpush1.msra.mxu0 0.0
    %4985 = vmatprep.subr.mxu0 0.0
    %4986 = vmatpush1.msra.mxu0 0.0
    %4987 = vmatprep.subr.mxu0 0.0
    %4988 = vmatpush1.msra.mxu0 0.0
    %4989 = vmatprep.subr.mxu0 0.0
    %4990 = vmatpush1.msra.mxu0 0.0
    %4991 = vmatprep.subr.mxu0 0.0
    %4992 = vmatpush1.msra.mxu0 0.0
    %4993 = vmatprep.subr.mxu0 0.0
    %4994 = vmatpush1.msra.mxu0 0.0
    %4995 = vmatprep.subr.mxu0 0.0
    %4996 = vmatpush1.msra.mxu0 0.0
    %4997 = vmatprep.subr.mxu0 0.0
    %4998 = vmatpush1.msra.mxu0 0.0
    %4999 = vmatprep.subr.mxu0 0.0
    %5000 = vmatpush1.msra.mxu0 0.0
    %5001 = vmatprep.subr.mxu0 0.0
    %5002 = vmatpush1.msra.mxu0 0.0
    %5003 = vmatprep.subr.mxu0 0.0
    %5004 = vmatpush1.msra.mxu0 0.0
    %5005 = vmatprep.subr.mxu0 0.0
    %5006 = vmatpush1.msra.mxu0 0.0
    %5007 = vmatprep.subr.mxu0 0.0
    %5008 = vmatpush1.msra.mxu0 0.0
    %5009 = vmatprep.subr.mxu0 0.0
    %5010 = vmatpush1.msra.mxu0 0.0
    %5011 = vmatprep.subr.mxu0 0.0
    %5012 = vmatpush1.msra.mxu0 0.0
    %5013 = vmatprep.subr.mxu0 0.0
    %5014 = vmatpush1.msra.mxu0 0.0
    %5015 = vmatprep.subr.mxu0 0.0
    %5016 = vmatpush1.msra.mxu0 0.0
    %5017 = vmatprep.mubr.f32.mxu0 0.0
    %5018 = vmatmul.mubr.f32.gmra.mrb[0].mxu0 %v4951
    %v5019 = vpop.f32.mrb[0].mxu0
    %v5020 = vadd.f32 %v4948, %v5019
    %v5021 = vpop.f32.mrb[0].mxu0
    %5022 = vdwg.mxu0
    %vm5023 = vcmask 25600
    %5024 = vst.msk [vmem:[#allocation2] sm:$0x3] %vm5023, %v5020
    // Predicated region
    $region82: #{news_classifier_forward.1} parent=1 // pred_check
      _
    $region83: #{news_classifier_forward.1} parent=1 // pred_check_branch
      %5026 = sbr.rel (0) target = $region85
    $region84: #{news_classifier_forward.1} parent=1 // pred_region
      %s5028 = ssub.s32 32, 32
      %5029 = vsyncadd [#allocation3], %s5028
      %s5031 = sshll.u32 [#allocation2], 4
      %s5032 = int_to_ptr.vmem [resolvable:$true] %s5031
      %5034 = dma.vmem_to_hbm [thread:$0]  %s5032, 32, %s20, [#allocation3]
    $region85: #{news_classifier_forward.1} parent=1 // pred_fallthru
      _
    // Predicated region
    $region86: #{news_classifier_forward.1} parent=1 // pred_check
      _
    $region87: #{news_classifier_forward.1} parent=1 // pred_check_branch
      %5036 = sbr.rel (0) target = $region89
    $region88: #{news_classifier_forward.1} parent=1 // pred_region
      %5037 = dma.done [#allocation3], 32
    $region89: #{news_classifier_forward.1} parent=1 // pred_fallthru
      _
    %5038 = vsyncpa [#allocation3], 1

</llo_original>
